<compile_context>
chip_gen: v5e
topology: v5e:2x2
jax: 0.10.0
libtpu: 0.0.40
codegen_flags: <defaults>
</compile_context>

<pallas_src>
import jax
import jax.numpy as jnp
from jax.experimental import pallas as pl
from jax.experimental.pallas import tpu as pltpu


def mlp_kernel(x_ref,
               w1_ref, b1_ref,
               w2_ref, b2_ref,
               w3_ref, b3_ref,
               w4_ref, b4_ref,
               o_ref):
    """Fused 4-layer MLP on one batch tile; all weights resident in VMEM.

    x_ref is bf16; matmuls run on the MXU with bf16 inputs and f32
    accumulation; bias add and ReLU stay in f32 on the VPU; hidden activations
    are carried as bf16 between layers.
    """
    def layer(h_bf16, w_ref, b_ref, relu):
        acc = jnp.dot(h_bf16, w_ref[...], preferred_element_type=jnp.float32)
        acc = acc + b_ref[...]
        if relu:
            # Cast to bf16 right after the ReLU: same bits reach the next MXU,
            # half the inter-layer register/VMEM traffic.
            return jnp.maximum(acc, 0.0).astype(jnp.bfloat16)
        return acc

    h = x_ref[...]                         # bf16 (tile_m, 512)
    h = layer(h, w1_ref, b1_ref, relu=True)
    h = layer(h, w2_ref, b2_ref, relu=True)
    h = layer(h, w3_ref, b3_ref, relu=True)
    h = layer(h, w4_ref, b4_ref, relu=False)   # f32 (tile_m, 384)
    o_ref[...] = h.astype(o_ref.dtype)


def _round_up(n, m):
    return ((n + m - 1) // m) * m


def _choose_tile_m(batch, desired):
    """Pick a sublane-aligned batch tile.

    Large tiles amortize the ~0.35us per-grid-step overhead and the MXU weight
    re-staging; cap so that when the batch is big enough (>=256 rows) at least
    two grid steps exist, letting the 'parallel' batch axis split across both
    v7x TensorCores.
    """
    tm = min(desired, _round_up(batch, 8))
    if 256 <= batch <= desired:
        tm = min(tm, max(128, _round_up(pl.cdiv(batch, 2), 128)))
    return tm


def mlp_forward(x, params, *, tile_m=1024):
    """x: (B, 512) f32 -> (B, 384) f32.

    params: tuple of (w, b) pairs; w is (in, out) bf16, b is (1, out) f32.
    """
    (w1, b1), (w2, b2), (w3, b3), (w4, b4) = params
    B, D_in = x.shape
    D_out = w4.shape[1]

    # Kernel consumes bf16 activations (the MXU would downcast anyway); halves
    # the dominant input DMA stream.
    x_in = x.astype(jnp.bfloat16)

    tm = _choose_tile_m(B, tile_m)
    grid_m = pl.cdiv(B, tm)

    # Advisory cost estimate so XLA schedules surrounding ops correctly.
    flops = 2 * B * sum(int(w.shape[0]) * int(w.shape[1])
                        for (w, _) in params)
    weight_bytes = sum(int(w.size) * w.dtype.itemsize +
                       int(b.size) * b.dtype.itemsize
                       for (w, b) in params)
    bytes_accessed = (int(x_in.size) * x_in.dtype.itemsize
                      + B * D_out * jnp.dtype(jnp.float32).itemsize
                      + weight_bytes)
    cost = pl.CostEstimate(flops=flops, transcendentals=0,
                           bytes_accessed=bytes_accessed)

    # Weights/biases use a constant index_map so they are fetched once and stay
    # VMEM-resident across batch-tile grid steps (no re-fetch per step).
    resident = lambda arr: pl.BlockSpec(arr.shape, lambda i: (0, 0))

    out = pl.pallas_call(
        mlp_kernel,
        out_shape=jax.ShapeDtypeStruct((B, D_out), jnp.float32),
        grid_spec=pltpu.PrefetchScalarGridSpec(
            num_scalar_prefetch=0,
            grid=(grid_m,),
            in_specs=[
                pl.BlockSpec((tm, D_in), lambda i: (i, 0)),
                resident(w1), resident(b1),
                resident(w2), resident(b2),
                resident(w3), resident(b3),
                resident(w4), resident(b4),
            ],
            out_specs=pl.BlockSpec((tm, D_out), lambda i: (i, 0)),
        ),
        compiler_params=pltpu.CompilerParams(
            dimension_semantics=("parallel",),
            # Explicit scoped-VMEM budget keeps the large batch tile viable on
            # v5e's 16 MiB default; total working set is ~10 MiB at tm=1024.
            vmem_limit_bytes=32 * 1024 * 1024,
        ),
        cost_estimate=cost,
    )(x_in, w1, b1, w2, b2, w3, b3, w4, b4)
    return out


def init_params(key):
    """Deterministic init matching the module's layer shapes.

    Weights returned pre-transposed (in_features, out_features) and cast to
    bf16 for the MXU; biases returned as (1, out) f32 rows (broadcast over the
    batch tile), shaped once here rather than per call.
    """
    dims = [(512, 512), (512, 512), (512, 512), (512, 384)]
    params = []
    for i, (d_in, d_out) in enumerate(dims):
        kw, kb = jax.random.split(jax.random.fold_in(key, i))
        scale = 1.0 / jnp.sqrt(d_in)
        w = jax.random.uniform(kw, (d_in, d_out), jnp.float32, -scale, scale)
        b = jax.random.uniform(kb, (1, d_out), jnp.float32, -scale, scale)
        params.append((w.astype(jnp.bfloat16), b))
    return tuple(params)


def reference_forward(x, params):
    """Pure-f32 JAX reference (weights upcast from bf16)."""
    h = x.astype(jnp.float32)
    for i, (w, b) in enumerate(params):
        h = h @ w.astype(jnp.float32) + b
        if i < len(params) - 1:
            h = jnp.maximum(h, 0.0)
    return h


if __name__ == "__main__":
    key = jax.random.PRNGKey(0)
    k_x, k_p = jax.random.split(key)

    B = 8  # small batch; single ragged tile, masked writeback (no pad copy)
    x = jax.random.normal(k_x, (B, 512), jnp.float32)
    params = init_params(k_p)

    out = jax.block_until_ready(mlp_forward(x, params))

    ref = reference_forward(x, params)
    assert out.shape == (B, 384), out.shape
    # bf16 matmul inputs / inter-layer activations with f32 accumulation vs
    # pure-f32 reference -> ~1e-2 error.
    max_err = float(jnp.max(jnp.abs(out - ref)))
    assert jnp.allclose(out, ref, atol=5e-2, rtol=5e-2), max_err

    print("KERNEL_OK")
</pallas_src>

<mosaic_0001>
module attributes {stable_mosaic.version = 11 : i64} {
  func.func @mlp_kernel(%arg0: i32, %arg1: memref<8x512xbf16, #tpu.memory_space<vmem>>, %arg2: memref<512x512xbf16, #tpu.memory_space<vmem>>, %arg3: memref<1x512xf32, #tpu.memory_space<vmem>>, %arg4: memref<512x512xbf16, #tpu.memory_space<vmem>>, %arg5: memref<1x512xf32, #tpu.memory_space<vmem>>, %arg6: memref<512x512xbf16, #tpu.memory_space<vmem>>, %arg7: memref<1x512xf32, #tpu.memory_space<vmem>>, %arg8: memref<512x384xbf16, #tpu.memory_space<vmem>>, %arg9: memref<1x384xf32, #tpu.memory_space<vmem>>, %arg10: memref<8x384xf32, #tpu.memory_space<vmem>>) attributes {dimension_semantics = [#tpu.dimension_semantics<parallel>], iteration_bounds = array<i64: 1>, scalar_prefetch = 0 : i64, scratch_operands = 0 : i64, tpu.core_type = #tpu.core_type<tc>, window_params = [{transform_indices = @transform_0, window_bounds = array<i64: 8, 512>}, {pipeline_mode = #tpu.pipeline_mode<synchronous>, transform_indices = @transform_1, window_bounds = array<i64: 512, 512>}, {pipeline_mode = #tpu.pipeline_mode<synchronous>, transform_indices = @transform_2, window_bounds = array<i64: 1, 512>}, {pipeline_mode = #tpu.pipeline_mode<synchronous>, transform_indices = @transform_3, window_bounds = array<i64: 512, 512>}, {pipeline_mode = #tpu.pipeline_mode<synchronous>, transform_indices = @transform_4, window_bounds = array<i64: 1, 512>}, {pipeline_mode = #tpu.pipeline_mode<synchronous>, transform_indices = @transform_5, window_bounds = array<i64: 512, 512>}, {pipeline_mode = #tpu.pipeline_mode<synchronous>, transform_indices = @transform_6, window_bounds = array<i64: 1, 512>}, {pipeline_mode = #tpu.pipeline_mode<synchronous>, transform_indices = @transform_7, window_bounds = array<i64: 512, 384>}, {pipeline_mode = #tpu.pipeline_mode<synchronous>, transform_indices = @transform_8, window_bounds = array<i64: 1, 384>}, {transform_indices = @transform_9, window_bounds = array<i64: 8, 384>}]} {
    %c0 = arith.constant 0 : index
    %c0_0 = arith.constant 0 : index
    %0 = vector.load %arg1[%c0, %c0_0] : memref<8x512xbf16, #tpu.memory_space<vmem>>, vector<8x512xbf16>
    %c0_1 = arith.constant 0 : index
    %c0_2 = arith.constant 0 : index
    %1 = vector.load %arg2[%c0_1, %c0_2] : memref<512x512xbf16, #tpu.memory_space<vmem>>, vector<512x512xbf16>
    %cst = arith.constant dense<0.000000e+00> : vector<8x512xf32>
    %2 = tpu.matmul %0, %1, %cst {dimension_numbers = #tpu.dot_dimension_numbers<[1], [0], [0], [1], [0, 0, 1, 1], [], []>} : vector<8x512xbf16>, vector<512x512xbf16>, vector<8x512xf32> -> vector<8x512xf32>
    %c0_3 = arith.constant 0 : index
    %c0_4 = arith.constant 0 : index
    %3 = vector.load %arg3[%c0_3, %c0_4] : memref<1x512xf32, #tpu.memory_space<vmem>>, vector<1x512xf32>
    %4 = vector.broadcast %3 : vector<1x512xf32> to vector<8x512xf32>
    %5 = arith.addf %2, %4 : vector<8x512xf32>
    %cst_5 = arith.constant 0.000000e+00 : f32
    %6 = vector.broadcast %cst_5 : f32 to vector<8x512xf32>
    %7 = arith.maximumf %5, %6 : vector<8x512xf32>
    %8 = arith.truncf %7 : vector<8x512xf32> to vector<8x512xbf16>
    %c0_6 = arith.constant 0 : index
    %c0_7 = arith.constant 0 : index
    %9 = vector.load %arg4[%c0_6, %c0_7] : memref<512x512xbf16, #tpu.memory_space<vmem>>, vector<512x512xbf16>
    %cst_8 = arith.constant dense<0.000000e+00> : vector<8x512xf32>
    %10 = tpu.matmul %8, %9, %cst_8 {dimension_numbers = #tpu.dot_dimension_numbers<[1], [0], [0], [1], [0, 0, 1, 1], [], []>} : vector<8x512xbf16>, vector<512x512xbf16>, vector<8x512xf32> -> vector<8x512xf32>
    %c0_9 = arith.constant 0 : index
    %c0_10 = arith.constant 0 : index
    %11 = vector.load %arg5[%c0_9, %c0_10] : memref<1x512xf32, #tpu.memory_space<vmem>>, vector<1x512xf32>
    %12 = vector.broadcast %11 : vector<1x512xf32> to vector<8x512xf32>
    %13 = arith.addf %10, %12 : vector<8x512xf32>
    %cst_11 = arith.constant 0.000000e+00 : f32
    %14 = vector.broadcast %cst_11 : f32 to vector<8x512xf32>
    %15 = arith.maximumf %13, %14 : vector<8x512xf32>
    %16 = arith.truncf %15 : vector<8x512xf32> to vector<8x512xbf16>
    %c0_12 = arith.constant 0 : index
    %c0_13 = arith.constant 0 : index
    %17 = vector.load %arg6[%c0_12, %c0_13] : memref<512x512xbf16, #tpu.memory_space<vmem>>, vector<512x512xbf16>
    %cst_14 = arith.constant dense<0.000000e+00> : vector<8x512xf32>
    %18 = tpu.matmul %16, %17, %cst_14 {dimension_numbers = #tpu.dot_dimension_numbers<[1], [0], [0], [1], [0, 0, 1, 1], [], []>} : vector<8x512xbf16>, vector<512x512xbf16>, vector<8x512xf32> -> vector<8x512xf32>
    %c0_15 = arith.constant 0 : index
    %c0_16 = arith.constant 0 : index
    %19 = vector.load %arg7[%c0_15, %c0_16] : memref<1x512xf32, #tpu.memory_space<vmem>>, vector<1x512xf32>
    %20 = vector.broadcast %19 : vector<1x512xf32> to vector<8x512xf32>
    %21 = arith.addf %18, %20 : vector<8x512xf32>
    %cst_17 = arith.constant 0.000000e+00 : f32
    %22 = vector.broadcast %cst_17 : f32 to vector<8x512xf32>
    %23 = arith.maximumf %21, %22 : vector<8x512xf32>
    %24 = arith.truncf %23 : vector<8x512xf32> to vector<8x512xbf16>
    %c0_18 = arith.constant 0 : index
    %c0_19 = arith.constant 0 : index
    %25 = vector.load %arg8[%c0_18, %c0_19] : memref<512x384xbf16, #tpu.memory_space<vmem>>, vector<512x384xbf16>
    %cst_20 = arith.constant dense<0.000000e+00> : vector<8x384xf32>
    %26 = tpu.matmul %24, %25, %cst_20 {dimension_numbers = #tpu.dot_dimension_numbers<[1], [0], [0], [1], [0, 0, 1, 1], [], []>} : vector<8x512xbf16>, vector<512x384xbf16>, vector<8x384xf32> -> vector<8x384xf32>
    %c0_21 = arith.constant 0 : index
    %c0_22 = arith.constant 0 : index
    %27 = vector.load %arg9[%c0_21, %c0_22] : memref<1x384xf32, #tpu.memory_space<vmem>>, vector<1x384xf32>
    %28 = vector.broadcast %27 : vector<1x384xf32> to vector<8x384xf32>
    %29 = arith.addf %26, %28 : vector<8x384xf32>
    %c0_23 = arith.constant 0 : index
    %c0_24 = arith.constant 0 : index
    %30 = vector.load %arg10[%c0_23, %c0_24] : memref<8x384xf32, #tpu.memory_space<vmem>>, vector<8x384xf32>
    tpu.vector_store %arg10[%c0_23, %c0_24], %29 {strides = array<i32>} : memref<8x384xf32, #tpu.memory_space<vmem>>, vector<8x384xf32>,
    return
  }
  func.func @transform_0(%arg0: i32) -> (i32, i32) {
    %c0_i32 = arith.constant 0 : i32
    %c0_i32_0 = arith.constant 0 : i32
    return %arg0, %c0_i32 : i32, i32
  }
  func.func @transform_1(%arg0: i32) -> (i32, i32) {
    %c0_i32 = arith.constant 0 : i32
    %c0_i32_0 = arith.constant 0 : i32
    %c0_i32_1 = arith.constant 0 : i32
    return %c0_i32, %c0_i32_0 : i32, i32
  }
  func.func @transform_2(%arg0: i32) -> (i32, i32) {
    %c0_i32 = arith.constant 0 : i32
    %c0_i32_0 = arith.constant 0 : i32
    %c0_i32_1 = arith.constant 0 : i32
    return %c0_i32, %c0_i32_0 : i32, i32
  }
  func.func @transform_3(%arg0: i32) -> (i32, i32) {
    %c0_i32 = arith.constant 0 : i32
    %c0_i32_0 = arith.constant 0 : i32
    %c0_i32_1 = arith.constant 0 : i32
    return %c0_i32, %c0_i32_0 : i32, i32
  }
  func.func @transform_4(%arg0: i32) -> (i32, i32) {
    %c0_i32 = arith.constant 0 : i32
    %c0_i32_0 = arith.constant 0 : i32
    %c0_i32_1 = arith.constant 0 : i32
    return %c0_i32, %c0_i32_0 : i32, i32
  }
  func.func @transform_5(%arg0: i32) -> (i32, i32) {
    %c0_i32 = arith.constant 0 : i32
    %c0_i32_0 = arith.constant 0 : i32
    %c0_i32_1 = arith.constant 0 : i32
    return %c0_i32, %c0_i32_0 : i32, i32
  }
  func.func @transform_6(%arg0: i32) -> (i32, i32) {
    %c0_i32 = arith.constant 0 : i32
    %c0_i32_0 = arith.constant 0 : i32
    %c0_i32_1 = arith.constant 0 : i32
    return %c0_i32, %c0_i32_0 : i32, i32
  }
  func.func @transform_7(%arg0: i32) -> (i32, i32) {
    %c0_i32 = arith.constant 0 : i32
    %c0_i32_0 = arith.constant 0 : i32
    %c0_i32_1 = arith.constant 0 : i32
    return %c0_i32, %c0_i32_0 : i32, i32
  }
  func.func @transform_8(%arg0: i32) -> (i32, i32) {
    %c0_i32 = arith.constant 0 : i32
    %c0_i32_0 = arith.constant 0 : i32
    %c0_i32_1 = arith.constant 0 : i32
    return %c0_i32, %c0_i32_0 : i32, i32
  }
  func.func @transform_9(%arg0: i32) -> (i32, i32) {
    %c0_i32 = arith.constant 0 : i32
    %c0_i32_0 = arith.constant 0 : i32
    return %arg0, %c0_i32 : i32, i32
  }
}

</mosaic_0001>

<llo_original>
// kernel: tpu_custom_call.1
$region0: #{tpu_custom_call.1}
  #allocation0 [shape = 'u32[]', space=smem, size = 0x4, offset = 0x4, fixed_abs, tag = 'smem constant byte address 0x4 - core index']
  #allocation1 [shape = 'u32[72,128]{1,0:T(1,128)}', space=vmem, size = 0x9000, scoped, tag = 'internal scratch']
  %s0 = inlined_call_operand.hbm [shape: bf16[8,512], index: 0, kind: input, shape index: {}]
  %s1 = inlined_call_operand.hbm [shape: bf16[512,512], index: 1, kind: input, shape index: {}]
  %s2 = inlined_call_operand.hbm [shape: f32[1,512], index: 2, kind: input, shape index: {}]
  %s3 = inlined_call_operand.hbm [shape: bf16[512,512], index: 3, kind: input, shape index: {}]
  %s4 = inlined_call_operand.hbm [shape: f32[1,512], index: 4, kind: input, shape index: {}]
  %s5 = inlined_call_operand.hbm [shape: bf16[512,512], index: 5, kind: input, shape index: {}]
  %s6 = inlined_call_operand.vmem [shape: f32[1,512], index: 6, kind: input, shape index: {}]
  %s7 = inlined_call_operand.hbm [shape: bf16[512,384], index: 7, kind: input, shape index: {}]
  %s8 = inlined_call_operand.vmem [shape: f32[1,384], index: 8, kind: input, shape index: {}]
  %s9 = inlined_call_operand.hbm [shape: f32[8,384], index: 9, kind: output, shape index: {}]
  %s10 = sld [smem:[#allocation0]]
  $region74: #{tpu_custom_call.1} parent=0
    _
  %s12 = ssub.s32 1, %s10
  %s13 = scalar_select 0, %s12, %s10
  $region1: #{tpu_custom_call.1} parent=0
    #allocation2 [shape = 'u8[8192]{0}', space=vmem, size = 0x2000, scoped, tag = 'input window, operand 0, single buffered']
    #allocation3 [shape = 's32[1]{0}', space=sflag, size = 0x4, scoped, tag = 'scoped memory for tpu_custom_call.1']
    #allocation4 [shape = 's32[1]{0}', space=sflag, size = 0x4, scoped, tag = 'scoped memory for tpu_custom_call.1']
    #allocation5 [shape = 'u8[524288]{0}', space=vmem, size = 0x80000, scoped, tag = 'input window, operand 1, single buffered']
    #allocation6 [shape = 's32[1]{0}', space=sflag, size = 0x4, scoped, tag = 'scoped memory for tpu_custom_call.1']
    #allocation7 [shape = 'u8[2048]{0}', space=vmem, size = 0x800, scoped, tag = 'input window, operand 2, single buffered']
    #allocation8 [shape = 'u8[524288]{0}', space=vmem, size = 0x80000, scoped, tag = 'input window, operand 3, single buffered']
    #allocation9 [shape = 's32[1]{0}', space=sflag, size = 0x4, scoped, tag = 'scoped memory for tpu_custom_call.1']
    #allocation10 [shape = 'u8[2048]{0}', space=vmem, size = 0x800, scoped, tag = 'input window, operand 4, single buffered']
    #allocation11 [shape = 'u8[524288]{0}', space=vmem, size = 0x80000, scoped, tag = 'input window, operand 5, single buffered']
    #allocation12 [shape = 's32[1]{0}', space=sflag, size = 0x4, scoped, tag = 'scoped memory for tpu_custom_call.1']
    #allocation13 [shape = 'u8[393216]{0}', space=vmem, size = 0x60000, scoped, tag = 'input window, operand 7, single buffered']
    #allocation14 [shape = 'u8[12288]{0}', space=vmem, size = 0x3000, scoped, tag = 'output window, operand 0, single buffered']
    %14 = vsyncpa [#allocation3], 0
    %15 = vsyncpa [#allocation6], 0
    %16 = vsyncpa [#allocation9], 0
    %17 = vsyncpa [#allocation12], 0
    %18 = vsyncpa [#allocation4], 0
    // Predicated region
    $region2: #{tpu_custom_call.1} parent=1 // pred_check
      _
    $region3: #{tpu_custom_call.1} parent=1 // pred_check_branch
      %20 = sbr.rel (0) target = $region5
    $region4: #{tpu_custom_call.1} parent=1 // pred_region
      %22 = vsyncadd [#allocation3], 0
      %s24 = sshll.u32 %s0, 4
      %s25 = int_to_ptr.hbm [resolvable:$true] %s24
      %s26 = sshll.u32 [#allocation2], 4
      %s27 = int_to_ptr.vmem [resolvable:$true] %s26
      %29 = dma.hbm_to_vmem [thread:$0]  %s25, 256, %s27, [#allocation3]
    $region5: #{tpu_custom_call.1} parent=1 // pred_fallthru
      _
    // Predicated region
    $region6: #{tpu_custom_call.1} parent=1 // pred_check
      _
    $region7: #{tpu_custom_call.1} parent=1 // pred_check_branch
      %31 = sbr.rel (0) target = $region9
    $region8: #{tpu_custom_call.1} parent=1 // pred_region
      %33 = vsyncadd [#allocation6], 0
      %s34 = sshll.u32 %s1, 4
      %s35 = int_to_ptr.hbm [resolvable:$true] %s34
      %s36 = sshll.u32 [#allocation5], 4
      %s37 = int_to_ptr.vmem [resolvable:$true] %s36
      %42 = dma.hbm_to_vmem [thread:$0]  %s35, 16384, %s37, [#allocation6], 256, 256, 16
    $region9: #{tpu_custom_call.1} parent=1 // pred_fallthru
      _
    // Predicated region
    $region10: #{tpu_custom_call.1} parent=1 // pred_check
      _
    $region11: #{tpu_custom_call.1} parent=1 // pred_check_branch
      %44 = sbr.rel (0) target = $region13
    $region12: #{tpu_custom_call.1} parent=1 // pred_region
      %46 = vsyncadd [#allocation6], 0
      %s48 = sshll.u32 %s2, 4
      %s49 = int_to_ptr.hbm [resolvable:$true] %s48
      %s50 = sshll.u32 [#allocation7], 4
      %s51 = int_to_ptr.vmem [resolvable:$true] %s50
      %53 = dma.hbm_to_vmem [thread:$0]  %s49, 64, %s51, [#allocation6]
    $region13: #{tpu_custom_call.1} parent=1 // pred_fallthru
      _
    // Predicated region
    $region14: #{tpu_custom_call.1} parent=1 // pred_check
      _
    $region15: #{tpu_custom_call.1} parent=1 // pred_check_branch
      %55 = sbr.rel (0) target = $region17
    $region16: #{tpu_custom_call.1} parent=1 // pred_region
      %57 = vsyncadd [#allocation9], 0
      %s58 = sshll.u32 %s3, 4
      %s59 = int_to_ptr.hbm [resolvable:$true] %s58
      %s60 = sshll.u32 [#allocation8], 4
      %s61 = int_to_ptr.vmem [resolvable:$true] %s60
      %66 = dma.hbm_to_vmem [thread:$0]  %s59, 16384, %s61, [#allocation9], 256, 256, 16
    $region17: #{tpu_custom_call.1} parent=1 // pred_fallthru
      _
    // Predicated region
    $region18: #{tpu_custom_call.1} parent=1 // pred_check
      _
    $region19: #{tpu_custom_call.1} parent=1 // pred_check_branch
      %68 = sbr.rel (0) target = $region21
    $region20: #{tpu_custom_call.1} parent=1 // pred_region
      %70 = vsyncadd [#allocation9], 0
      %s72 = sshll.u32 %s4, 4
      %s73 = int_to_ptr.hbm [resolvable:$true] %s72
      %s74 = sshll.u32 [#allocation10], 4
      %s75 = int_to_ptr.vmem [resolvable:$true] %s74
      %77 = dma.hbm_to_vmem [thread:$0]  %s73, 64, %s75, [#allocation9]
    $region21: #{tpu_custom_call.1} parent=1 // pred_fallthru
      _
    // Predicated region
    $region22: #{tpu_custom_call.1} parent=1 // pred_check
      _
    $region23: #{tpu_custom_call.1} parent=1 // pred_check_branch
      %79 = sbr.rel (0) target = $region25
    $region24: #{tpu_custom_call.1} parent=1 // pred_region
      %81 = vsyncadd [#allocation12], 0
      %s82 = sshll.u32 %s5, 4
      %s83 = int_to_ptr.hbm [resolvable:$true] %s82
      %s84 = sshll.u32 [#allocation11], 4
      %s85 = int_to_ptr.vmem [resolvable:$true] %s84
      %90 = dma.hbm_to_vmem [thread:$0]  %s83, 16384, %s85, [#allocation12], 256, 256, 16
    $region25: #{tpu_custom_call.1} parent=1 // pred_fallthru
      _
    // Predicated region
    $region26: #{tpu_custom_call.1} parent=1 // pred_check
      _
    $region27: #{tpu_custom_call.1} parent=1 // pred_check_branch
      %92 = sbr.rel (0) target = $region29
    $region28: #{tpu_custom_call.1} parent=1 // pred_region
      _
    $region29: #{tpu_custom_call.1} parent=1 // pred_fallthru
      _
    // Predicated region
    $region30: #{tpu_custom_call.1} parent=1 // pred_check
      _
    $region31: #{tpu_custom_call.1} parent=1 // pred_check_branch
      %94 = sbr.rel (0) target = $region33
    $region32: #{tpu_custom_call.1} parent=1 // pred_region
      %96 = vsyncadd [#allocation12], 0
      %s97 = sshll.u32 %s7, 4
      %s98 = int_to_ptr.hbm [resolvable:$true] %s97
      %s99 = sshll.u32 [#allocation13], 4
      %s100 = int_to_ptr.vmem [resolvable:$true] %s99
      %105 = dma.hbm_to_vmem [thread:$0]  %s98, 12288, %s100, [#allocation12], 192, 192, 12
    $region33: #{tpu_custom_call.1} parent=1 // pred_fallthru
      _
    // Predicated region
    $region34: #{tpu_custom_call.1} parent=1 // pred_check
      _
    $region35: #{tpu_custom_call.1} parent=1 // pred_check_branch
      %107 = sbr.rel (0) target = $region37
    $region36: #{tpu_custom_call.1} parent=1 // pred_region
      _
    $region37: #{tpu_custom_call.1} parent=1 // pred_fallthru
      _
    // Predicated region
    $region38: #{tpu_custom_call.1} parent=1 // pred_check
      _
    $region39: #{tpu_custom_call.1} parent=1 // pred_check_branch
      %109 = sbr.rel (0) target = $region41
    $region40: #{tpu_custom_call.1} parent=1 // pred_region
      %111 = dma.done [#allocation3], 256
    $region41: #{tpu_custom_call.1} parent=1 // pred_fallthru
      _
    // Predicated region
    $region42: #{tpu_custom_call.1} parent=1 // pred_check
      _
    $region43: #{tpu_custom_call.1} parent=1 // pred_check_branch
      %113 = sbr.rel (0) target = $region45
    $region44: #{tpu_custom_call.1} parent=1 // pred_region
      %115 = dma.done [#allocation6], 16384
    $region45: #{tpu_custom_call.1} parent=1 // pred_fallthru
      _
    // Predicated region
    $region46: #{tpu_custom_call.1} parent=1 // pred_check
      _
    $region47: #{tpu_custom_call.1} parent=1 // pred_check_branch
      %117 = sbr.rel (0) target = $region49
    $region48: #{tpu_custom_call.1} parent=1 // pred_region
      %119 = dma.done [#allocation6], 64
    $region49: #{tpu_custom_call.1} parent=1 // pred_fallthru
      _
    // Predicated region
    $region50: #{tpu_custom_call.1} parent=1 // pred_check
      _
    $region51: #{tpu_custom_call.1} parent=1 // pred_check_branch
      %121 = sbr.rel (0) target = $region53
    $region52: #{tpu_custom_call.1} parent=1 // pred_region
      %123 = dma.done [#allocation9], 16384
    $region53: #{tpu_custom_call.1} parent=1 // pred_fallthru
      _
    // Predicated region
    $region54: #{tpu_custom_call.1} parent=1 // pred_check
      _
    $region55: #{tpu_custom_call.1} parent=1 // pred_check_branch
      %125 = sbr.rel (0) target = $region57
    $region56: #{tpu_custom_call.1} parent=1 // pred_region
      %127 = dma.done [#allocation9], 64
    $region57: #{tpu_custom_call.1} parent=1 // pred_fallthru
      _
    // Predicated region
    $region58: #{tpu_custom_call.1} parent=1 // pred_check
      _
    $region59: #{tpu_custom_call.1} parent=1 // pred_check_branch
      %129 = sbr.rel (0) target = $region61
    $region60: #{tpu_custom_call.1} parent=1 // pred_region
      %131 = dma.done [#allocation12], 16384
    $region61: #{tpu_custom_call.1} parent=1 // pred_fallthru
      _
    // Predicated region
    $region62: #{tpu_custom_call.1} parent=1 // pred_check
      _
    $region63: #{tpu_custom_call.1} parent=1 // pred_check_branch
      %133 = sbr.rel (0) target = $region65
    $region64: #{tpu_custom_call.1} parent=1 // pred_region
      %135 = dma.done [#allocation12], 12288
    $region65: #{tpu_custom_call.1} parent=1 // pred_fallthru
      _
    %v136 = vld [vmem:[#allocation2] sm:$0xff]
    %v137 = vld [vmem:[#allocation2 + $0x8] sm:$0xff]
    %v138 = vld [vmem:[#allocation5] sm:$0xff]
    %v139 = vld [vmem:[#allocation5 + $0x8] sm:$0xff]
    %v140 = vld [vmem:[#allocation5 + $0x10] sm:$0xff]
    %v141 = vld [vmem:[#allocation5 + $0x18] sm:$0xff]
    %v142 = vld [vmem:[#allocation5 + $0x20] sm:$0xff]
    %v143 = vld [vmem:[#allocation5 + $0x28] sm:$0xff]
    %v144 = vld [vmem:[#allocation5 + $0x30] sm:$0xff]
    %v145 = vld [vmem:[#allocation5 + $0x38] sm:$0xff]
    %v146 = vld [vmem:[#allocation5 + $0x40] sm:$0xff]
    %v147 = vld [vmem:[#allocation5 + $0x48] sm:$0xff]
    %v148 = vld [vmem:[#allocation5 + $0x50] sm:$0xff]
    %v149 = vld [vmem:[#allocation5 + $0x58] sm:$0xff]
    %v150 = vld [vmem:[#allocation5 + $0x60] sm:$0xff]
    %v151 = vld [vmem:[#allocation5 + $0x68] sm:$0xff]
    %v152 = vld [vmem:[#allocation5 + $0x70] sm:$0xff]
    %v153 = vld [vmem:[#allocation5 + $0x78] sm:$0xff]
    %v154 = vld [vmem:[#allocation5 + $0x80] sm:$0xff]
    %v155 = vld [vmem:[#allocation5 + $0x88] sm:$0xff]
    %v156 = vld [vmem:[#allocation5 + $0x90] sm:$0xff]
    %v157 = vld [vmem:[#allocation5 + $0x98] sm:$0xff]
    %v158 = vld [vmem:[#allocation5 + $0xa0] sm:$0xff]
    %v159 = vld [vmem:[#allocation5 + $0xa8] sm:$0xff]
    %v160 = vld [vmem:[#allocation5 + $0xb0] sm:$0xff]
    %v161 = vld [vmem:[#allocation5 + $0xb8] sm:$0xff]
    %v162 = vld [vmem:[#allocation5 + $0xc0] sm:$0xff]
    %v163 = vld [vmem:[#allocation5 + $0xc8] sm:$0xff]
    %v164 = vld [vmem:[#allocation5 + $0xd0] sm:$0xff]
    %v165 = vld [vmem:[#allocation5 + $0xd8] sm:$0xff]
    %v166 = vld [vmem:[#allocation5 + $0xe0] sm:$0xff]
    %v167 = vld [vmem:[#allocation5 + $0xe8] sm:$0xff]
    %v168 = vld [vmem:[#allocation5 + $0xf0] sm:$0xff]
    %v169 = vld [vmem:[#allocation5 + $0xf8] sm:$0xff]
    %v170 = vld [vmem:[#allocation5 + $0x100] sm:$0xff]
    %v171 = vld [vmem:[#allocation5 + $0x108] sm:$0xff]
    %v172 = vld [vmem:[#allocation5 + $0x110] sm:$0xff]
    %v173 = vld [vmem:[#allocation5 + $0x118] sm:$0xff]
    %v174 = vld [vmem:[#allocation5 + $0x120] sm:$0xff]
    %v175 = vld [vmem:[#allocation5 + $0x128] sm:$0xff]
    %v176 = vld [vmem:[#allocation5 + $0x130] sm:$0xff]
    %v177 = vld [vmem:[#allocation5 + $0x138] sm:$0xff]
    %v178 = vld [vmem:[#allocation5 + $0x140] sm:$0xff]
    %v179 = vld [vmem:[#allocation5 + $0x148] sm:$0xff]
    %v180 = vld [vmem:[#allocation5 + $0x150] sm:$0xff]
    %v181 = vld [vmem:[#allocation5 + $0x158] sm:$0xff]
    %v182 = vld [vmem:[#allocation5 + $0x160] sm:$0xff]
    %v183 = vld [vmem:[#allocation5 + $0x168] sm:$0xff]
    %v184 = vld [vmem:[#allocation5 + $0x170] sm:$0xff]
    %v185 = vld [vmem:[#allocation5 + $0x178] sm:$0xff]
    %v186 = vld [vmem:[#allocation5 + $0x180] sm:$0xff]
    %v187 = vld [vmem:[#allocation5 + $0x188] sm:$0xff]
    %v188 = vld [vmem:[#allocation5 + $0x190] sm:$0xff]
    %v189 = vld [vmem:[#allocation5 + $0x198] sm:$0xff]
    %v190 = vld [vmem:[#allocation5 + $0x1a0] sm:$0xff]
    %v191 = vld [vmem:[#allocation5 + $0x1a8] sm:$0xff]
    %v192 = vld [vmem:[#allocation5 + $0x1b0] sm:$0xff]
    %v193 = vld [vmem:[#allocation5 + $0x1b8] sm:$0xff]
    %v194 = vld [vmem:[#allocation5 + $0x1c0] sm:$0xff]
    %v195 = vld [vmem:[#allocation5 + $0x1c8] sm:$0xff]
    %v196 = vld [vmem:[#allocation5 + $0x1d0] sm:$0xff]
    %v197 = vld [vmem:[#allocation5 + $0x1d8] sm:$0xff]
    %v198 = vld [vmem:[#allocation5 + $0x1e0] sm:$0xff]
    %v199 = vld [vmem:[#allocation5 + $0x1e8] sm:$0xff]
    %v200 = vld [vmem:[#allocation5 + $0x1f0] sm:$0xff]
    %v201 = vld [vmem:[#allocation5 + $0x1f8] sm:$0xff]
    %v202 = vld [vmem:[#allocation5 + $0x200] sm:$0xff]
    %v203 = vld [vmem:[#allocation5 + $0x208] sm:$0xff]
    %v204 = vld [vmem:[#allocation5 + $0x210] sm:$0xff]
    %v205 = vld [vmem:[#allocation5 + $0x218] sm:$0xff]
    %v206 = vld [vmem:[#allocation5 + $0x220] sm:$0xff]
    %v207 = vld [vmem:[#allocation5 + $0x228] sm:$0xff]
    %v208 = vld [vmem:[#allocation5 + $0x230] sm:$0xff]
    %v209 = vld [vmem:[#allocation5 + $0x238] sm:$0xff]
    %v210 = vld [vmem:[#allocation5 + $0x240] sm:$0xff]
    %v211 = vld [vmem:[#allocation5 + $0x248] sm:$0xff]
    %v212 = vld [vmem:[#allocation5 + $0x250] sm:$0xff]
    %v213 = vld [vmem:[#allocation5 + $0x258] sm:$0xff]
    %v214 = vld [vmem:[#allocation5 + $0x260] sm:$0xff]
    %v215 = vld [vmem:[#allocation5 + $0x268] sm:$0xff]
    %v216 = vld [vmem:[#allocation5 + $0x270] sm:$0xff]
    %v217 = vld [vmem:[#allocation5 + $0x278] sm:$0xff]
    %v218 = vld [vmem:[#allocation5 + $0x280] sm:$0xff]
    %v219 = vld [vmem:[#allocation5 + $0x288] sm:$0xff]
    %v220 = vld [vmem:[#allocation5 + $0x290] sm:$0xff]
    %v221 = vld [vmem:[#allocation5 + $0x298] sm:$0xff]
    %v222 = vld [vmem:[#allocation5 + $0x2a0] sm:$0xff]
    %v223 = vld [vmem:[#allocation5 + $0x2a8] sm:$0xff]
    %v224 = vld [vmem:[#allocation5 + $0x2b0] sm:$0xff]
    %v225 = vld [vmem:[#allocation5 + $0x2b8] sm:$0xff]
    %v226 = vld [vmem:[#allocation5 + $0x2c0] sm:$0xff]
    %v227 = vld [vmem:[#allocation5 + $0x2c8] sm:$0xff]
    %v228 = vld [vmem:[#allocation5 + $0x2d0] sm:$0xff]
    %v229 = vld [vmem:[#allocation5 + $0x2d8] sm:$0xff]
    %v230 = vld [vmem:[#allocation5 + $0x2e0] sm:$0xff]
    %v231 = vld [vmem:[#allocation5 + $0x2e8] sm:$0xff]
    %v232 = vld [vmem:[#allocation5 + $0x2f0] sm:$0xff]
    %v233 = vld [vmem:[#allocation5 + $0x2f8] sm:$0xff]
    %v234 = vld [vmem:[#allocation5 + $0x300] sm:$0xff]
    %v235 = vld [vmem:[#allocation5 + $0x308] sm:$0xff]
    %v236 = vld [vmem:[#allocation5 + $0x310] sm:$0xff]
    %v237 = vld [vmem:[#allocation5 + $0x318] sm:$0xff]
    %v238 = vld [vmem:[#allocation5 + $0x320] sm:$0xff]
    %v239 = vld [vmem:[#allocation5 + $0x328] sm:$0xff]
    %v240 = vld [vmem:[#allocation5 + $0x330] sm:$0xff]
    %v241 = vld [vmem:[#allocation5 + $0x338] sm:$0xff]
    %v242 = vld [vmem:[#allocation5 + $0x340] sm:$0xff]
    %v243 = vld [vmem:[#allocation5 + $0x348] sm:$0xff]
    %v244 = vld [vmem:[#allocation5 + $0x350] sm:$0xff]
    %v245 = vld [vmem:[#allocation5 + $0x358] sm:$0xff]
    %v246 = vld [vmem:[#allocation5 + $0x360] sm:$0xff]
    %v247 = vld [vmem:[#allocation5 + $0x368] sm:$0xff]
    %v248 = vld [vmem:[#allocation5 + $0x370] sm:$0xff]
    %v249 = vld [vmem:[#allocation5 + $0x378] sm:$0xff]
    %v250 = vld [vmem:[#allocation5 + $0x380] sm:$0xff]
    %v251 = vld [vmem:[#allocation5 + $0x388] sm:$0xff]
    %v252 = vld [vmem:[#allocation5 + $0x390] sm:$0xff]
    %v253 = vld [vmem:[#allocation5 + $0x398] sm:$0xff]
    %v254 = vld [vmem:[#allocation5 + $0x3a0] sm:$0xff]
    %v255 = vld [vmem:[#allocation5 + $0x3a8] sm:$0xff]
    %v256 = vld [vmem:[#allocation5 + $0x3b0] sm:$0xff]
    %v257 = vld [vmem:[#allocation5 + $0x3b8] sm:$0xff]
    %v258 = vld [vmem:[#allocation5 + $0x3c0] sm:$0xff]
    %v259 = vld [vmem:[#allocation5 + $0x3c8] sm:$0xff]
    %v260 = vld [vmem:[#allocation5 + $0x3d0] sm:$0xff]
    %v261 = vld [vmem:[#allocation5 + $0x3d8] sm:$0xff]
    %v262 = vld [vmem:[#allocation5 + $0x3e0] sm:$0xff]
    %v263 = vld [vmem:[#allocation5 + $0x3e8] sm:$0xff]
    %v264 = vld [vmem:[#allocation5 + $0x3f0] sm:$0xff]
    %v265 = vld [vmem:[#allocation5 + $0x3f8] sm:$0xff]
    %v266 = vld [vmem:[#allocation7] sm:$0xf]
    %v268 = vperm.slane %v266, 0
    %v269 = vperm.slane %v266, 1
    %v270 = vperm.slane %v266, 2
    %v271 = vperm.slane %v266, 3
    %v278 = vunpack.c.l.b16 %v136
    %v279 = vunpack.c.h.b16 %v136
    %v280 = vunpack.c.l.b16 %v137
    %v281 = vunpack.c.h.b16 %v137
    %v282 = vpack.c.b16 %v278, %v278
    %v283 = vpack.c.b16 %v279, %v279
    %v284 = vpack.c.b16 %v280, %v280
    %v285 = vpack.c.b16 %v281, %v281
    %v418 = vunpack.c.l.b16 %v138
    %v419 = vunpack.c.h.b16 %v138
    %v420 = vunpack.c.l.b16 %v139
    %v421 = vunpack.c.h.b16 %v139
    %v422 = vunpack.c.l.b16 %v140
    %v423 = vunpack.c.h.b16 %v140
    %v424 = vunpack.c.l.b16 %v141
    %v425 = vunpack.c.h.b16 %v141
    %v426 = vunpack.c.l.b16 %v142
    %v427 = vunpack.c.h.b16 %v142
    %v428 = vunpack.c.l.b16 %v143
    %v429 = vunpack.c.h.b16 %v143
    %v430 = vunpack.c.l.b16 %v144
    %v431 = vunpack.c.h.b16 %v144
    %v432 = vunpack.c.l.b16 %v145
    %v433 = vunpack.c.h.b16 %v145
    %v434 = vunpack.c.l.b16 %v146
    %v435 = vunpack.c.h.b16 %v146
    %v436 = vunpack.c.l.b16 %v147
    %v437 = vunpack.c.h.b16 %v147
    %v438 = vunpack.c.l.b16 %v148
    %v439 = vunpack.c.h.b16 %v148
    %v440 = vunpack.c.l.b16 %v149
    %v441 = vunpack.c.h.b16 %v149
    %v442 = vunpack.c.l.b16 %v150
    %v443 = vunpack.c.h.b16 %v150
    %v444 = vunpack.c.l.b16 %v151
    %v445 = vunpack.c.h.b16 %v151
    %v446 = vunpack.c.l.b16 %v152
    %v447 = vunpack.c.h.b16 %v152
    %v448 = vunpack.c.l.b16 %v153
    %v449 = vunpack.c.h.b16 %v153
    %v450 = vunpack.c.l.b16 %v154
    %v451 = vunpack.c.h.b16 %v154
    %v452 = vunpack.c.l.b16 %v155
    %v453 = vunpack.c.h.b16 %v155
    %v454 = vunpack.c.l.b16 %v156
    %v455 = vunpack.c.h.b16 %v156
    %v456 = vunpack.c.l.b16 %v157
    %v457 = vunpack.c.h.b16 %v157
    %v458 = vunpack.c.l.b16 %v158
    %v459 = vunpack.c.h.b16 %v158
    %v460 = vunpack.c.l.b16 %v159
    %v461 = vunpack.c.h.b16 %v159
    %v462 = vunpack.c.l.b16 %v160
    %v463 = vunpack.c.h.b16 %v160
    %v464 = vunpack.c.l.b16 %v161
    %v465 = vunpack.c.h.b16 %v161
    %v466 = vunpack.c.l.b16 %v162
    %v467 = vunpack.c.h.b16 %v162
    %v468 = vunpack.c.l.b16 %v163
    %v469 = vunpack.c.h.b16 %v163
    %v470 = vunpack.c.l.b16 %v164
    %v471 = vunpack.c.h.b16 %v164
    %v472 = vunpack.c.l.b16 %v165
    %v473 = vunpack.c.h.b16 %v165
    %v474 = vunpack.c.l.b16 %v166
    %v475 = vunpack.c.h.b16 %v166
    %v476 = vunpack.c.l.b16 %v167
    %v477 = vunpack.c.h.b16 %v167
    %v478 = vunpack.c.l.b16 %v168
    %v479 = vunpack.c.h.b16 %v168
    %v480 = vunpack.c.l.b16 %v169
    %v481 = vunpack.c.h.b16 %v169
    %v482 = vunpack.c.l.b16 %v170
    %v483 = vunpack.c.h.b16 %v170
    %v484 = vunpack.c.l.b16 %v171
    %v485 = vunpack.c.h.b16 %v171
    %v486 = vunpack.c.l.b16 %v172
    %v487 = vunpack.c.h.b16 %v172
    %v488 = vunpack.c.l.b16 %v173
    %v489 = vunpack.c.h.b16 %v173
    %v490 = vunpack.c.l.b16 %v174
    %v491 = vunpack.c.h.b16 %v174
    %v492 = vunpack.c.l.b16 %v175
    %v493 = vunpack.c.h.b16 %v175
    %v494 = vunpack.c.l.b16 %v176
    %v495 = vunpack.c.h.b16 %v176
    %v496 = vunpack.c.l.b16 %v177
    %v497 = vunpack.c.h.b16 %v177
    %v498 = vunpack.c.l.b16 %v178
    %v499 = vunpack.c.h.b16 %v178
    %v500 = vunpack.c.l.b16 %v179
    %v501 = vunpack.c.h.b16 %v179
    %v502 = vunpack.c.l.b16 %v180
    %v503 = vunpack.c.h.b16 %v180
    %v504 = vunpack.c.l.b16 %v181
    %v505 = vunpack.c.h.b16 %v181
    %v506 = vunpack.c.l.b16 %v182
    %v507 = vunpack.c.h.b16 %v182
    %v508 = vunpack.c.l.b16 %v183
    %v509 = vunpack.c.h.b16 %v183
    %v510 = vunpack.c.l.b16 %v184
    %v511 = vunpack.c.h.b16 %v184
    %v512 = vunpack.c.l.b16 %v185
    %v513 = vunpack.c.h.b16 %v185
    %v514 = vunpack.c.l.b16 %v186
    %v515 = vunpack.c.h.b16 %v186
    %v516 = vunpack.c.l.b16 %v187
    %v517 = vunpack.c.h.b16 %v187
    %v518 = vunpack.c.l.b16 %v188
    %v519 = vunpack.c.h.b16 %v188
    %v520 = vunpack.c.l.b16 %v189
    %v521 = vunpack.c.h.b16 %v189
    %v522 = vunpack.c.l.b16 %v190
    %v523 = vunpack.c.h.b16 %v190
    %v524 = vunpack.c.l.b16 %v191
    %v525 = vunpack.c.h.b16 %v191
    %v526 = vunpack.c.l.b16 %v192
    %v527 = vunpack.c.h.b16 %v192
    %v528 = vunpack.c.l.b16 %v193
    %v529 = vunpack.c.h.b16 %v193
    %v530 = vunpack.c.l.b16 %v194
    %v531 = vunpack.c.h.b16 %v194
    %v532 = vunpack.c.l.b16 %v195
    %v533 = vunpack.c.h.b16 %v195
    %v534 = vunpack.c.l.b16 %v196
    %v535 = vunpack.c.h.b16 %v196
    %v536 = vunpack.c.l.b16 %v197
    %v537 = vunpack.c.h.b16 %v197
    %v538 = vunpack.c.l.b16 %v198
    %v539 = vunpack.c.h.b16 %v198
    %v540 = vunpack.c.l.b16 %v199
    %v541 = vunpack.c.h.b16 %v199
    %v542 = vunpack.c.l.b16 %v200
    %v543 = vunpack.c.h.b16 %v200
    %v544 = vunpack.c.l.b16 %v201
    %v545 = vunpack.c.h.b16 %v201
    %v546 = vunpack.c.l.b16 %v202
    %v547 = vunpack.c.h.b16 %v202
    %v548 = vunpack.c.l.b16 %v203
    %v549 = vunpack.c.h.b16 %v203
    %v550 = vunpack.c.l.b16 %v204
    %v551 = vunpack.c.h.b16 %v204
    %v552 = vunpack.c.l.b16 %v205
    %v553 = vunpack.c.h.b16 %v205
    %v554 = vunpack.c.l.b16 %v206
    %v555 = vunpack.c.h.b16 %v206
    %v556 = vunpack.c.l.b16 %v207
    %v557 = vunpack.c.h.b16 %v207
    %v558 = vunpack.c.l.b16 %v208
    %v559 = vunpack.c.h.b16 %v208
    %v560 = vunpack.c.l.b16 %v209
    %v561 = vunpack.c.h.b16 %v209
    %v562 = vunpack.c.l.b16 %v210
    %v563 = vunpack.c.h.b16 %v210
    %v564 = vunpack.c.l.b16 %v211
    %v565 = vunpack.c.h.b16 %v211
    %v566 = vunpack.c.l.b16 %v212
    %v567 = vunpack.c.h.b16 %v212
    %v568 = vunpack.c.l.b16 %v213
    %v569 = vunpack.c.h.b16 %v213
    %v570 = vunpack.c.l.b16 %v214
    %v571 = vunpack.c.h.b16 %v214
    %v572 = vunpack.c.l.b16 %v215
    %v573 = vunpack.c.h.b16 %v215
    %v574 = vunpack.c.l.b16 %v216
    %v575 = vunpack.c.h.b16 %v216
    %v576 = vunpack.c.l.b16 %v217
    %v577 = vunpack.c.h.b16 %v217
    %v578 = vunpack.c.l.b16 %v218
    %v579 = vunpack.c.h.b16 %v218
    %v580 = vunpack.c.l.b16 %v219
    %v581 = vunpack.c.h.b16 %v219
    %v582 = vunpack.c.l.b16 %v220
    %v583 = vunpack.c.h.b16 %v220
    %v584 = vunpack.c.l.b16 %v221
    %v585 = vunpack.c.h.b16 %v221
    %v586 = vunpack.c.l.b16 %v222
    %v587 = vunpack.c.h.b16 %v222
    %v588 = vunpack.c.l.b16 %v223
    %v589 = vunpack.c.h.b16 %v223
    %v590 = vunpack.c.l.b16 %v224
    %v591 = vunpack.c.h.b16 %v224
    %v592 = vunpack.c.l.b16 %v225
    %v593 = vunpack.c.h.b16 %v225
    %v594 = vunpack.c.l.b16 %v226
    %v595 = vunpack.c.h.b16 %v226
    %v596 = vunpack.c.l.b16 %v227
    %v597 = vunpack.c.h.b16 %v227
    %v598 = vunpack.c.l.b16 %v228
    %v599 = vunpack.c.h.b16 %v228
    %v600 = vunpack.c.l.b16 %v229
    %v601 = vunpack.c.h.b16 %v229
    %v602 = vunpack.c.l.b16 %v230
    %v603 = vunpack.c.h.b16 %v230
    %v604 = vunpack.c.l.b16 %v231
    %v605 = vunpack.c.h.b16 %v231
    %v606 = vunpack.c.l.b16 %v232
    %v607 = vunpack.c.h.b16 %v232
    %v608 = vunpack.c.l.b16 %v233
    %v609 = vunpack.c.h.b16 %v233
    %v610 = vunpack.c.l.b16 %v234
    %v611 = vunpack.c.h.b16 %v234
    %v612 = vunpack.c.l.b16 %v235
    %v613 = vunpack.c.h.b16 %v235
    %v614 = vunpack.c.l.b16 %v236
    %v615 = vunpack.c.h.b16 %v236
    %v616 = vunpack.c.l.b16 %v237
    %v617 = vunpack.c.h.b16 %v237
    %v618 = vunpack.c.l.b16 %v238
    %v619 = vunpack.c.h.b16 %v238
    %v620 = vunpack.c.l.b16 %v239
    %v621 = vunpack.c.h.b16 %v239
    %v622 = vunpack.c.l.b16 %v240
    %v623 = vunpack.c.h.b16 %v240
    %v624 = vunpack.c.l.b16 %v241
    %v625 = vunpack.c.h.b16 %v241
    %v626 = vunpack.c.l.b16 %v242
    %v627 = vunpack.c.h.b16 %v242
    %v628 = vunpack.c.l.b16 %v243
    %v629 = vunpack.c.h.b16 %v243
    %v630 = vunpack.c.l.b16 %v244
    %v631 = vunpack.c.h.b16 %v244
    %v632 = vunpack.c.l.b16 %v245
    %v633 = vunpack.c.h.b16 %v245
    %v634 = vunpack.c.l.b16 %v246
    %v635 = vunpack.c.h.b16 %v246
    %v636 = vunpack.c.l.b16 %v247
    %v637 = vunpack.c.h.b16 %v247
    %v638 = vunpack.c.l.b16 %v248
    %v639 = vunpack.c.h.b16 %v248
    %v640 = vunpack.c.l.b16 %v249
    %v641 = vunpack.c.h.b16 %v249
    %v642 = vunpack.c.l.b16 %v250
    %v643 = vunpack.c.h.b16 %v250
    %v644 = vunpack.c.l.b16 %v251
    %v645 = vunpack.c.h.b16 %v251
    %v646 = vunpack.c.l.b16 %v252
    %v647 = vunpack.c.h.b16 %v252
    %v648 = vunpack.c.l.b16 %v253
    %v649 = vunpack.c.h.b16 %v253
    %v650 = vunpack.c.l.b16 %v254
    %v651 = vunpack.c.h.b16 %v254
    %v652 = vunpack.c.l.b16 %v255
    %v653 = vunpack.c.h.b16 %v255
    %v654 = vunpack.c.l.b16 %v256
    %v655 = vunpack.c.h.b16 %v256
    %v656 = vunpack.c.l.b16 %v257
    %v657 = vunpack.c.h.b16 %v257
    %v658 = vunpack.c.l.b16 %v258
    %v659 = vunpack.c.h.b16 %v258
    %v660 = vunpack.c.l.b16 %v259
    %v661 = vunpack.c.h.b16 %v259
    %v662 = vunpack.c.l.b16 %v260
    %v663 = vunpack.c.h.b16 %v260
    %v664 = vunpack.c.l.b16 %v261
    %v665 = vunpack.c.h.b16 %v261
    %v666 = vunpack.c.l.b16 %v262
    %v667 = vunpack.c.h.b16 %v262
    %v668 = vunpack.c.l.b16 %v263
    %v669 = vunpack.c.h.b16 %v263
    %v670 = vunpack.c.l.b16 %v264
    %v671 = vunpack.c.h.b16 %v264
    %v672 = vunpack.c.l.b16 %v265
    %v673 = vunpack.c.h.b16 %v265
    %v674 = vpack.c.b16 %v422, %v418
    %v675 = vpack.c.b16 %v423, %v419
    %v676 = vpack.c.b16 %v424, %v420
    %v677 = vpack.c.b16 %v425, %v421
    %v678 = vpack.c.b16 %v430, %v426
    %v679 = vpack.c.b16 %v431, %v427
    %v680 = vpack.c.b16 %v432, %v428
    %v681 = vpack.c.b16 %v433, %v429
    %v682 = vpack.c.b16 %v438, %v434
    %v683 = vpack.c.b16 %v439, %v435
    %v684 = vpack.c.b16 %v440, %v436
    %v685 = vpack.c.b16 %v441, %v437
    %v686 = vpack.c.b16 %v446, %v442
    %v687 = vpack.c.b16 %v447, %v443
    %v688 = vpack.c.b16 %v448, %v444
    %v689 = vpack.c.b16 %v449, %v445
    %v690 = vpack.c.b16 %v454, %v450
    %v691 = vpack.c.b16 %v455, %v451
    %v692 = vpack.c.b16 %v456, %v452
    %v693 = vpack.c.b16 %v457, %v453
    %v694 = vpack.c.b16 %v462, %v458
    %v695 = vpack.c.b16 %v463, %v459
    %v696 = vpack.c.b16 %v464, %v460
    %v697 = vpack.c.b16 %v465, %v461
    %v698 = vpack.c.b16 %v470, %v466
    %v699 = vpack.c.b16 %v471, %v467
    %v700 = vpack.c.b16 %v472, %v468
    %v701 = vpack.c.b16 %v473, %v469
    %v702 = vpack.c.b16 %v478, %v474
    %v703 = vpack.c.b16 %v479, %v475
    %v704 = vpack.c.b16 %v480, %v476
    %v705 = vpack.c.b16 %v481, %v477
    %v706 = vpack.c.b16 %v486, %v482
    %v707 = vpack.c.b16 %v487, %v483
    %v708 = vpack.c.b16 %v488, %v484
    %v709 = vpack.c.b16 %v489, %v485
    %v710 = vpack.c.b16 %v494, %v490
    %v711 = vpack.c.b16 %v495, %v491
    %v712 = vpack.c.b16 %v496, %v492
    %v713 = vpack.c.b16 %v497, %v493
    %v714 = vpack.c.b16 %v502, %v498
    %v715 = vpack.c.b16 %v503, %v499
    %v716 = vpack.c.b16 %v504, %v500
    %v717 = vpack.c.b16 %v505, %v501
    %v718 = vpack.c.b16 %v510, %v506
    %v719 = vpack.c.b16 %v511, %v507
    %v720 = vpack.c.b16 %v512, %v508
    %v721 = vpack.c.b16 %v513, %v509
    %v722 = vpack.c.b16 %v518, %v514
    %v723 = vpack.c.b16 %v519, %v515
    %v724 = vpack.c.b16 %v520, %v516
    %v725 = vpack.c.b16 %v521, %v517
    %v726 = vpack.c.b16 %v526, %v522
    %v727 = vpack.c.b16 %v527, %v523
    %v728 = vpack.c.b16 %v528, %v524
    %v729 = vpack.c.b16 %v529, %v525
    %v730 = vpack.c.b16 %v534, %v530
    %v731 = vpack.c.b16 %v535, %v531
    %v732 = vpack.c.b16 %v536, %v532
    %v733 = vpack.c.b16 %v537, %v533
    %v734 = vpack.c.b16 %v542, %v538
    %v735 = vpack.c.b16 %v543, %v539
    %v736 = vpack.c.b16 %v544, %v540
    %v737 = vpack.c.b16 %v545, %v541
    %v738 = vpack.c.b16 %v550, %v546
    %v739 = vpack.c.b16 %v551, %v547
    %v740 = vpack.c.b16 %v552, %v548
    %v741 = vpack.c.b16 %v553, %v549
    %v742 = vpack.c.b16 %v558, %v554
    %v743 = vpack.c.b16 %v559, %v555
    %v744 = vpack.c.b16 %v560, %v556
    %v745 = vpack.c.b16 %v561, %v557
    %v746 = vpack.c.b16 %v566, %v562
    %v747 = vpack.c.b16 %v567, %v563
    %v748 = vpack.c.b16 %v568, %v564
    %v749 = vpack.c.b16 %v569, %v565
    %v750 = vpack.c.b16 %v574, %v570
    %v751 = vpack.c.b16 %v575, %v571
    %v752 = vpack.c.b16 %v576, %v572
    %v753 = vpack.c.b16 %v577, %v573
    %v754 = vpack.c.b16 %v582, %v578
    %v755 = vpack.c.b16 %v583, %v579
    %v756 = vpack.c.b16 %v584, %v580
    %v757 = vpack.c.b16 %v585, %v581
    %v758 = vpack.c.b16 %v590, %v586
    %v759 = vpack.c.b16 %v591, %v587
    %v760 = vpack.c.b16 %v592, %v588
    %v761 = vpack.c.b16 %v593, %v589
    %v762 = vpack.c.b16 %v598, %v594
    %v763 = vpack.c.b16 %v599, %v595
    %v764 = vpack.c.b16 %v600, %v596
    %v765 = vpack.c.b16 %v601, %v597
    %v766 = vpack.c.b16 %v606, %v602
    %v767 = vpack.c.b16 %v607, %v603
    %v768 = vpack.c.b16 %v608, %v604
    %v769 = vpack.c.b16 %v609, %v605
    %v770 = vpack.c.b16 %v614, %v610
    %v771 = vpack.c.b16 %v615, %v611
    %v772 = vpack.c.b16 %v616, %v612
    %v773 = vpack.c.b16 %v617, %v613
    %v774 = vpack.c.b16 %v622, %v618
    %v775 = vpack.c.b16 %v623, %v619
    %v776 = vpack.c.b16 %v624, %v620
    %v777 = vpack.c.b16 %v625, %v621
    %v778 = vpack.c.b16 %v630, %v626
    %v779 = vpack.c.b16 %v631, %v627
    %v780 = vpack.c.b16 %v632, %v628
    %v781 = vpack.c.b16 %v633, %v629
    %v782 = vpack.c.b16 %v638, %v634
    %v783 = vpack.c.b16 %v639, %v635
    %v784 = vpack.c.b16 %v640, %v636
    %v785 = vpack.c.b16 %v641, %v637
    %v786 = vpack.c.b16 %v646, %v642
    %v787 = vpack.c.b16 %v647, %v643
    %v788 = vpack.c.b16 %v648, %v644
    %v789 = vpack.c.b16 %v649, %v645
    %v790 = vpack.c.b16 %v654, %v650
    %v791 = vpack.c.b16 %v655, %v651
    %v792 = vpack.c.b16 %v656, %v652
    %v793 = vpack.c.b16 %v657, %v653
    %v794 = vpack.c.b16 %v662, %v658
    %v795 = vpack.c.b16 %v663, %v659
    %v796 = vpack.c.b16 %v664, %v660
    %v797 = vpack.c.b16 %v665, %v661
    %v798 = vpack.c.b16 %v670, %v666
    %v799 = vpack.c.b16 %v671, %v667
    %v800 = vpack.c.b16 %v672, %v668
    %v801 = vpack.c.b16 %v673, %v669
    %930 = vmatpush.bf16.msra.mxu0 %v702
    %931 = vmatpush.bf16.msra.mxu0 %v698
    %932 = vmatpush.bf16.msra.mxu0 %v694
    %933 = vmatpush.bf16.msra.mxu0 %v690
    %934 = vmatpush.bf16.msra.mxu0 %v686
    %935 = vmatpush.bf16.msra.mxu0 %v682
    %936 = vmatpush.bf16.msra.mxu0 %v678
    %937 = vmatpush.bf16.msra.mxu0 %v674
    %938 = vmatmul.bf16.gmra.mxu0 %v282
    %v939 = vpop.f32.mrf.mxu0
    %v940 = vadd.f32 %v268, %v939
    %v941 = vpop.f32.mrf.mxu0
    %942 = vdwg.mxu0
    %943 = vmatpush.bf16.msra.mxu0 %v734
    %944 = vmatpush.bf16.msra.mxu0 %v730
    %945 = vmatpush.bf16.msra.mxu0 %v726
    %946 = vmatpush.bf16.msra.mxu0 %v722
    %947 = vmatpush.bf16.msra.mxu0 %v718
    %948 = vmatpush.bf16.msra.mxu0 %v714
    %949 = vmatpush.bf16.msra.mxu0 %v710
    %950 = vmatpush.bf16.msra.mxu0 %v706
    %951 = vmatmul.bf16.gmra.mxu0 %v283
    %v952 = vpop.f32.mrf.mxu0
    %v953 = vadd.f32 %v940, %v952
    %v954 = vpop.f32.mrf.mxu0
    %955 = vdwg.mxu0
    %956 = vmatpush.bf16.msra.mxu0 %v766
    %957 = vmatpush.bf16.msra.mxu0 %v762
    %958 = vmatpush.bf16.msra.mxu0 %v758
    %959 = vmatpush.bf16.msra.mxu0 %v754
    %960 = vmatpush.bf16.msra.mxu0 %v750
    %961 = vmatpush.bf16.msra.mxu0 %v746
    %962 = vmatpush.bf16.msra.mxu0 %v742
    %963 = vmatpush.bf16.msra.mxu0 %v738
    %964 = vmatmul.bf16.gmra.mxu0 %v284
    %v965 = vpop.f32.mrf.mxu0
    %v966 = vadd.f32 %v953, %v965
    %v967 = vpop.f32.mrf.mxu0
    %968 = vdwg.mxu0
    %969 = vmatpush.bf16.msra.mxu0 %v798
    %970 = vmatpush.bf16.msra.mxu0 %v794
    %971 = vmatpush.bf16.msra.mxu0 %v790
    %972 = vmatpush.bf16.msra.mxu0 %v786
    %973 = vmatpush.bf16.msra.mxu0 %v782
    %974 = vmatpush.bf16.msra.mxu0 %v778
    %975 = vmatpush.bf16.msra.mxu0 %v774
    %976 = vmatpush.bf16.msra.mxu0 %v770
    %977 = vmatmul.bf16.gmra.mxu0 %v285
    %v978 = vpop.f32.mrf.mxu0
    %v979 = vadd.f32 %v966, %v978
    %v980 = vpop.f32.mrf.mxu0
    %981 = vdwg.mxu0
    %982 = vmatpush.bf16.msra.mxu0 %v703
    %983 = vmatpush.bf16.msra.mxu0 %v699
    %984 = vmatpush.bf16.msra.mxu0 %v695
    %985 = vmatpush.bf16.msra.mxu0 %v691
    %986 = vmatpush.bf16.msra.mxu0 %v687
    %987 = vmatpush.bf16.msra.mxu0 %v683
    %988 = vmatpush.bf16.msra.mxu0 %v679
    %989 = vmatpush.bf16.msra.mxu0 %v675
    %990 = vmatmul.bf16.gmra.mxu0 %v282
    %v991 = vpop.f32.mrf.mxu0
    %v992 = vadd.f32 %v269, %v991
    %v993 = vpop.f32.mrf.mxu0
    %994 = vdwg.mxu0
    %995 = vmatpush.bf16.msra.mxu0 %v735
    %996 = vmatpush.bf16.msra.mxu0 %v731
    %997 = vmatpush.bf16.msra.mxu0 %v727
    %998 = vmatpush.bf16.msra.mxu0 %v723
    %999 = vmatpush.bf16.msra.mxu0 %v719
    %1000 = vmatpush.bf16.msra.mxu0 %v715
    %1001 = vmatpush.bf16.msra.mxu0 %v711
    %1002 = vmatpush.bf16.msra.mxu0 %v707
    %1003 = vmatmul.bf16.gmra.mxu0 %v283
    %v1004 = vpop.f32.mrf.mxu0
    %v1005 = vadd.f32 %v992, %v1004
    %v1006 = vpop.f32.mrf.mxu0
    %1007 = vdwg.mxu0
    %1008 = vmatpush.bf16.msra.mxu0 %v767
    %1009 = vmatpush.bf16.msra.mxu0 %v763
    %1010 = vmatpush.bf16.msra.mxu0 %v759
    %1011 = vmatpush.bf16.msra.mxu0 %v755
    %1012 = vmatpush.bf16.msra.mxu0 %v751
    %1013 = vmatpush.bf16.msra.mxu0 %v747
    %1014 = vmatpush.bf16.msra.mxu0 %v743
    %1015 = vmatpush.bf16.msra.mxu0 %v739
    %1016 = vmatmul.bf16.gmra.mxu0 %v284
    %v1017 = vpop.f32.mrf.mxu0
    %v1018 = vadd.f32 %v1005, %v1017
    %v1019 = vpop.f32.mrf.mxu0
    %1020 = vdwg.mxu0
    %1021 = vmatpush.bf16.msra.mxu0 %v799
    %1022 = vmatpush.bf16.msra.mxu0 %v795
    %1023 = vmatpush.bf16.msra.mxu0 %v791
    %1024 = vmatpush.bf16.msra.mxu0 %v787
    %1025 = vmatpush.bf16.msra.mxu0 %v783
    %1026 = vmatpush.bf16.msra.mxu0 %v779
    %1027 = vmatpush.bf16.msra.mxu0 %v775
    %1028 = vmatpush.bf16.msra.mxu0 %v771
    %1029 = vmatmul.bf16.gmra.mxu0 %v285
    %v1030 = vpop.f32.mrf.mxu0
    %v1031 = vadd.f32 %v1018, %v1030
    %v1032 = vpop.f32.mrf.mxu0
    %1033 = vdwg.mxu0
    %1034 = vmatpush.bf16.msra.mxu0 %v704
    %1035 = vmatpush.bf16.msra.mxu0 %v700
    %1036 = vmatpush.bf16.msra.mxu0 %v696
    %1037 = vmatpush.bf16.msra.mxu0 %v692
    %1038 = vmatpush.bf16.msra.mxu0 %v688
    %1039 = vmatpush.bf16.msra.mxu0 %v684
    %1040 = vmatpush.bf16.msra.mxu0 %v680
    %1041 = vmatpush.bf16.msra.mxu0 %v676
    %1042 = vmatmul.bf16.gmra.mxu0 %v282
    %v1043 = vpop.f32.mrf.mxu0
    %v1044 = vadd.f32 %v270, %v1043
    %v1045 = vpop.f32.mrf.mxu0
    %1046 = vdwg.mxu0
    %1047 = vmatpush.bf16.msra.mxu0 %v736
    %1048 = vmatpush.bf16.msra.mxu0 %v732
    %1049 = vmatpush.bf16.msra.mxu0 %v728
    %1050 = vmatpush.bf16.msra.mxu0 %v724
    %1051 = vmatpush.bf16.msra.mxu0 %v720
    %1052 = vmatpush.bf16.msra.mxu0 %v716
    %1053 = vmatpush.bf16.msra.mxu0 %v712
    %1054 = vmatpush.bf16.msra.mxu0 %v708
    %1055 = vmatmul.bf16.gmra.mxu0 %v283
    %v1056 = vpop.f32.mrf.mxu0
    %v1057 = vadd.f32 %v1044, %v1056
    %v1058 = vpop.f32.mrf.mxu0
    %1059 = vdwg.mxu0
    %1060 = vmatpush.bf16.msra.mxu0 %v768
    %1061 = vmatpush.bf16.msra.mxu0 %v764
    %1062 = vmatpush.bf16.msra.mxu0 %v760
    %1063 = vmatpush.bf16.msra.mxu0 %v756
    %1064 = vmatpush.bf16.msra.mxu0 %v752
    %1065 = vmatpush.bf16.msra.mxu0 %v748
    %1066 = vmatpush.bf16.msra.mxu0 %v744
    %1067 = vmatpush.bf16.msra.mxu0 %v740
    %1068 = vmatmul.bf16.gmra.mxu0 %v284
    %v1069 = vpop.f32.mrf.mxu0
    %v1070 = vadd.f32 %v1057, %v1069
    %v1071 = vpop.f32.mrf.mxu0
    %1072 = vdwg.mxu0
    %1073 = vmatpush.bf16.msra.mxu0 %v800
    %1074 = vmatpush.bf16.msra.mxu0 %v796
    %1075 = vmatpush.bf16.msra.mxu0 %v792
    %1076 = vmatpush.bf16.msra.mxu0 %v788
    %1077 = vmatpush.bf16.msra.mxu0 %v784
    %1078 = vmatpush.bf16.msra.mxu0 %v780
    %1079 = vmatpush.bf16.msra.mxu0 %v776
    %1080 = vmatpush.bf16.msra.mxu0 %v772
    %1081 = vmatmul.bf16.gmra.mxu0 %v285
    %v1082 = vpop.f32.mrf.mxu0
    %v1083 = vadd.f32 %v1070, %v1082
    %v1084 = vpop.f32.mrf.mxu0
    %1085 = vdwg.mxu0
    %1086 = vmatpush.bf16.msra.mxu0 %v705
    %1087 = vmatpush.bf16.msra.mxu0 %v701
    %1088 = vmatpush.bf16.msra.mxu0 %v697
    %1089 = vmatpush.bf16.msra.mxu0 %v693
    %1090 = vmatpush.bf16.msra.mxu0 %v689
    %1091 = vmatpush.bf16.msra.mxu0 %v685
    %1092 = vmatpush.bf16.msra.mxu0 %v681
    %1093 = vmatpush.bf16.msra.mxu0 %v677
    %1094 = vmatmul.bf16.gmra.mxu0 %v282
    %v1095 = vpop.f32.mrf.mxu0
    %v1096 = vadd.f32 %v271, %v1095
    %v1097 = vpop.f32.mrf.mxu0
    %1098 = vdwg.mxu0
    %1099 = vmatpush.bf16.msra.mxu0 %v737
    %1100 = vmatpush.bf16.msra.mxu0 %v733
    %1101 = vmatpush.bf16.msra.mxu0 %v729
    %1102 = vmatpush.bf16.msra.mxu0 %v725
    %1103 = vmatpush.bf16.msra.mxu0 %v721
    %1104 = vmatpush.bf16.msra.mxu0 %v717
    %1105 = vmatpush.bf16.msra.mxu0 %v713
    %1106 = vmatpush.bf16.msra.mxu0 %v709
    %1107 = vmatmul.bf16.gmra.mxu0 %v283
    %v1108 = vpop.f32.mrf.mxu0
    %v1109 = vadd.f32 %v1096, %v1108
    %v1110 = vpop.f32.mrf.mxu0
    %1111 = vdwg.mxu0
    %1112 = vmatpush.bf16.msra.mxu0 %v769
    %1113 = vmatpush.bf16.msra.mxu0 %v765
    %1114 = vmatpush.bf16.msra.mxu0 %v761
    %1115 = vmatpush.bf16.msra.mxu0 %v757
    %1116 = vmatpush.bf16.msra.mxu0 %v753
    %1117 = vmatpush.bf16.msra.mxu0 %v749
    %1118 = vmatpush.bf16.msra.mxu0 %v745
    %1119 = vmatpush.bf16.msra.mxu0 %v741
    %1120 = vmatmul.bf16.gmra.mxu0 %v284
    %v1121 = vpop.f32.mrf.mxu0
    %v1122 = vadd.f32 %v1109, %v1121
    %v1123 = vpop.f32.mrf.mxu0
    %1124 = vdwg.mxu0
    %1125 = vmatpush.bf16.msra.mxu0 %v801
    %1126 = vmatpush.bf16.msra.mxu0 %v797
    %1127 = vmatpush.bf16.msra.mxu0 %v793
    %1128 = vmatpush.bf16.msra.mxu0 %v789
    %1129 = vmatpush.bf16.msra.mxu0 %v785
    %1130 = vmatpush.bf16.msra.mxu0 %v781
    %1131 = vmatpush.bf16.msra.mxu0 %v777
    %1132 = vmatpush.bf16.msra.mxu0 %v773
    %1133 = vmatmul.bf16.gmra.mxu0 %v285
    %v1134 = vpop.f32.mrf.mxu0
    %v1135 = vadd.f32 %v1122, %v1134
    %v1136 = vpop.f32.mrf.mxu0
    %1137 = vdwg.mxu0
    %v1138 = vmax.f32 %v979, 0.0
    %v1139 = vmax.f32 %v1031, 0.0
    %v1140 = vmax.f32 %v1083, 0.0
    %v1141 = vmax.f32 %v1135, 0.0
    %v1142 = vpack.c.bf16 %v1138, %v1138
    %v1143 = vpack.c.bf16 %v1139, %v1139
    %v1144 = vpack.c.bf16 %v1140, %v1140
    %v1145 = vpack.c.bf16 %v1141, %v1141
    %v1146 = vld [vmem:[#allocation8] sm:$0xff]
    %v1147 = vld [vmem:[#allocation8 + $0x8] sm:$0xff]
    %v1148 = vld [vmem:[#allocation8 + $0x10] sm:$0xff]
    %v1149 = vld [vmem:[#allocation8 + $0x18] sm:$0xff]
    %v1150 = vld [vmem:[#allocation8 + $0x20] sm:$0xff]
    %v1151 = vld [vmem:[#allocation8 + $0x28] sm:$0xff]
    %v1152 = vld [vmem:[#allocation8 + $0x30] sm:$0xff]
    %v1153 = vld [vmem:[#allocation8 + $0x38] sm:$0xff]
    %v1154 = vld [vmem:[#allocation8 + $0x40] sm:$0xff]
    %v1155 = vld [vmem:[#allocation8 + $0x48] sm:$0xff]
    %v1156 = vld [vmem:[#allocation8 + $0x50] sm:$0xff]
    %v1157 = vld [vmem:[#allocation8 + $0x58] sm:$0xff]
    %v1158 = vld [vmem:[#allocation8 + $0x60] sm:$0xff]
    %v1159 = vld [vmem:[#allocation8 + $0x68] sm:$0xff]
    %v1160 = vld [vmem:[#allocation8 + $0x70] sm:$0xff]
    %v1161 = vld [vmem:[#allocation8 + $0x78] sm:$0xff]
    %v1162 = vld [vmem:[#allocation8 + $0x80] sm:$0xff]
    %v1163 = vld [vmem:[#allocation8 + $0x88] sm:$0xff]
    %v1164 = vld [vmem:[#allocation8 + $0x90] sm:$0xff]
    %v1165 = vld [vmem:[#allocation8 + $0x98] sm:$0xff]
    %v1166 = vld [vmem:[#allocation8 + $0xa0] sm:$0xff]
    %v1167 = vld [vmem:[#allocation8 + $0xa8] sm:$0xff]
    %v1168 = vld [vmem:[#allocation8 + $0xb0] sm:$0xff]
    %v1169 = vld [vmem:[#allocation8 + $0xb8] sm:$0xff]
    %v1170 = vld [vmem:[#allocation8 + $0xc0] sm:$0xff]
    %v1171 = vld [vmem:[#allocation8 + $0xc8] sm:$0xff]
    %v1172 = vld [vmem:[#allocation8 + $0xd0] sm:$0xff]
    %v1173 = vld [vmem:[#allocation8 + $0xd8] sm:$0xff]
    %v1174 = vld [vmem:[#allocation8 + $0xe0] sm:$0xff]
    %v1175 = vld [vmem:[#allocation8 + $0xe8] sm:$0xff]
    %v1176 = vld [vmem:[#allocation8 + $0xf0] sm:$0xff]
    %v1177 = vld [vmem:[#allocation8 + $0xf8] sm:$0xff]
    %v1178 = vld [vmem:[#allocation8 + $0x100] sm:$0xff]
    %v1179 = vld [vmem:[#allocation8 + $0x108] sm:$0xff]
    %v1180 = vld [vmem:[#allocation8 + $0x110] sm:$0xff]
    %v1181 = vld [vmem:[#allocation8 + $0x118] sm:$0xff]
    %v1182 = vld [vmem:[#allocation8 + $0x120] sm:$0xff]
    %v1183 = vld [vmem:[#allocation8 + $0x128] sm:$0xff]
    %v1184 = vld [vmem:[#allocation8 + $0x130] sm:$0xff]
    %v1185 = vld [vmem:[#allocation8 + $0x138] sm:$0xff]
    %v1186 = vld [vmem:[#allocation8 + $0x140] sm:$0xff]
    %v1187 = vld [vmem:[#allocation8 + $0x148] sm:$0xff]
    %v1188 = vld [vmem:[#allocation8 + $0x150] sm:$0xff]
    %v1189 = vld [vmem:[#allocation8 + $0x158] sm:$0xff]
    %v1190 = vld [vmem:[#allocation8 + $0x160] sm:$0xff]
    %v1191 = vld [vmem:[#allocation8 + $0x168] sm:$0xff]
    %v1192 = vld [vmem:[#allocation8 + $0x170] sm:$0xff]
    %v1193 = vld [vmem:[#allocation8 + $0x178] sm:$0xff]
    %v1194 = vld [vmem:[#allocation8 + $0x180] sm:$0xff]
    %v1195 = vld [vmem:[#allocation8 + $0x188] sm:$0xff]
    %v1196 = vld [vmem:[#allocation8 + $0x190] sm:$0xff]
    %v1197 = vld [vmem:[#allocation8 + $0x198] sm:$0xff]
    %v1198 = vld [vmem:[#allocation8 + $0x1a0] sm:$0xff]
    %v1199 = vld [vmem:[#allocation8 + $0x1a8] sm:$0xff]
    %v1200 = vld [vmem:[#allocation8 + $0x1b0] sm:$0xff]
    %v1201 = vld [vmem:[#allocation8 + $0x1b8] sm:$0xff]
    %v1202 = vld [vmem:[#allocation8 + $0x1c0] sm:$0xff]
    %v1203 = vld [vmem:[#allocation8 + $0x1c8] sm:$0xff]
    %v1204 = vld [vmem:[#allocation8 + $0x1d0] sm:$0xff]
    %v1205 = vld [vmem:[#allocation8 + $0x1d8] sm:$0xff]
    %v1206 = vld [vmem:[#allocation8 + $0x1e0] sm:$0xff]
    %v1207 = vld [vmem:[#allocation8 + $0x1e8] sm:$0xff]
    %v1208 = vld [vmem:[#allocation8 + $0x1f0] sm:$0xff]
    %v1209 = vld [vmem:[#allocation8 + $0x1f8] sm:$0xff]
    %v1210 = vld [vmem:[#allocation8 + $0x200] sm:$0xff]
    %v1211 = vld [vmem:[#allocation8 + $0x208] sm:$0xff]
    %v1212 = vld [vmem:[#allocation8 + $0x210] sm:$0xff]
    %v1213 = vld [vmem:[#allocation8 + $0x218] sm:$0xff]
    %v1214 = vld [vmem:[#allocation8 + $0x220] sm:$0xff]
    %v1215 = vld [vmem:[#allocation8 + $0x228] sm:$0xff]
    %v1216 = vld [vmem:[#allocation8 + $0x230] sm:$0xff]
    %v1217 = vld [vmem:[#allocation8 + $0x238] sm:$0xff]
    %v1218 = vld [vmem:[#allocation8 + $0x240] sm:$0xff]
    %v1219 = vld [vmem:[#allocation8 + $0x248] sm:$0xff]
    %v1220 = vld [vmem:[#allocation8 + $0x250] sm:$0xff]
    %v1221 = vld [vmem:[#allocation8 + $0x258] sm:$0xff]
    %v1222 = vld [vmem:[#allocation8 + $0x260] sm:$0xff]
    %v1223 = vld [vmem:[#allocation8 + $0x268] sm:$0xff]
    %v1224 = vld [vmem:[#allocation8 + $0x270] sm:$0xff]
    %v1225 = vld [vmem:[#allocation8 + $0x278] sm:$0xff]
    %v1226 = vld [vmem:[#allocation8 + $0x280] sm:$0xff]
    %v1227 = vld [vmem:[#allocation8 + $0x288] sm:$0xff]
    %v1228 = vld [vmem:[#allocation8 + $0x290] sm:$0xff]
    %v1229 = vld [vmem:[#allocation8 + $0x298] sm:$0xff]
    %v1230 = vld [vmem:[#allocation8 + $0x2a0] sm:$0xff]
    %v1231 = vld [vmem:[#allocation8 + $0x2a8] sm:$0xff]
    %v1232 = vld [vmem:[#allocation8 + $0x2b0] sm:$0xff]
    %v1233 = vld [vmem:[#allocation8 + $0x2b8] sm:$0xff]
    %v1234 = vld [vmem:[#allocation8 + $0x2c0] sm:$0xff]
    %v1235 = vld [vmem:[#allocation8 + $0x2c8] sm:$0xff]
    %v1236 = vld [vmem:[#allocation8 + $0x2d0] sm:$0xff]
    %v1237 = vld [vmem:[#allocation8 + $0x2d8] sm:$0xff]
    %v1238 = vld [vmem:[#allocation8 + $0x2e0] sm:$0xff]
    %v1239 = vld [vmem:[#allocation8 + $0x2e8] sm:$0xff]
    %v1240 = vld [vmem:[#allocation8 + $0x2f0] sm:$0xff]
    %v1241 = vld [vmem:[#allocation8 + $0x2f8] sm:$0xff]
    %v1242 = vld [vmem:[#allocation8 + $0x300] sm:$0xff]
    %v1243 = vld [vmem:[#allocation8 + $0x308] sm:$0xff]
    %v1244 = vld [vmem:[#allocation8 + $0x310] sm:$0xff]
    %v1245 = vld [vmem:[#allocation8 + $0x318] sm:$0xff]
    %v1246 = vld [vmem:[#allocation8 + $0x320] sm:$0xff]
    %v1247 = vld [vmem:[#allocation8 + $0x328] sm:$0xff]
    %v1248 = vld [vmem:[#allocation8 + $0x330] sm:$0xff]
    %v1249 = vld [vmem:[#allocation8 + $0x338] sm:$0xff]
    %v1250 = vld [vmem:[#allocation8 + $0x340] sm:$0xff]
    %v1251 = vld [vmem:[#allocation8 + $0x348] sm:$0xff]
    %v1252 = vld [vmem:[#allocation8 + $0x350] sm:$0xff]
    %v1253 = vld [vmem:[#allocation8 + $0x358] sm:$0xff]
    %v1254 = vld [vmem:[#allocation8 + $0x360] sm:$0xff]
    %v1255 = vld [vmem:[#allocation8 + $0x368] sm:$0xff]
    %v1256 = vld [vmem:[#allocation8 + $0x370] sm:$0xff]
    %v1257 = vld [vmem:[#allocation8 + $0x378] sm:$0xff]
    %v1258 = vld [vmem:[#allocation8 + $0x380] sm:$0xff]
    %v1259 = vld [vmem:[#allocation8 + $0x388] sm:$0xff]
    %v1260 = vld [vmem:[#allocation8 + $0x390] sm:$0xff]
    %v1261 = vld [vmem:[#allocation8 + $0x398] sm:$0xff]
    %v1262 = vld [vmem:[#allocation8 + $0x3a0] sm:$0xff]
    %v1263 = vld [vmem:[#allocation8 + $0x3a8] sm:$0xff]
    %v1264 = vld [vmem:[#allocation8 + $0x3b0] sm:$0xff]
    %v1265 = vld [vmem:[#allocation8 + $0x3b8] sm:$0xff]
    %v1266 = vld [vmem:[#allocation8 + $0x3c0] sm:$0xff]
    %v1267 = vld [vmem:[#allocation8 + $0x3c8] sm:$0xff]
    %v1268 = vld [vmem:[#allocation8 + $0x3d0] sm:$0xff]
    %v1269 = vld [vmem:[#allocation8 + $0x3d8] sm:$0xff]
    %v1270 = vld [vmem:[#allocation8 + $0x3e0] sm:$0xff]
    %v1271 = vld [vmem:[#allocation8 + $0x3e8] sm:$0xff]
    %v1272 = vld [vmem:[#allocation8 + $0x3f0] sm:$0xff]
    %v1273 = vld [vmem:[#allocation8 + $0x3f8] sm:$0xff]
    %v1274 = vld [vmem:[#allocation10] sm:$0xf]
    %v1276 = vperm.slane %v1274, 0
    %v1277 = vperm.slane %v1274, 1
    %v1278 = vperm.slane %v1274, 2
    %v1279 = vperm.slane %v1274, 3
    %v1412 = vunpack.c.l.b16 %v1146
    %v1413 = vunpack.c.h.b16 %v1146
    %v1414 = vunpack.c.l.b16 %v1147
    %v1415 = vunpack.c.h.b16 %v1147
    %v1416 = vunpack.c.l.b16 %v1148
    %v1417 = vunpack.c.h.b16 %v1148
    %v1418 = vunpack.c.l.b16 %v1149
    %v1419 = vunpack.c.h.b16 %v1149
    %v1420 = vunpack.c.l.b16 %v1150
    %v1421 = vunpack.c.h.b16 %v1150
    %v1422 = vunpack.c.l.b16 %v1151
    %v1423 = vunpack.c.h.b16 %v1151
    %v1424 = vunpack.c.l.b16 %v1152
    %v1425 = vunpack.c.h.b16 %v1152
    %v1426 = vunpack.c.l.b16 %v1153
    %v1427 = vunpack.c.h.b16 %v1153
    %v1428 = vunpack.c.l.b16 %v1154
    %v1429 = vunpack.c.h.b16 %v1154
    %v1430 = vunpack.c.l.b16 %v1155
    %v1431 = vunpack.c.h.b16 %v1155
    %v1432 = vunpack.c.l.b16 %v1156
    %v1433 = vunpack.c.h.b16 %v1156
    %v1434 = vunpack.c.l.b16 %v1157
    %v1435 = vunpack.c.h.b16 %v1157
    %v1436 = vunpack.c.l.b16 %v1158
    %v1437 = vunpack.c.h.b16 %v1158
    %v1438 = vunpack.c.l.b16 %v1159
    %v1439 = vunpack.c.h.b16 %v1159
    %v1440 = vunpack.c.l.b16 %v1160
    %v1441 = vunpack.c.h.b16 %v1160
    %v1442 = vunpack.c.l.b16 %v1161
    %v1443 = vunpack.c.h.b16 %v1161
    %v1444 = vunpack.c.l.b16 %v1162
    %v1445 = vunpack.c.h.b16 %v1162
    %v1446 = vunpack.c.l.b16 %v1163
    %v1447 = vunpack.c.h.b16 %v1163
    %v1448 = vunpack.c.l.b16 %v1164
    %v1449 = vunpack.c.h.b16 %v1164
    %v1450 = vunpack.c.l.b16 %v1165
    %v1451 = vunpack.c.h.b16 %v1165
    %v1452 = vunpack.c.l.b16 %v1166
    %v1453 = vunpack.c.h.b16 %v1166
    %v1454 = vunpack.c.l.b16 %v1167
    %v1455 = vunpack.c.h.b16 %v1167
    %v1456 = vunpack.c.l.b16 %v1168
    %v1457 = vunpack.c.h.b16 %v1168
    %v1458 = vunpack.c.l.b16 %v1169
    %v1459 = vunpack.c.h.b16 %v1169
    %v1460 = vunpack.c.l.b16 %v1170
    %v1461 = vunpack.c.h.b16 %v1170
    %v1462 = vunpack.c.l.b16 %v1171
    %v1463 = vunpack.c.h.b16 %v1171
    %v1464 = vunpack.c.l.b16 %v1172
    %v1465 = vunpack.c.h.b16 %v1172
    %v1466 = vunpack.c.l.b16 %v1173
    %v1467 = vunpack.c.h.b16 %v1173
    %v1468 = vunpack.c.l.b16 %v1174
    %v1469 = vunpack.c.h.b16 %v1174
    %v1470 = vunpack.c.l.b16 %v1175
    %v1471 = vunpack.c.h.b16 %v1175
    %v1472 = vunpack.c.l.b16 %v1176
    %v1473 = vunpack.c.h.b16 %v1176
    %v1474 = vunpack.c.l.b16 %v1177
    %v1475 = vunpack.c.h.b16 %v1177
    %v1476 = vunpack.c.l.b16 %v1178
    %v1477 = vunpack.c.h.b16 %v1178
    %v1478 = vunpack.c.l.b16 %v1179
    %v1479 = vunpack.c.h.b16 %v1179
    %v1480 = vunpack.c.l.b16 %v1180
    %v1481 = vunpack.c.h.b16 %v1180
    %v1482 = vunpack.c.l.b16 %v1181
    %v1483 = vunpack.c.h.b16 %v1181
    %v1484 = vunpack.c.l.b16 %v1182
    %v1485 = vunpack.c.h.b16 %v1182
    %v1486 = vunpack.c.l.b16 %v1183
    %v1487 = vunpack.c.h.b16 %v1183
    %v1488 = vunpack.c.l.b16 %v1184
    %v1489 = vunpack.c.h.b16 %v1184
    %v1490 = vunpack.c.l.b16 %v1185
    %v1491 = vunpack.c.h.b16 %v1185
    %v1492 = vunpack.c.l.b16 %v1186
    %v1493 = vunpack.c.h.b16 %v1186
    %v1494 = vunpack.c.l.b16 %v1187
    %v1495 = vunpack.c.h.b16 %v1187
    %v1496 = vunpack.c.l.b16 %v1188
    %v1497 = vunpack.c.h.b16 %v1188
    %v1498 = vunpack.c.l.b16 %v1189
    %v1499 = vunpack.c.h.b16 %v1189
    %v1500 = vunpack.c.l.b16 %v1190
    %v1501 = vunpack.c.h.b16 %v1190
    %v1502 = vunpack.c.l.b16 %v1191
    %v1503 = vunpack.c.h.b16 %v1191
    %v1504 = vunpack.c.l.b16 %v1192
    %v1505 = vunpack.c.h.b16 %v1192
    %v1506 = vunpack.c.l.b16 %v1193
    %v1507 = vunpack.c.h.b16 %v1193
    %v1508 = vunpack.c.l.b16 %v1194
    %v1509 = vunpack.c.h.b16 %v1194
    %v1510 = vunpack.c.l.b16 %v1195
    %v1511 = vunpack.c.h.b16 %v1195
    %v1512 = vunpack.c.l.b16 %v1196
    %v1513 = vunpack.c.h.b16 %v1196
    %v1514 = vunpack.c.l.b16 %v1197
    %v1515 = vunpack.c.h.b16 %v1197
    %v1516 = vunpack.c.l.b16 %v1198
    %v1517 = vunpack.c.h.b16 %v1198
    %v1518 = vunpack.c.l.b16 %v1199
    %v1519 = vunpack.c.h.b16 %v1199
    %v1520 = vunpack.c.l.b16 %v1200
    %v1521 = vunpack.c.h.b16 %v1200
    %v1522 = vunpack.c.l.b16 %v1201
    %v1523 = vunpack.c.h.b16 %v1201
    %v1524 = vunpack.c.l.b16 %v1202
    %v1525 = vunpack.c.h.b16 %v1202
    %v1526 = vunpack.c.l.b16 %v1203
    %v1527 = vunpack.c.h.b16 %v1203
    %v1528 = vunpack.c.l.b16 %v1204
    %v1529 = vunpack.c.h.b16 %v1204
    %v1530 = vunpack.c.l.b16 %v1205
    %v1531 = vunpack.c.h.b16 %v1205
    %v1532 = vunpack.c.l.b16 %v1206
    %v1533 = vunpack.c.h.b16 %v1206
    %v1534 = vunpack.c.l.b16 %v1207
    %v1535 = vunpack.c.h.b16 %v1207
    %v1536 = vunpack.c.l.b16 %v1208
    %v1537 = vunpack.c.h.b16 %v1208
    %v1538 = vunpack.c.l.b16 %v1209
    %v1539 = vunpack.c.h.b16 %v1209
    %v1540 = vunpack.c.l.b16 %v1210
    %v1541 = vunpack.c.h.b16 %v1210
    %v1542 = vunpack.c.l.b16 %v1211
    %v1543 = vunpack.c.h.b16 %v1211
    %v1544 = vunpack.c.l.b16 %v1212
    %v1545 = vunpack.c.h.b16 %v1212
    %v1546 = vunpack.c.l.b16 %v1213
    %v1547 = vunpack.c.h.b16 %v1213
    %v1548 = vunpack.c.l.b16 %v1214
    %v1549 = vunpack.c.h.b16 %v1214
    %v1550 = vunpack.c.l.b16 %v1215
    %v1551 = vunpack.c.h.b16 %v1215
    %v1552 = vunpack.c.l.b16 %v1216
    %v1553 = vunpack.c.h.b16 %v1216
    %v1554 = vunpack.c.l.b16 %v1217
    %v1555 = vunpack.c.h.b16 %v1217
    %v1556 = vunpack.c.l.b16 %v1218
    %v1557 = vunpack.c.h.b16 %v1218
    %v1558 = vunpack.c.l.b16 %v1219
    %v1559 = vunpack.c.h.b16 %v1219
    %v1560 = vunpack.c.l.b16 %v1220
    %v1561 = vunpack.c.h.b16 %v1220
    %v1562 = vunpack.c.l.b16 %v1221
    %v1563 = vunpack.c.h.b16 %v1221
    %v1564 = vunpack.c.l.b16 %v1222
    %v1565 = vunpack.c.h.b16 %v1222
    %v1566 = vunpack.c.l.b16 %v1223
    %v1567 = vunpack.c.h.b16 %v1223
    %v1568 = vunpack.c.l.b16 %v1224
    %v1569 = vunpack.c.h.b16 %v1224
    %v1570 = vunpack.c.l.b16 %v1225
    %v1571 = vunpack.c.h.b16 %v1225
    %v1572 = vunpack.c.l.b16 %v1226
    %v1573 = vunpack.c.h.b16 %v1226
    %v1574 = vunpack.c.l.b16 %v1227
    %v1575 = vunpack.c.h.b16 %v1227
    %v1576 = vunpack.c.l.b16 %v1228
    %v1577 = vunpack.c.h.b16 %v1228
    %v1578 = vunpack.c.l.b16 %v1229
    %v1579 = vunpack.c.h.b16 %v1229
    %v1580 = vunpack.c.l.b16 %v1230
    %v1581 = vunpack.c.h.b16 %v1230
    %v1582 = vunpack.c.l.b16 %v1231
    %v1583 = vunpack.c.h.b16 %v1231
    %v1584 = vunpack.c.l.b16 %v1232
    %v1585 = vunpack.c.h.b16 %v1232
    %v1586 = vunpack.c.l.b16 %v1233
    %v1587 = vunpack.c.h.b16 %v1233
    %v1588 = vunpack.c.l.b16 %v1234
    %v1589 = vunpack.c.h.b16 %v1234
    %v1590 = vunpack.c.l.b16 %v1235
    %v1591 = vunpack.c.h.b16 %v1235
    %v1592 = vunpack.c.l.b16 %v1236
    %v1593 = vunpack.c.h.b16 %v1236
    %v1594 = vunpack.c.l.b16 %v1237
    %v1595 = vunpack.c.h.b16 %v1237
    %v1596 = vunpack.c.l.b16 %v1238
    %v1597 = vunpack.c.h.b16 %v1238
    %v1598 = vunpack.c.l.b16 %v1239
    %v1599 = vunpack.c.h.b16 %v1239
    %v1600 = vunpack.c.l.b16 %v1240
    %v1601 = vunpack.c.h.b16 %v1240
    %v1602 = vunpack.c.l.b16 %v1241
    %v1603 = vunpack.c.h.b16 %v1241
    %v1604 = vunpack.c.l.b16 %v1242
    %v1605 = vunpack.c.h.b16 %v1242
    %v1606 = vunpack.c.l.b16 %v1243
    %v1607 = vunpack.c.h.b16 %v1243
    %v1608 = vunpack.c.l.b16 %v1244
    %v1609 = vunpack.c.h.b16 %v1244
    %v1610 = vunpack.c.l.b16 %v1245
    %v1611 = vunpack.c.h.b16 %v1245
    %v1612 = vunpack.c.l.b16 %v1246
    %v1613 = vunpack.c.h.b16 %v1246
    %v1614 = vunpack.c.l.b16 %v1247
    %v1615 = vunpack.c.h.b16 %v1247
    %v1616 = vunpack.c.l.b16 %v1248
    %v1617 = vunpack.c.h.b16 %v1248
    %v1618 = vunpack.c.l.b16 %v1249
    %v1619 = vunpack.c.h.b16 %v1249
    %v1620 = vunpack.c.l.b16 %v1250
    %v1621 = vunpack.c.h.b16 %v1250
    %v1622 = vunpack.c.l.b16 %v1251
    %v1623 = vunpack.c.h.b16 %v1251
    %v1624 = vunpack.c.l.b16 %v1252
    %v1625 = vunpack.c.h.b16 %v1252
    %v1626 = vunpack.c.l.b16 %v1253
    %v1627 = vunpack.c.h.b16 %v1253
    %v1628 = vunpack.c.l.b16 %v1254
    %v1629 = vunpack.c.h.b16 %v1254
    %v1630 = vunpack.c.l.b16 %v1255
    %v1631 = vunpack.c.h.b16 %v1255
    %v1632 = vunpack.c.l.b16 %v1256
    %v1633 = vunpack.c.h.b16 %v1256
    %v1634 = vunpack.c.l.b16 %v1257
    %v1635 = vunpack.c.h.b16 %v1257
    %v1636 = vunpack.c.l.b16 %v1258
    %v1637 = vunpack.c.h.b16 %v1258
    %v1638 = vunpack.c.l.b16 %v1259
    %v1639 = vunpack.c.h.b16 %v1259
    %v1640 = vunpack.c.l.b16 %v1260
    %v1641 = vunpack.c.h.b16 %v1260
    %v1642 = vunpack.c.l.b16 %v1261
    %v1643 = vunpack.c.h.b16 %v1261
    %v1644 = vunpack.c.l.b16 %v1262
    %v1645 = vunpack.c.h.b16 %v1262
    %v1646 = vunpack.c.l.b16 %v1263
    %v1647 = vunpack.c.h.b16 %v1263
    %v1648 = vunpack.c.l.b16 %v1264
    %v1649 = vunpack.c.h.b16 %v1264
    %v1650 = vunpack.c.l.b16 %v1265
    %v1651 = vunpack.c.h.b16 %v1265
    %v1652 = vunpack.c.l.b16 %v1266
    %v1653 = vunpack.c.h.b16 %v1266
    %v1654 = vunpack.c.l.b16 %v1267
    %v1655 = vunpack.c.h.b16 %v1267
    %v1656 = vunpack.c.l.b16 %v1268
    %v1657 = vunpack.c.h.b16 %v1268
    %v1658 = vunpack.c.l.b16 %v1269
    %v1659 = vunpack.c.h.b16 %v1269
    %v1660 = vunpack.c.l.b16 %v1270
    %v1661 = vunpack.c.h.b16 %v1270
    %v1662 = vunpack.c.l.b16 %v1271
    %v1663 = vunpack.c.h.b16 %v1271
    %v1664 = vunpack.c.l.b16 %v1272
    %v1665 = vunpack.c.h.b16 %v1272
    %v1666 = vunpack.c.l.b16 %v1273
    %v1667 = vunpack.c.h.b16 %v1273
    %v1668 = vpack.c.b16 %v1416, %v1412
    %v1669 = vpack.c.b16 %v1417, %v1413
    %v1670 = vpack.c.b16 %v1418, %v1414
    %v1671 = vpack.c.b16 %v1419, %v1415
    %v1672 = vpack.c.b16 %v1424, %v1420
    %v1673 = vpack.c.b16 %v1425, %v1421
    %v1674 = vpack.c.b16 %v1426, %v1422
    %v1675 = vpack.c.b16 %v1427, %v1423
    %v1676 = vpack.c.b16 %v1432, %v1428
    %v1677 = vpack.c.b16 %v1433, %v1429
    %v1678 = vpack.c.b16 %v1434, %v1430
    %v1679 = vpack.c.b16 %v1435, %v1431
    %v1680 = vpack.c.b16 %v1440, %v1436
    %v1681 = vpack.c.b16 %v1441, %v1437
    %v1682 = vpack.c.b16 %v1442, %v1438
    %v1683 = vpack.c.b16 %v1443, %v1439
    %v1684 = vpack.c.b16 %v1448, %v1444
    %v1685 = vpack.c.b16 %v1449, %v1445
    %v1686 = vpack.c.b16 %v1450, %v1446
    %v1687 = vpack.c.b16 %v1451, %v1447
    %v1688 = vpack.c.b16 %v1456, %v1452
    %v1689 = vpack.c.b16 %v1457, %v1453
    %v1690 = vpack.c.b16 %v1458, %v1454
    %v1691 = vpack.c.b16 %v1459, %v1455
    %v1692 = vpack.c.b16 %v1464, %v1460
    %v1693 = vpack.c.b16 %v1465, %v1461
    %v1694 = vpack.c.b16 %v1466, %v1462
    %v1695 = vpack.c.b16 %v1467, %v1463
    %v1696 = vpack.c.b16 %v1472, %v1468
    %v1697 = vpack.c.b16 %v1473, %v1469
    %v1698 = vpack.c.b16 %v1474, %v1470
    %v1699 = vpack.c.b16 %v1475, %v1471
    %v1700 = vpack.c.b16 %v1480, %v1476
    %v1701 = vpack.c.b16 %v1481, %v1477
    %v1702 = vpack.c.b16 %v1482, %v1478
    %v1703 = vpack.c.b16 %v1483, %v1479
    %v1704 = vpack.c.b16 %v1488, %v1484
    %v1705 = vpack.c.b16 %v1489, %v1485
    %v1706 = vpack.c.b16 %v1490, %v1486
    %v1707 = vpack.c.b16 %v1491, %v1487
    %v1708 = vpack.c.b16 %v1496, %v1492
    %v1709 = vpack.c.b16 %v1497, %v1493
    %v1710 = vpack.c.b16 %v1498, %v1494
    %v1711 = vpack.c.b16 %v1499, %v1495
    %v1712 = vpack.c.b16 %v1504, %v1500
    %v1713 = vpack.c.b16 %v1505, %v1501
    %v1714 = vpack.c.b16 %v1506, %v1502
    %v1715 = vpack.c.b16 %v1507, %v1503
    %v1716 = vpack.c.b16 %v1512, %v1508
    %v1717 = vpack.c.b16 %v1513, %v1509
    %v1718 = vpack.c.b16 %v1514, %v1510
    %v1719 = vpack.c.b16 %v1515, %v1511
    %v1720 = vpack.c.b16 %v1520, %v1516
    %v1721 = vpack.c.b16 %v1521, %v1517
    %v1722 = vpack.c.b16 %v1522, %v1518
    %v1723 = vpack.c.b16 %v1523, %v1519
    %v1724 = vpack.c.b16 %v1528, %v1524
    %v1725 = vpack.c.b16 %v1529, %v1525
    %v1726 = vpack.c.b16 %v1530, %v1526
    %v1727 = vpack.c.b16 %v1531, %v1527
    %v1728 = vpack.c.b16 %v1536, %v1532
    %v1729 = vpack.c.b16 %v1537, %v1533
    %v1730 = vpack.c.b16 %v1538, %v1534
    %v1731 = vpack.c.b16 %v1539, %v1535
    %v1732 = vpack.c.b16 %v1544, %v1540
    %v1733 = vpack.c.b16 %v1545, %v1541
    %v1734 = vpack.c.b16 %v1546, %v1542
    %v1735 = vpack.c.b16 %v1547, %v1543
    %v1736 = vpack.c.b16 %v1552, %v1548
    %v1737 = vpack.c.b16 %v1553, %v1549
    %v1738 = vpack.c.b16 %v1554, %v1550
    %v1739 = vpack.c.b16 %v1555, %v1551
    %v1740 = vpack.c.b16 %v1560, %v1556
    %v1741 = vpack.c.b16 %v1561, %v1557
    %v1742 = vpack.c.b16 %v1562, %v1558
    %v1743 = vpack.c.b16 %v1563, %v1559
    %v1744 = vpack.c.b16 %v1568, %v1564
    %v1745 = vpack.c.b16 %v1569, %v1565
    %v1746 = vpack.c.b16 %v1570, %v1566
    %v1747 = vpack.c.b16 %v1571, %v1567
    %v1748 = vpack.c.b16 %v1576, %v1572
    %v1749 = vpack.c.b16 %v1577, %v1573
    %v1750 = vpack.c.b16 %v1578, %v1574
    %v1751 = vpack.c.b16 %v1579, %v1575
    %v1752 = vpack.c.b16 %v1584, %v1580
    %v1753 = vpack.c.b16 %v1585, %v1581
    %v1754 = vpack.c.b16 %v1586, %v1582
    %v1755 = vpack.c.b16 %v1587, %v1583
    %v1756 = vpack.c.b16 %v1592, %v1588
    %v1757 = vpack.c.b16 %v1593, %v1589
    %v1758 = vpack.c.b16 %v1594, %v1590
    %v1759 = vpack.c.b16 %v1595, %v1591
    %v1760 = vpack.c.b16 %v1600, %v1596
    %v1761 = vpack.c.b16 %v1601, %v1597
    %v1762 = vpack.c.b16 %v1602, %v1598
    %v1763 = vpack.c.b16 %v1603, %v1599
    %v1764 = vpack.c.b16 %v1608, %v1604
    %v1765 = vpack.c.b16 %v1609, %v1605
    %v1766 = vpack.c.b16 %v1610, %v1606
    %v1767 = vpack.c.b16 %v1611, %v1607
    %v1768 = vpack.c.b16 %v1616, %v1612
    %v1769 = vpack.c.b16 %v1617, %v1613
    %v1770 = vpack.c.b16 %v1618, %v1614
    %v1771 = vpack.c.b16 %v1619, %v1615
    %v1772 = vpack.c.b16 %v1624, %v1620
    %v1773 = vpack.c.b16 %v1625, %v1621
    %v1774 = vpack.c.b16 %v1626, %v1622
    %v1775 = vpack.c.b16 %v1627, %v1623
    %v1776 = vpack.c.b16 %v1632, %v1628
    %v1777 = vpack.c.b16 %v1633, %v1629
    %v1778 = vpack.c.b16 %v1634, %v1630
    %v1779 = vpack.c.b16 %v1635, %v1631
    %v1780 = vpack.c.b16 %v1640, %v1636
    %v1781 = vpack.c.b16 %v1641, %v1637
    %v1782 = vpack.c.b16 %v1642, %v1638
    %v1783 = vpack.c.b16 %v1643, %v1639
    %v1784 = vpack.c.b16 %v1648, %v1644
    %v1785 = vpack.c.b16 %v1649, %v1645
    %v1786 = vpack.c.b16 %v1650, %v1646
    %v1787 = vpack.c.b16 %v1651, %v1647
    %v1788 = vpack.c.b16 %v1656, %v1652
    %v1789 = vpack.c.b16 %v1657, %v1653
    %v1790 = vpack.c.b16 %v1658, %v1654
    %v1791 = vpack.c.b16 %v1659, %v1655
    %v1792 = vpack.c.b16 %v1664, %v1660
    %v1793 = vpack.c.b16 %v1665, %v1661
    %v1794 = vpack.c.b16 %v1666, %v1662
    %v1795 = vpack.c.b16 %v1667, %v1663
    %1924 = vmatpush.bf16.msra.mxu0 %v1696
    %1925 = vmatpush.bf16.msra.mxu0 %v1692
    %1926 = vmatpush.bf16.msra.mxu0 %v1688
    %1927 = vmatpush.bf16.msra.mxu0 %v1684
    %1928 = vmatpush.bf16.msra.mxu0 %v1680
    %1929 = vmatpush.bf16.msra.mxu0 %v1676
    %1930 = vmatpush.bf16.msra.mxu0 %v1672
    %1931 = vmatpush.bf16.msra.mxu0 %v1668
    %1932 = vmatmul.bf16.gmra.mxu0 %v1142
    %v1933 = vpop.f32.mrf.mxu0
    %v1934 = vadd.f32 %v1276, %v1933
    %v1935 = vpop.f32.mrf.mxu0
    %1936 = vdwg.mxu0
    %1937 = vmatpush.bf16.msra.mxu0 %v1728
    %1938 = vmatpush.bf16.msra.mxu0 %v1724
    %1939 = vmatpush.bf16.msra.mxu0 %v1720
    %1940 = vmatpush.bf16.msra.mxu0 %v1716
    %1941 = vmatpush.bf16.msra.mxu0 %v1712
    %1942 = vmatpush.bf16.msra.mxu0 %v1708
    %1943 = vmatpush.bf16.msra.mxu0 %v1704
    %1944 = vmatpush.bf16.msra.mxu0 %v1700
    %1945 = vmatmul.bf16.gmra.mxu0 %v1143
    %v1946 = vpop.f32.mrf.mxu0
    %v1947 = vadd.f32 %v1934, %v1946
    %v1948 = vpop.f32.mrf.mxu0
    %1949 = vdwg.mxu0
    %1950 = vmatpush.bf16.msra.mxu0 %v1760
    %1951 = vmatpush.bf16.msra.mxu0 %v1756
    %1952 = vmatpush.bf16.msra.mxu0 %v1752
    %1953 = vmatpush.bf16.msra.mxu0 %v1748
    %1954 = vmatpush.bf16.msra.mxu0 %v1744
    %1955 = vmatpush.bf16.msra.mxu0 %v1740
    %1956 = vmatpush.bf16.msra.mxu0 %v1736
    %1957 = vmatpush.bf16.msra.mxu0 %v1732
    %1958 = vmatmul.bf16.gmra.mxu0 %v1144
    %v1959 = vpop.f32.mrf.mxu0
    %v1960 = vadd.f32 %v1947, %v1959
    %v1961 = vpop.f32.mrf.mxu0
    %1962 = vdwg.mxu0
    %1963 = vmatpush.bf16.msra.mxu0 %v1792
    %1964 = vmatpush.bf16.msra.mxu0 %v1788
    %1965 = vmatpush.bf16.msra.mxu0 %v1784
    %1966 = vmatpush.bf16.msra.mxu0 %v1780
    %1967 = vmatpush.bf16.msra.mxu0 %v1776
    %1968 = vmatpush.bf16.msra.mxu0 %v1772
    %1969 = vmatpush.bf16.msra.mxu0 %v1768
    %1970 = vmatpush.bf16.msra.mxu0 %v1764
    %1971 = vmatmul.bf16.gmra.mxu0 %v1145
    %v1972 = vpop.f32.mrf.mxu0
    %v1973 = vadd.f32 %v1960, %v1972
    %v1974 = vpop.f32.mrf.mxu0
    %1975 = vdwg.mxu0
    %1976 = vmatpush.bf16.msra.mxu0 %v1697
    %1977 = vmatpush.bf16.msra.mxu0 %v1693
    %1978 = vmatpush.bf16.msra.mxu0 %v1689
    %1979 = vmatpush.bf16.msra.mxu0 %v1685
    %1980 = vmatpush.bf16.msra.mxu0 %v1681
    %1981 = vmatpush.bf16.msra.mxu0 %v1677
    %1982 = vmatpush.bf16.msra.mxu0 %v1673
    %1983 = vmatpush.bf16.msra.mxu0 %v1669
    %1984 = vmatmul.bf16.gmra.mxu0 %v1142
    %v1985 = vpop.f32.mrf.mxu0
    %v1986 = vadd.f32 %v1277, %v1985
    %v1987 = vpop.f32.mrf.mxu0
    %1988 = vdwg.mxu0
    %1989 = vmatpush.bf16.msra.mxu0 %v1729
    %1990 = vmatpush.bf16.msra.mxu0 %v1725
    %1991 = vmatpush.bf16.msra.mxu0 %v1721
    %1992 = vmatpush.bf16.msra.mxu0 %v1717
    %1993 = vmatpush.bf16.msra.mxu0 %v1713
    %1994 = vmatpush.bf16.msra.mxu0 %v1709
    %1995 = vmatpush.bf16.msra.mxu0 %v1705
    %1996 = vmatpush.bf16.msra.mxu0 %v1701
    %1997 = vmatmul.bf16.gmra.mxu0 %v1143
    %v1998 = vpop.f32.mrf.mxu0
    %v1999 = vadd.f32 %v1986, %v1998
    %v2000 = vpop.f32.mrf.mxu0
    %2001 = vdwg.mxu0
    %2002 = vmatpush.bf16.msra.mxu0 %v1761
    %2003 = vmatpush.bf16.msra.mxu0 %v1757
    %2004 = vmatpush.bf16.msra.mxu0 %v1753
    %2005 = vmatpush.bf16.msra.mxu0 %v1749
    %2006 = vmatpush.bf16.msra.mxu0 %v1745
    %2007 = vmatpush.bf16.msra.mxu0 %v1741
    %2008 = vmatpush.bf16.msra.mxu0 %v1737
    %2009 = vmatpush.bf16.msra.mxu0 %v1733
    %2010 = vmatmul.bf16.gmra.mxu0 %v1144
    %v2011 = vpop.f32.mrf.mxu0
    %v2012 = vadd.f32 %v1999, %v2011
    %v2013 = vpop.f32.mrf.mxu0
    %2014 = vdwg.mxu0
    %2015 = vmatpush.bf16.msra.mxu0 %v1793
    %2016 = vmatpush.bf16.msra.mxu0 %v1789
    %2017 = vmatpush.bf16.msra.mxu0 %v1785
    %2018 = vmatpush.bf16.msra.mxu0 %v1781
    %2019 = vmatpush.bf16.msra.mxu0 %v1777
    %2020 = vmatpush.bf16.msra.mxu0 %v1773
    %2021 = vmatpush.bf16.msra.mxu0 %v1769
    %2022 = vmatpush.bf16.msra.mxu0 %v1765
    %2023 = vmatmul.bf16.gmra.mxu0 %v1145
    %v2024 = vpop.f32.mrf.mxu0
    %v2025 = vadd.f32 %v2012, %v2024
    %v2026 = vpop.f32.mrf.mxu0
    %2027 = vdwg.mxu0
    %2028 = vmatpush.bf16.msra.mxu0 %v1698
    %2029 = vmatpush.bf16.msra.mxu0 %v1694
    %2030 = vmatpush.bf16.msra.mxu0 %v1690
    %2031 = vmatpush.bf16.msra.mxu0 %v1686
    %2032 = vmatpush.bf16.msra.mxu0 %v1682
    %2033 = vmatpush.bf16.msra.mxu0 %v1678
    %2034 = vmatpush.bf16.msra.mxu0 %v1674
    %2035 = vmatpush.bf16.msra.mxu0 %v1670
    %2036 = vmatmul.bf16.gmra.mxu0 %v1142
    %v2037 = vpop.f32.mrf.mxu0
    %v2038 = vadd.f32 %v1278, %v2037
    %v2039 = vpop.f32.mrf.mxu0
    %2040 = vdwg.mxu0
    %2041 = vmatpush.bf16.msra.mxu0 %v1730
    %2042 = vmatpush.bf16.msra.mxu0 %v1726
    %2043 = vmatpush.bf16.msra.mxu0 %v1722
    %2044 = vmatpush.bf16.msra.mxu0 %v1718
    %2045 = vmatpush.bf16.msra.mxu0 %v1714
    %2046 = vmatpush.bf16.msra.mxu0 %v1710
    %2047 = vmatpush.bf16.msra.mxu0 %v1706
    %2048 = vmatpush.bf16.msra.mxu0 %v1702
    %2049 = vmatmul.bf16.gmra.mxu0 %v1143
    %v2050 = vpop.f32.mrf.mxu0
    %v2051 = vadd.f32 %v2038, %v2050
    %v2052 = vpop.f32.mrf.mxu0
    %2053 = vdwg.mxu0
    %2054 = vmatpush.bf16.msra.mxu0 %v1762
    %2055 = vmatpush.bf16.msra.mxu0 %v1758
    %2056 = vmatpush.bf16.msra.mxu0 %v1754
    %2057 = vmatpush.bf16.msra.mxu0 %v1750
    %2058 = vmatpush.bf16.msra.mxu0 %v1746
    %2059 = vmatpush.bf16.msra.mxu0 %v1742
    %2060 = vmatpush.bf16.msra.mxu0 %v1738
    %2061 = vmatpush.bf16.msra.mxu0 %v1734
    %2062 = vmatmul.bf16.gmra.mxu0 %v1144
    %v2063 = vpop.f32.mrf.mxu0
    %v2064 = vadd.f32 %v2051, %v2063
    %v2065 = vpop.f32.mrf.mxu0
    %2066 = vdwg.mxu0
    %2067 = vmatpush.bf16.msra.mxu0 %v1794
    %2068 = vmatpush.bf16.msra.mxu0 %v1790
    %2069 = vmatpush.bf16.msra.mxu0 %v1786
    %2070 = vmatpush.bf16.msra.mxu0 %v1782
    %2071 = vmatpush.bf16.msra.mxu0 %v1778
    %2072 = vmatpush.bf16.msra.mxu0 %v1774
    %2073 = vmatpush.bf16.msra.mxu0 %v1770
    %2074 = vmatpush.bf16.msra.mxu0 %v1766
    %2075 = vmatmul.bf16.gmra.mxu0 %v1145
    %v2076 = vpop.f32.mrf.mxu0
    %v2077 = vadd.f32 %v2064, %v2076
    %v2078 = vpop.f32.mrf.mxu0
    %2079 = vdwg.mxu0
    %2080 = vmatpush.bf16.msra.mxu0 %v1699
    %2081 = vmatpush.bf16.msra.mxu0 %v1695
    %2082 = vmatpush.bf16.msra.mxu0 %v1691
    %2083 = vmatpush.bf16.msra.mxu0 %v1687
    %2084 = vmatpush.bf16.msra.mxu0 %v1683
    %2085 = vmatpush.bf16.msra.mxu0 %v1679
    %2086 = vmatpush.bf16.msra.mxu0 %v1675
    %2087 = vmatpush.bf16.msra.mxu0 %v1671
    %2088 = vmatmul.bf16.gmra.mxu0 %v1142
    %v2089 = vpop.f32.mrf.mxu0
    %v2090 = vadd.f32 %v1279, %v2089
    %v2091 = vpop.f32.mrf.mxu0
    %2092 = vdwg.mxu0
    %2093 = vmatpush.bf16.msra.mxu0 %v1731
    %2094 = vmatpush.bf16.msra.mxu0 %v1727
    %2095 = vmatpush.bf16.msra.mxu0 %v1723
    %2096 = vmatpush.bf16.msra.mxu0 %v1719
    %2097 = vmatpush.bf16.msra.mxu0 %v1715
    %2098 = vmatpush.bf16.msra.mxu0 %v1711
    %2099 = vmatpush.bf16.msra.mxu0 %v1707
    %2100 = vmatpush.bf16.msra.mxu0 %v1703
    %2101 = vmatmul.bf16.gmra.mxu0 %v1143
    %v2102 = vpop.f32.mrf.mxu0
    %v2103 = vadd.f32 %v2090, %v2102
    %v2104 = vpop.f32.mrf.mxu0
    %2105 = vdwg.mxu0
    %2106 = vmatpush.bf16.msra.mxu0 %v1763
    %2107 = vmatpush.bf16.msra.mxu0 %v1759
    %2108 = vmatpush.bf16.msra.mxu0 %v1755
    %2109 = vmatpush.bf16.msra.mxu0 %v1751
    %2110 = vmatpush.bf16.msra.mxu0 %v1747
    %2111 = vmatpush.bf16.msra.mxu0 %v1743
    %2112 = vmatpush.bf16.msra.mxu0 %v1739
    %2113 = vmatpush.bf16.msra.mxu0 %v1735
    %2114 = vmatmul.bf16.gmra.mxu0 %v1144
    %v2115 = vpop.f32.mrf.mxu0
    %v2116 = vadd.f32 %v2103, %v2115
    %v2117 = vpop.f32.mrf.mxu0
    %2118 = vdwg.mxu0
    %2119 = vmatpush.bf16.msra.mxu0 %v1795
    %2120 = vmatpush.bf16.msra.mxu0 %v1791
    %2121 = vmatpush.bf16.msra.mxu0 %v1787
    %2122 = vmatpush.bf16.msra.mxu0 %v1783
    %2123 = vmatpush.bf16.msra.mxu0 %v1779
    %2124 = vmatpush.bf16.msra.mxu0 %v1775
    %2125 = vmatpush.bf16.msra.mxu0 %v1771
    %2126 = vmatpush.bf16.msra.mxu0 %v1767
    %2127 = vmatmul.bf16.gmra.mxu0 %v1145
    %v2128 = vpop.f32.mrf.mxu0
    %v2129 = vadd.f32 %v2116, %v2128
    %v2130 = vpop.f32.mrf.mxu0
    %2131 = vdwg.mxu0
    %v2132 = vmax.f32 %v1973, 0.0
    %v2133 = vmax.f32 %v2025, 0.0
    %v2134 = vmax.f32 %v2077, 0.0
    %v2135 = vmax.f32 %v2129, 0.0
    %v2136 = vpack.c.bf16 %v2132, %v2132
    %v2137 = vpack.c.bf16 %v2133, %v2133
    %v2138 = vpack.c.bf16 %v2134, %v2134
    %v2139 = vpack.c.bf16 %v2135, %v2135
    %v2140 = vld [vmem:[#allocation11] sm:$0xff]
    %v2141 = vld [vmem:[#allocation11 + $0x8] sm:$0xff]
    %v2142 = vld [vmem:[#allocation11 + $0x10] sm:$0xff]
    %v2143 = vld [vmem:[#allocation11 + $0x18] sm:$0xff]
    %v2144 = vld [vmem:[#allocation11 + $0x20] sm:$0xff]
    %v2145 = vld [vmem:[#allocation11 + $0x28] sm:$0xff]
    %v2146 = vld [vmem:[#allocation11 + $0x30] sm:$0xff]
    %v2147 = vld [vmem:[#allocation11 + $0x38] sm:$0xff]
    %v2148 = vld [vmem:[#allocation11 + $0x40] sm:$0xff]
    %v2149 = vld [vmem:[#allocation11 + $0x48] sm:$0xff]
    %v2150 = vld [vmem:[#allocation11 + $0x50] sm:$0xff]
    %v2151 = vld [vmem:[#allocation11 + $0x58] sm:$0xff]
    %v2152 = vld [vmem:[#allocation11 + $0x60] sm:$0xff]
    %v2153 = vld [vmem:[#allocation11 + $0x68] sm:$0xff]
    %v2154 = vld [vmem:[#allocation11 + $0x70] sm:$0xff]
    %v2155 = vld [vmem:[#allocation11 + $0x78] sm:$0xff]
    %v2156 = vld [vmem:[#allocation11 + $0x80] sm:$0xff]
    %v2157 = vld [vmem:[#allocation11 + $0x88] sm:$0xff]
    %v2158 = vld [vmem:[#allocation11 + $0x90] sm:$0xff]
    %v2159 = vld [vmem:[#allocation11 + $0x98] sm:$0xff]
    %v2160 = vld [vmem:[#allocation11 + $0xa0] sm:$0xff]
    %v2161 = vld [vmem:[#allocation11 + $0xa8] sm:$0xff]
    %v2162 = vld [vmem:[#allocation11 + $0xb0] sm:$0xff]
    %v2163 = vld [vmem:[#allocation11 + $0xb8] sm:$0xff]
    %v2164 = vld [vmem:[#allocation11 + $0xc0] sm:$0xff]
    %v2165 = vld [vmem:[#allocation11 + $0xc8] sm:$0xff]
    %v2166 = vld [vmem:[#allocation11 + $0xd0] sm:$0xff]
    %v2167 = vld [vmem:[#allocation11 + $0xd8] sm:$0xff]
    %v2168 = vld [vmem:[#allocation11 + $0xe0] sm:$0xff]
    %v2169 = vld [vmem:[#allocation11 + $0xe8] sm:$0xff]
    %v2170 = vld [vmem:[#allocation11 + $0xf0] sm:$0xff]
    %v2171 = vld [vmem:[#allocation11 + $0xf8] sm:$0xff]
    %v2172 = vld [vmem:[#allocation11 + $0x100] sm:$0xff]
    %v2173 = vld [vmem:[#allocation11 + $0x108] sm:$0xff]
    %v2174 = vld [vmem:[#allocation11 + $0x110] sm:$0xff]
    %v2175 = vld [vmem:[#allocation11 + $0x118] sm:$0xff]
    %v2176 = vld [vmem:[#allocation11 + $0x120] sm:$0xff]
    %v2177 = vld [vmem:[#allocation11 + $0x128] sm:$0xff]
    %v2178 = vld [vmem:[#allocation11 + $0x130] sm:$0xff]
    %v2179 = vld [vmem:[#allocation11 + $0x138] sm:$0xff]
    %v2180 = vld [vmem:[#allocation11 + $0x140] sm:$0xff]
    %v2181 = vld [vmem:[#allocation11 + $0x148] sm:$0xff]
    %v2182 = vld [vmem:[#allocation11 + $0x150] sm:$0xff]
    %v2183 = vld [vmem:[#allocation11 + $0x158] sm:$0xff]
    %v2184 = vld [vmem:[#allocation11 + $0x160] sm:$0xff]
    %v2185 = vld [vmem:[#allocation11 + $0x168] sm:$0xff]
    %v2186 = vld [vmem:[#allocation11 + $0x170] sm:$0xff]
    %v2187 = vld [vmem:[#allocation11 + $0x178] sm:$0xff]
    %v2188 = vld [vmem:[#allocation11 + $0x180] sm:$0xff]
    %v2189 = vld [vmem:[#allocation11 + $0x188] sm:$0xff]
    %v2190 = vld [vmem:[#allocation11 + $0x190] sm:$0xff]
    %v2191 = vld [vmem:[#allocation11 + $0x198] sm:$0xff]
    %v2192 = vld [vmem:[#allocation11 + $0x1a0] sm:$0xff]
    %v2193 = vld [vmem:[#allocation11 + $0x1a8] sm:$0xff]
    %v2194 = vld [vmem:[#allocation11 + $0x1b0] sm:$0xff]
    %v2195 = vld [vmem:[#allocation11 + $0x1b8] sm:$0xff]
    %v2196 = vld [vmem:[#allocation11 + $0x1c0] sm:$0xff]
    %v2197 = vld [vmem:[#allocation11 + $0x1c8] sm:$0xff]
    %v2198 = vld [vmem:[#allocation11 + $0x1d0] sm:$0xff]
    %v2199 = vld [vmem:[#allocation11 + $0x1d8] sm:$0xff]
    %v2200 = vld [vmem:[#allocation11 + $0x1e0] sm:$0xff]
    %v2201 = vld [vmem:[#allocation11 + $0x1e8] sm:$0xff]
    %v2202 = vld [vmem:[#allocation11 + $0x1f0] sm:$0xff]
    %v2203 = vld [vmem:[#allocation11 + $0x1f8] sm:$0xff]
    %v2204 = vld [vmem:[#allocation11 + $0x200] sm:$0xff]
    %v2205 = vld [vmem:[#allocation11 + $0x208] sm:$0xff]
    %v2206 = vld [vmem:[#allocation11 + $0x210] sm:$0xff]
    %v2207 = vld [vmem:[#allocation11 + $0x218] sm:$0xff]
    %v2208 = vld [vmem:[#allocation11 + $0x220] sm:$0xff]
    %v2209 = vld [vmem:[#allocation11 + $0x228] sm:$0xff]
    %v2210 = vld [vmem:[#allocation11 + $0x230] sm:$0xff]
    %v2211 = vld [vmem:[#allocation11 + $0x238] sm:$0xff]
    %v2212 = vld [vmem:[#allocation11 + $0x240] sm:$0xff]
    %v2213 = vld [vmem:[#allocation11 + $0x248] sm:$0xff]
    %v2214 = vld [vmem:[#allocation11 + $0x250] sm:$0xff]
    %v2215 = vld [vmem:[#allocation11 + $0x258] sm:$0xff]
    %v2216 = vld [vmem:[#allocation11 + $0x260] sm:$0xff]
    %v2217 = vld [vmem:[#allocation11 + $0x268] sm:$0xff]
    %v2218 = vld [vmem:[#allocation11 + $0x270] sm:$0xff]
    %v2219 = vld [vmem:[#allocation11 + $0x278] sm:$0xff]
    %v2220 = vld [vmem:[#allocation11 + $0x280] sm:$0xff]
    %v2221 = vld [vmem:[#allocation11 + $0x288] sm:$0xff]
    %v2222 = vld [vmem:[#allocation11 + $0x290] sm:$0xff]
    %v2223 = vld [vmem:[#allocation11 + $0x298] sm:$0xff]
    %v2224 = vld [vmem:[#allocation11 + $0x2a0] sm:$0xff]
    %v2225 = vld [vmem:[#allocation11 + $0x2a8] sm:$0xff]
    %v2226 = vld [vmem:[#allocation11 + $0x2b0] sm:$0xff]
    %v2227 = vld [vmem:[#allocation11 + $0x2b8] sm:$0xff]
    %v2228 = vld [vmem:[#allocation11 + $0x2c0] sm:$0xff]
    %v2229 = vld [vmem:[#allocation11 + $0x2c8] sm:$0xff]
    %v2230 = vld [vmem:[#allocation11 + $0x2d0] sm:$0xff]
    %v2231 = vld [vmem:[#allocation11 + $0x2d8] sm:$0xff]
    %v2232 = vld [vmem:[#allocation11 + $0x2e0] sm:$0xff]
    %v2233 = vld [vmem:[#allocation11 + $0x2e8] sm:$0xff]
    %v2234 = vld [vmem:[#allocation11 + $0x2f0] sm:$0xff]
    %v2235 = vld [vmem:[#allocation11 + $0x2f8] sm:$0xff]
    %v2236 = vld [vmem:[#allocation11 + $0x300] sm:$0xff]
    %v2237 = vld [vmem:[#allocation11 + $0x308] sm:$0xff]
    %v2238 = vld [vmem:[#allocation11 + $0x310] sm:$0xff]
    %v2239 = vld [vmem:[#allocation11 + $0x318] sm:$0xff]
    %v2240 = vld [vmem:[#allocation11 + $0x320] sm:$0xff]
    %v2241 = vld [vmem:[#allocation11 + $0x328] sm:$0xff]
    %v2242 = vld [vmem:[#allocation11 + $0x330] sm:$0xff]
    %v2243 = vld [vmem:[#allocation11 + $0x338] sm:$0xff]
    %v2244 = vld [vmem:[#allocation11 + $0x340] sm:$0xff]
    %v2245 = vld [vmem:[#allocation11 + $0x348] sm:$0xff]
    %v2246 = vld [vmem:[#allocation11 + $0x350] sm:$0xff]
    %v2247 = vld [vmem:[#allocation11 + $0x358] sm:$0xff]
    %v2248 = vld [vmem:[#allocation11 + $0x360] sm:$0xff]
    %v2249 = vld [vmem:[#allocation11 + $0x368] sm:$0xff]
    %v2250 = vld [vmem:[#allocation11 + $0x370] sm:$0xff]
    %v2251 = vld [vmem:[#allocation11 + $0x378] sm:$0xff]
    %v2252 = vld [vmem:[#allocation11 + $0x380] sm:$0xff]
    %v2253 = vld [vmem:[#allocation11 + $0x388] sm:$0xff]
    %v2254 = vld [vmem:[#allocation11 + $0x390] sm:$0xff]
    %v2255 = vld [vmem:[#allocation11 + $0x398] sm:$0xff]
    %v2256 = vld [vmem:[#allocation11 + $0x3a0] sm:$0xff]
    %v2257 = vld [vmem:[#allocation11 + $0x3a8] sm:$0xff]
    %v2258 = vld [vmem:[#allocation11 + $0x3b0] sm:$0xff]
    %v2259 = vld [vmem:[#allocation11 + $0x3b8] sm:$0xff]
    %v2260 = vld [vmem:[#allocation11 + $0x3c0] sm:$0xff]
    %v2261 = vld [vmem:[#allocation11 + $0x3c8] sm:$0xff]
    %v2262 = vld [vmem:[#allocation11 + $0x3d0] sm:$0xff]
    %v2263 = vld [vmem:[#allocation11 + $0x3d8] sm:$0xff]
    %v2264 = vld [vmem:[#allocation11 + $0x3e0] sm:$0xff]
    %v2265 = vld [vmem:[#allocation11 + $0x3e8] sm:$0xff]
    %v2266 = vld [vmem:[#allocation11 + $0x3f0] sm:$0xff]
    %v2267 = vld [vmem:[#allocation11 + $0x3f8] sm:$0xff]
    %v2268 = vld [vmem:[%s6] sm:$0xf]
    %v2270 = vperm.slane %v2268, 0
    %v2271 = vperm.slane %v2268, 1
    %v2272 = vperm.slane %v2268, 2
    %v2273 = vperm.slane %v2268, 3
    %v2406 = vunpack.c.l.b16 %v2140
    %v2407 = vunpack.c.h.b16 %v2140
    %v2408 = vunpack.c.l.b16 %v2141
    %v2409 = vunpack.c.h.b16 %v2141
    %v2410 = vunpack.c.l.b16 %v2142
    %v2411 = vunpack.c.h.b16 %v2142
    %v2412 = vunpack.c.l.b16 %v2143
    %v2413 = vunpack.c.h.b16 %v2143
    %v2414 = vunpack.c.l.b16 %v2144
    %v2415 = vunpack.c.h.b16 %v2144
    %v2416 = vunpack.c.l.b16 %v2145
    %v2417 = vunpack.c.h.b16 %v2145
    %v2418 = vunpack.c.l.b16 %v2146
    %v2419 = vunpack.c.h.b16 %v2146
    %v2420 = vunpack.c.l.b16 %v2147
    %v2421 = vunpack.c.h.b16 %v2147
    %v2422 = vunpack.c.l.b16 %v2148
    %v2423 = vunpack.c.h.b16 %v2148
    %v2424 = vunpack.c.l.b16 %v2149
    %v2425 = vunpack.c.h.b16 %v2149
    %v2426 = vunpack.c.l.b16 %v2150
    %v2427 = vunpack.c.h.b16 %v2150
    %v2428 = vunpack.c.l.b16 %v2151
    %v2429 = vunpack.c.h.b16 %v2151
    %v2430 = vunpack.c.l.b16 %v2152
    %v2431 = vunpack.c.h.b16 %v2152
    %v2432 = vunpack.c.l.b16 %v2153
    %v2433 = vunpack.c.h.b16 %v2153
    %v2434 = vunpack.c.l.b16 %v2154
    %v2435 = vunpack.c.h.b16 %v2154
    %v2436 = vunpack.c.l.b16 %v2155
    %v2437 = vunpack.c.h.b16 %v2155
    %v2438 = vunpack.c.l.b16 %v2156
    %v2439 = vunpack.c.h.b16 %v2156
    %v2440 = vunpack.c.l.b16 %v2157
    %v2441 = vunpack.c.h.b16 %v2157
    %v2442 = vunpack.c.l.b16 %v2158
    %v2443 = vunpack.c.h.b16 %v2158
    %v2444 = vunpack.c.l.b16 %v2159
    %v2445 = vunpack.c.h.b16 %v2159
    %v2446 = vunpack.c.l.b16 %v2160
    %v2447 = vunpack.c.h.b16 %v2160
    %v2448 = vunpack.c.l.b16 %v2161
    %v2449 = vunpack.c.h.b16 %v2161
    %v2450 = vunpack.c.l.b16 %v2162
    %v2451 = vunpack.c.h.b16 %v2162
    %v2452 = vunpack.c.l.b16 %v2163
    %v2453 = vunpack.c.h.b16 %v2163
    %v2454 = vunpack.c.l.b16 %v2164
    %v2455 = vunpack.c.h.b16 %v2164
    %v2456 = vunpack.c.l.b16 %v2165
    %v2457 = vunpack.c.h.b16 %v2165
    %v2458 = vunpack.c.l.b16 %v2166
    %v2459 = vunpack.c.h.b16 %v2166
    %v2460 = vunpack.c.l.b16 %v2167
    %v2461 = vunpack.c.h.b16 %v2167
    %v2462 = vunpack.c.l.b16 %v2168
    %v2463 = vunpack.c.h.b16 %v2168
    %v2464 = vunpack.c.l.b16 %v2169
    %v2465 = vunpack.c.h.b16 %v2169
    %v2466 = vunpack.c.l.b16 %v2170
    %v2467 = vunpack.c.h.b16 %v2170
    %v2468 = vunpack.c.l.b16 %v2171
    %v2469 = vunpack.c.h.b16 %v2171
    %v2470 = vunpack.c.l.b16 %v2172
    %v2471 = vunpack.c.h.b16 %v2172
    %v2472 = vunpack.c.l.b16 %v2173
    %v2473 = vunpack.c.h.b16 %v2173
    %v2474 = vunpack.c.l.b16 %v2174
    %v2475 = vunpack.c.h.b16 %v2174
    %v2476 = vunpack.c.l.b16 %v2175
    %v2477 = vunpack.c.h.b16 %v2175
    %v2478 = vunpack.c.l.b16 %v2176
    %v2479 = vunpack.c.h.b16 %v2176
    %v2480 = vunpack.c.l.b16 %v2177
    %v2481 = vunpack.c.h.b16 %v2177
    %v2482 = vunpack.c.l.b16 %v2178
    %v2483 = vunpack.c.h.b16 %v2178
    %v2484 = vunpack.c.l.b16 %v2179
    %v2485 = vunpack.c.h.b16 %v2179
    %v2486 = vunpack.c.l.b16 %v2180
    %v2487 = vunpack.c.h.b16 %v2180
    %v2488 = vunpack.c.l.b16 %v2181
    %v2489 = vunpack.c.h.b16 %v2181
    %v2490 = vunpack.c.l.b16 %v2182
    %v2491 = vunpack.c.h.b16 %v2182
    %v2492 = vunpack.c.l.b16 %v2183
    %v2493 = vunpack.c.h.b16 %v2183
    %v2494 = vunpack.c.l.b16 %v2184
    %v2495 = vunpack.c.h.b16 %v2184
    %v2496 = vunpack.c.l.b16 %v2185
    %v2497 = vunpack.c.h.b16 %v2185
    %v2498 = vunpack.c.l.b16 %v2186
    %v2499 = vunpack.c.h.b16 %v2186
    %v2500 = vunpack.c.l.b16 %v2187
    %v2501 = vunpack.c.h.b16 %v2187
    %v2502 = vunpack.c.l.b16 %v2188
    %v2503 = vunpack.c.h.b16 %v2188
    %v2504 = vunpack.c.l.b16 %v2189
    %v2505 = vunpack.c.h.b16 %v2189
    %v2506 = vunpack.c.l.b16 %v2190
    %v2507 = vunpack.c.h.b16 %v2190
    %v2508 = vunpack.c.l.b16 %v2191
    %v2509 = vunpack.c.h.b16 %v2191
    %v2510 = vunpack.c.l.b16 %v2192
    %v2511 = vunpack.c.h.b16 %v2192
    %v2512 = vunpack.c.l.b16 %v2193
    %v2513 = vunpack.c.h.b16 %v2193
    %v2514 = vunpack.c.l.b16 %v2194
    %v2515 = vunpack.c.h.b16 %v2194
    %v2516 = vunpack.c.l.b16 %v2195
    %v2517 = vunpack.c.h.b16 %v2195
    %v2518 = vunpack.c.l.b16 %v2196
    %v2519 = vunpack.c.h.b16 %v2196
    %v2520 = vunpack.c.l.b16 %v2197
    %v2521 = vunpack.c.h.b16 %v2197
    %v2522 = vunpack.c.l.b16 %v2198
    %v2523 = vunpack.c.h.b16 %v2198
    %v2524 = vunpack.c.l.b16 %v2199
    %v2525 = vunpack.c.h.b16 %v2199
    %v2526 = vunpack.c.l.b16 %v2200
    %v2527 = vunpack.c.h.b16 %v2200
    %v2528 = vunpack.c.l.b16 %v2201
    %v2529 = vunpack.c.h.b16 %v2201
    %v2530 = vunpack.c.l.b16 %v2202
    %v2531 = vunpack.c.h.b16 %v2202
    %v2532 = vunpack.c.l.b16 %v2203
    %v2533 = vunpack.c.h.b16 %v2203
    %v2534 = vunpack.c.l.b16 %v2204
    %v2535 = vunpack.c.h.b16 %v2204
    %v2536 = vunpack.c.l.b16 %v2205
    %v2537 = vunpack.c.h.b16 %v2205
    %v2538 = vunpack.c.l.b16 %v2206
    %v2539 = vunpack.c.h.b16 %v2206
    %v2540 = vunpack.c.l.b16 %v2207
    %v2541 = vunpack.c.h.b16 %v2207
    %v2542 = vunpack.c.l.b16 %v2208
    %v2543 = vunpack.c.h.b16 %v2208
    %v2544 = vunpack.c.l.b16 %v2209
    %v2545 = vunpack.c.h.b16 %v2209
    %v2546 = vunpack.c.l.b16 %v2210
    %v2547 = vunpack.c.h.b16 %v2210
    %v2548 = vunpack.c.l.b16 %v2211
    %v2549 = vunpack.c.h.b16 %v2211
    %v2550 = vunpack.c.l.b16 %v2212
    %v2551 = vunpack.c.h.b16 %v2212
    %v2552 = vunpack.c.l.b16 %v2213
    %v2553 = vunpack.c.h.b16 %v2213
    %v2554 = vunpack.c.l.b16 %v2214
    %v2555 = vunpack.c.h.b16 %v2214
    %v2556 = vunpack.c.l.b16 %v2215
    %v2557 = vunpack.c.h.b16 %v2215
    %v2558 = vunpack.c.l.b16 %v2216
    %v2559 = vunpack.c.h.b16 %v2216
    %v2560 = vunpack.c.l.b16 %v2217
    %v2561 = vunpack.c.h.b16 %v2217
    %v2562 = vunpack.c.l.b16 %v2218
    %v2563 = vunpack.c.h.b16 %v2218
    %v2564 = vunpack.c.l.b16 %v2219
    %v2565 = vunpack.c.h.b16 %v2219
    %v2566 = vunpack.c.l.b16 %v2220
    %v2567 = vunpack.c.h.b16 %v2220
    %v2568 = vunpack.c.l.b16 %v2221
    %v2569 = vunpack.c.h.b16 %v2221
    %v2570 = vunpack.c.l.b16 %v2222
    %v2571 = vunpack.c.h.b16 %v2222
    %v2572 = vunpack.c.l.b16 %v2223
    %v2573 = vunpack.c.h.b16 %v2223
    %v2574 = vunpack.c.l.b16 %v2224
    %v2575 = vunpack.c.h.b16 %v2224
    %v2576 = vunpack.c.l.b16 %v2225
    %v2577 = vunpack.c.h.b16 %v2225
    %v2578 = vunpack.c.l.b16 %v2226
    %v2579 = vunpack.c.h.b16 %v2226
    %v2580 = vunpack.c.l.b16 %v2227
    %v2581 = vunpack.c.h.b16 %v2227
    %v2582 = vunpack.c.l.b16 %v2228
    %v2583 = vunpack.c.h.b16 %v2228
    %v2584 = vunpack.c.l.b16 %v2229
    %v2585 = vunpack.c.h.b16 %v2229
    %v2586 = vunpack.c.l.b16 %v2230
    %v2587 = vunpack.c.h.b16 %v2230
    %v2588 = vunpack.c.l.b16 %v2231
    %v2589 = vunpack.c.h.b16 %v2231
    %v2590 = vunpack.c.l.b16 %v2232
    %v2591 = vunpack.c.h.b16 %v2232
    %v2592 = vunpack.c.l.b16 %v2233
    %v2593 = vunpack.c.h.b16 %v2233
    %v2594 = vunpack.c.l.b16 %v2234
    %v2595 = vunpack.c.h.b16 %v2234
    %v2596 = vunpack.c.l.b16 %v2235
    %v2597 = vunpack.c.h.b16 %v2235
    %v2598 = vunpack.c.l.b16 %v2236
    %v2599 = vunpack.c.h.b16 %v2236
    %v2600 = vunpack.c.l.b16 %v2237
    %v2601 = vunpack.c.h.b16 %v2237
    %v2602 = vunpack.c.l.b16 %v2238
    %v2603 = vunpack.c.h.b16 %v2238
    %v2604 = vunpack.c.l.b16 %v2239
    %v2605 = vunpack.c.h.b16 %v2239
    %v2606 = vunpack.c.l.b16 %v2240
    %v2607 = vunpack.c.h.b16 %v2240
    %v2608 = vunpack.c.l.b16 %v2241
    %v2609 = vunpack.c.h.b16 %v2241
    %v2610 = vunpack.c.l.b16 %v2242
    %v2611 = vunpack.c.h.b16 %v2242
    %v2612 = vunpack.c.l.b16 %v2243
    %v2613 = vunpack.c.h.b16 %v2243
    %v2614 = vunpack.c.l.b16 %v2244
    %v2615 = vunpack.c.h.b16 %v2244
    %v2616 = vunpack.c.l.b16 %v2245
    %v2617 = vunpack.c.h.b16 %v2245
    %v2618 = vunpack.c.l.b16 %v2246
    %v2619 = vunpack.c.h.b16 %v2246
    %v2620 = vunpack.c.l.b16 %v2247
    %v2621 = vunpack.c.h.b16 %v2247
    %v2622 = vunpack.c.l.b16 %v2248
    %v2623 = vunpack.c.h.b16 %v2248
    %v2624 = vunpack.c.l.b16 %v2249
    %v2625 = vunpack.c.h.b16 %v2249
    %v2626 = vunpack.c.l.b16 %v2250
    %v2627 = vunpack.c.h.b16 %v2250
    %v2628 = vunpack.c.l.b16 %v2251
    %v2629 = vunpack.c.h.b16 %v2251
    %v2630 = vunpack.c.l.b16 %v2252
    %v2631 = vunpack.c.h.b16 %v2252
    %v2632 = vunpack.c.l.b16 %v2253
    %v2633 = vunpack.c.h.b16 %v2253
    %v2634 = vunpack.c.l.b16 %v2254
    %v2635 = vunpack.c.h.b16 %v2254
    %v2636 = vunpack.c.l.b16 %v2255
    %v2637 = vunpack.c.h.b16 %v2255
    %v2638 = vunpack.c.l.b16 %v2256
    %v2639 = vunpack.c.h.b16 %v2256
    %v2640 = vunpack.c.l.b16 %v2257
    %v2641 = vunpack.c.h.b16 %v2257
    %v2642 = vunpack.c.l.b16 %v2258
    %v2643 = vunpack.c.h.b16 %v2258
    %v2644 = vunpack.c.l.b16 %v2259
    %v2645 = vunpack.c.h.b16 %v2259
    %v2646 = vunpack.c.l.b16 %v2260
    %v2647 = vunpack.c.h.b16 %v2260
    %v2648 = vunpack.c.l.b16 %v2261
    %v2649 = vunpack.c.h.b16 %v2261
    %v2650 = vunpack.c.l.b16 %v2262
    %v2651 = vunpack.c.h.b16 %v2262
    %v2652 = vunpack.c.l.b16 %v2263
    %v2653 = vunpack.c.h.b16 %v2263
    %v2654 = vunpack.c.l.b16 %v2264
    %v2655 = vunpack.c.h.b16 %v2264
    %v2656 = vunpack.c.l.b16 %v2265
    %v2657 = vunpack.c.h.b16 %v2265
    %v2658 = vunpack.c.l.b16 %v2266
    %v2659 = vunpack.c.h.b16 %v2266
    %v2660 = vunpack.c.l.b16 %v2267
    %v2661 = vunpack.c.h.b16 %v2267
    %v2662 = vpack.c.b16 %v2410, %v2406
    %v2663 = vpack.c.b16 %v2411, %v2407
    %v2664 = vpack.c.b16 %v2412, %v2408
    %v2665 = vpack.c.b16 %v2413, %v2409
    %v2666 = vpack.c.b16 %v2418, %v2414
    %v2667 = vpack.c.b16 %v2419, %v2415
    %v2668 = vpack.c.b16 %v2420, %v2416
    %v2669 = vpack.c.b16 %v2421, %v2417
    %v2670 = vpack.c.b16 %v2426, %v2422
    %v2671 = vpack.c.b16 %v2427, %v2423
    %v2672 = vpack.c.b16 %v2428, %v2424
    %v2673 = vpack.c.b16 %v2429, %v2425
    %v2674 = vpack.c.b16 %v2434, %v2430
    %v2675 = vpack.c.b16 %v2435, %v2431
    %v2676 = vpack.c.b16 %v2436, %v2432
    %v2677 = vpack.c.b16 %v2437, %v2433
    %v2678 = vpack.c.b16 %v2442, %v2438
    %v2679 = vpack.c.b16 %v2443, %v2439
    %v2680 = vpack.c.b16 %v2444, %v2440
    %v2681 = vpack.c.b16 %v2445, %v2441
    %v2682 = vpack.c.b16 %v2450, %v2446
    %v2683 = vpack.c.b16 %v2451, %v2447
    %v2684 = vpack.c.b16 %v2452, %v2448
    %v2685 = vpack.c.b16 %v2453, %v2449
    %v2686 = vpack.c.b16 %v2458, %v2454
    %v2687 = vpack.c.b16 %v2459, %v2455
    %v2688 = vpack.c.b16 %v2460, %v2456
    %v2689 = vpack.c.b16 %v2461, %v2457
    %v2690 = vpack.c.b16 %v2466, %v2462
    %v2691 = vpack.c.b16 %v2467, %v2463
    %v2692 = vpack.c.b16 %v2468, %v2464
    %v2693 = vpack.c.b16 %v2469, %v2465
    %v2694 = vpack.c.b16 %v2474, %v2470
    %v2695 = vpack.c.b16 %v2475, %v2471
    %v2696 = vpack.c.b16 %v2476, %v2472
    %v2697 = vpack.c.b16 %v2477, %v2473
    %v2698 = vpack.c.b16 %v2482, %v2478
    %v2699 = vpack.c.b16 %v2483, %v2479
    %v2700 = vpack.c.b16 %v2484, %v2480
    %v2701 = vpack.c.b16 %v2485, %v2481
    %v2702 = vpack.c.b16 %v2490, %v2486
    %v2703 = vpack.c.b16 %v2491, %v2487
    %v2704 = vpack.c.b16 %v2492, %v2488
    %v2705 = vpack.c.b16 %v2493, %v2489
    %v2706 = vpack.c.b16 %v2498, %v2494
    %v2707 = vpack.c.b16 %v2499, %v2495
    %v2708 = vpack.c.b16 %v2500, %v2496
    %v2709 = vpack.c.b16 %v2501, %v2497
    %v2710 = vpack.c.b16 %v2506, %v2502
    %v2711 = vpack.c.b16 %v2507, %v2503
    %v2712 = vpack.c.b16 %v2508, %v2504
    %v2713 = vpack.c.b16 %v2509, %v2505
    %v2714 = vpack.c.b16 %v2514, %v2510
    %v2715 = vpack.c.b16 %v2515, %v2511
    %v2716 = vpack.c.b16 %v2516, %v2512
    %v2717 = vpack.c.b16 %v2517, %v2513
    %v2718 = vpack.c.b16 %v2522, %v2518
    %v2719 = vpack.c.b16 %v2523, %v2519
    %v2720 = vpack.c.b16 %v2524, %v2520
    %v2721 = vpack.c.b16 %v2525, %v2521
    %v2722 = vpack.c.b16 %v2530, %v2526
    %v2723 = vpack.c.b16 %v2531, %v2527
    %v2724 = vpack.c.b16 %v2532, %v2528
    %v2725 = vpack.c.b16 %v2533, %v2529
    %v2726 = vpack.c.b16 %v2538, %v2534
    %v2727 = vpack.c.b16 %v2539, %v2535
    %v2728 = vpack.c.b16 %v2540, %v2536
    %v2729 = vpack.c.b16 %v2541, %v2537
    %v2730 = vpack.c.b16 %v2546, %v2542
    %v2731 = vpack.c.b16 %v2547, %v2543
    %v2732 = vpack.c.b16 %v2548, %v2544
    %v2733 = vpack.c.b16 %v2549, %v2545
    %v2734 = vpack.c.b16 %v2554, %v2550
    %v2735 = vpack.c.b16 %v2555, %v2551
    %v2736 = vpack.c.b16 %v2556, %v2552
    %v2737 = vpack.c.b16 %v2557, %v2553
    %v2738 = vpack.c.b16 %v2562, %v2558
    %v2739 = vpack.c.b16 %v2563, %v2559
    %v2740 = vpack.c.b16 %v2564, %v2560
    %v2741 = vpack.c.b16 %v2565, %v2561
    %v2742 = vpack.c.b16 %v2570, %v2566
    %v2743 = vpack.c.b16 %v2571, %v2567
    %v2744 = vpack.c.b16 %v2572, %v2568
    %v2745 = vpack.c.b16 %v2573, %v2569
    %v2746 = vpack.c.b16 %v2578, %v2574
    %v2747 = vpack.c.b16 %v2579, %v2575
    %v2748 = vpack.c.b16 %v2580, %v2576
    %v2749 = vpack.c.b16 %v2581, %v2577
    %v2750 = vpack.c.b16 %v2586, %v2582
    %v2751 = vpack.c.b16 %v2587, %v2583
    %v2752 = vpack.c.b16 %v2588, %v2584
    %v2753 = vpack.c.b16 %v2589, %v2585
    %v2754 = vpack.c.b16 %v2594, %v2590
    %v2755 = vpack.c.b16 %v2595, %v2591
    %v2756 = vpack.c.b16 %v2596, %v2592
    %v2757 = vpack.c.b16 %v2597, %v2593
    %v2758 = vpack.c.b16 %v2602, %v2598
    %v2759 = vpack.c.b16 %v2603, %v2599
    %v2760 = vpack.c.b16 %v2604, %v2600
    %v2761 = vpack.c.b16 %v2605, %v2601
    %v2762 = vpack.c.b16 %v2610, %v2606
    %v2763 = vpack.c.b16 %v2611, %v2607
    %v2764 = vpack.c.b16 %v2612, %v2608
    %v2765 = vpack.c.b16 %v2613, %v2609
    %v2766 = vpack.c.b16 %v2618, %v2614
    %v2767 = vpack.c.b16 %v2619, %v2615
    %v2768 = vpack.c.b16 %v2620, %v2616
    %v2769 = vpack.c.b16 %v2621, %v2617
    %v2770 = vpack.c.b16 %v2626, %v2622
    %v2771 = vpack.c.b16 %v2627, %v2623
    %v2772 = vpack.c.b16 %v2628, %v2624
    %v2773 = vpack.c.b16 %v2629, %v2625
    %v2774 = vpack.c.b16 %v2634, %v2630
    %v2775 = vpack.c.b16 %v2635, %v2631
    %v2776 = vpack.c.b16 %v2636, %v2632
    %v2777 = vpack.c.b16 %v2637, %v2633
    %v2778 = vpack.c.b16 %v2642, %v2638
    %v2779 = vpack.c.b16 %v2643, %v2639
    %v2780 = vpack.c.b16 %v2644, %v2640
    %v2781 = vpack.c.b16 %v2645, %v2641
    %v2782 = vpack.c.b16 %v2650, %v2646
    %v2783 = vpack.c.b16 %v2651, %v2647
    %v2784 = vpack.c.b16 %v2652, %v2648
    %v2785 = vpack.c.b16 %v2653, %v2649
    %v2786 = vpack.c.b16 %v2658, %v2654
    %v2787 = vpack.c.b16 %v2659, %v2655
    %v2788 = vpack.c.b16 %v2660, %v2656
    %v2789 = vpack.c.b16 %v2661, %v2657
    %2918 = vmatpush.bf16.msra.mxu0 %v2690
    %2919 = vmatpush.bf16.msra.mxu0 %v2686
    %2920 = vmatpush.bf16.msra.mxu0 %v2682
    %2921 = vmatpush.bf16.msra.mxu0 %v2678
    %2922 = vmatpush.bf16.msra.mxu0 %v2674
    %2923 = vmatpush.bf16.msra.mxu0 %v2670
    %2924 = vmatpush.bf16.msra.mxu0 %v2666
    %2925 = vmatpush.bf16.msra.mxu0 %v2662
    %2926 = vmatmul.bf16.gmra.mxu0 %v2136
    %v2927 = vpop.f32.mrf.mxu0
    %v2928 = vadd.f32 %v2270, %v2927
    %v2929 = vpop.f32.mrf.mxu0
    %2930 = vdwg.mxu0
    %2931 = vmatpush.bf16.msra.mxu0 %v2722
    %2932 = vmatpush.bf16.msra.mxu0 %v2718
    %2933 = vmatpush.bf16.msra.mxu0 %v2714
    %2934 = vmatpush.bf16.msra.mxu0 %v2710
    %2935 = vmatpush.bf16.msra.mxu0 %v2706
    %2936 = vmatpush.bf16.msra.mxu0 %v2702
    %2937 = vmatpush.bf16.msra.mxu0 %v2698
    %2938 = vmatpush.bf16.msra.mxu0 %v2694
    %2939 = vmatmul.bf16.gmra.mxu0 %v2137
    %v2940 = vpop.f32.mrf.mxu0
    %v2941 = vadd.f32 %v2928, %v2940
    %v2942 = vpop.f32.mrf.mxu0
    %2943 = vdwg.mxu0
    %2944 = vmatpush.bf16.msra.mxu0 %v2754
    %2945 = vmatpush.bf16.msra.mxu0 %v2750
    %2946 = vmatpush.bf16.msra.mxu0 %v2746
    %2947 = vmatpush.bf16.msra.mxu0 %v2742
    %2948 = vmatpush.bf16.msra.mxu0 %v2738
    %2949 = vmatpush.bf16.msra.mxu0 %v2734
    %2950 = vmatpush.bf16.msra.mxu0 %v2730
    %2951 = vmatpush.bf16.msra.mxu0 %v2726
    %2952 = vmatmul.bf16.gmra.mxu0 %v2138
    %v2953 = vpop.f32.mrf.mxu0
    %v2954 = vadd.f32 %v2941, %v2953
    %v2955 = vpop.f32.mrf.mxu0
    %2956 = vdwg.mxu0
    %2957 = vmatpush.bf16.msra.mxu0 %v2786
    %2958 = vmatpush.bf16.msra.mxu0 %v2782
    %2959 = vmatpush.bf16.msra.mxu0 %v2778
    %2960 = vmatpush.bf16.msra.mxu0 %v2774
    %2961 = vmatpush.bf16.msra.mxu0 %v2770
    %2962 = vmatpush.bf16.msra.mxu0 %v2766
    %2963 = vmatpush.bf16.msra.mxu0 %v2762
    %2964 = vmatpush.bf16.msra.mxu0 %v2758
    %2965 = vmatmul.bf16.gmra.mxu0 %v2139
    %v2966 = vpop.f32.mrf.mxu0
    %v2967 = vadd.f32 %v2954, %v2966
    %v2968 = vpop.f32.mrf.mxu0
    %2969 = vdwg.mxu0
    %2970 = vmatpush.bf16.msra.mxu0 %v2691
    %2971 = vmatpush.bf16.msra.mxu0 %v2687
    %2972 = vmatpush.bf16.msra.mxu0 %v2683
    %2973 = vmatpush.bf16.msra.mxu0 %v2679
    %2974 = vmatpush.bf16.msra.mxu0 %v2675
    %2975 = vmatpush.bf16.msra.mxu0 %v2671
    %2976 = vmatpush.bf16.msra.mxu0 %v2667
    %2977 = vmatpush.bf16.msra.mxu0 %v2663
    %2978 = vmatmul.bf16.gmra.mxu0 %v2136
    %v2979 = vpop.f32.mrf.mxu0
    %v2980 = vadd.f32 %v2271, %v2979
    %v2981 = vpop.f32.mrf.mxu0
    %2982 = vdwg.mxu0
    %2983 = vmatpush.bf16.msra.mxu0 %v2723
    %2984 = vmatpush.bf16.msra.mxu0 %v2719
    %2985 = vmatpush.bf16.msra.mxu0 %v2715
    %2986 = vmatpush.bf16.msra.mxu0 %v2711
    %2987 = vmatpush.bf16.msra.mxu0 %v2707
    %2988 = vmatpush.bf16.msra.mxu0 %v2703
    %2989 = vmatpush.bf16.msra.mxu0 %v2699
    %2990 = vmatpush.bf16.msra.mxu0 %v2695
    %2991 = vmatmul.bf16.gmra.mxu0 %v2137
    %v2992 = vpop.f32.mrf.mxu0
    %v2993 = vadd.f32 %v2980, %v2992
    %v2994 = vpop.f32.mrf.mxu0
    %2995 = vdwg.mxu0
    %2996 = vmatpush.bf16.msra.mxu0 %v2755
    %2997 = vmatpush.bf16.msra.mxu0 %v2751
    %2998 = vmatpush.bf16.msra.mxu0 %v2747
    %2999 = vmatpush.bf16.msra.mxu0 %v2743
    %3000 = vmatpush.bf16.msra.mxu0 %v2739
    %3001 = vmatpush.bf16.msra.mxu0 %v2735
    %3002 = vmatpush.bf16.msra.mxu0 %v2731
    %3003 = vmatpush.bf16.msra.mxu0 %v2727
    %3004 = vmatmul.bf16.gmra.mxu0 %v2138
    %v3005 = vpop.f32.mrf.mxu0
    %v3006 = vadd.f32 %v2993, %v3005
    %v3007 = vpop.f32.mrf.mxu0
    %3008 = vdwg.mxu0
    %3009 = vmatpush.bf16.msra.mxu0 %v2787
    %3010 = vmatpush.bf16.msra.mxu0 %v2783
    %3011 = vmatpush.bf16.msra.mxu0 %v2779
    %3012 = vmatpush.bf16.msra.mxu0 %v2775
    %3013 = vmatpush.bf16.msra.mxu0 %v2771
    %3014 = vmatpush.bf16.msra.mxu0 %v2767
    %3015 = vmatpush.bf16.msra.mxu0 %v2763
    %3016 = vmatpush.bf16.msra.mxu0 %v2759
    %3017 = vmatmul.bf16.gmra.mxu0 %v2139
    %v3018 = vpop.f32.mrf.mxu0
    %v3019 = vadd.f32 %v3006, %v3018
    %v3020 = vpop.f32.mrf.mxu0
    %3021 = vdwg.mxu0
    %3022 = vmatpush.bf16.msra.mxu0 %v2692
    %3023 = vmatpush.bf16.msra.mxu0 %v2688
    %3024 = vmatpush.bf16.msra.mxu0 %v2684
    %3025 = vmatpush.bf16.msra.mxu0 %v2680
    %3026 = vmatpush.bf16.msra.mxu0 %v2676
    %3027 = vmatpush.bf16.msra.mxu0 %v2672
    %3028 = vmatpush.bf16.msra.mxu0 %v2668
    %3029 = vmatpush.bf16.msra.mxu0 %v2664
    %3030 = vmatmul.bf16.gmra.mxu0 %v2136
    %v3031 = vpop.f32.mrf.mxu0
    %v3032 = vadd.f32 %v2272, %v3031
    %v3033 = vpop.f32.mrf.mxu0
    %3034 = vdwg.mxu0
    %3035 = vmatpush.bf16.msra.mxu0 %v2724
    %3036 = vmatpush.bf16.msra.mxu0 %v2720
    %3037 = vmatpush.bf16.msra.mxu0 %v2716
    %3038 = vmatpush.bf16.msra.mxu0 %v2712
    %3039 = vmatpush.bf16.msra.mxu0 %v2708
    %3040 = vmatpush.bf16.msra.mxu0 %v2704
    %3041 = vmatpush.bf16.msra.mxu0 %v2700
    %3042 = vmatpush.bf16.msra.mxu0 %v2696
    %3043 = vmatmul.bf16.gmra.mxu0 %v2137
    %v3044 = vpop.f32.mrf.mxu0
    %v3045 = vadd.f32 %v3032, %v3044
    %v3046 = vpop.f32.mrf.mxu0
    %3047 = vdwg.mxu0
    %3048 = vmatpush.bf16.msra.mxu0 %v2756
    %3049 = vmatpush.bf16.msra.mxu0 %v2752
    %3050 = vmatpush.bf16.msra.mxu0 %v2748
    %3051 = vmatpush.bf16.msra.mxu0 %v2744
    %3052 = vmatpush.bf16.msra.mxu0 %v2740
    %3053 = vmatpush.bf16.msra.mxu0 %v2736
    %3054 = vmatpush.bf16.msra.mxu0 %v2732
    %3055 = vmatpush.bf16.msra.mxu0 %v2728
    %3056 = vmatmul.bf16.gmra.mxu0 %v2138
    %v3057 = vpop.f32.mrf.mxu0
    %v3058 = vadd.f32 %v3045, %v3057
    %v3059 = vpop.f32.mrf.mxu0
    %3060 = vdwg.mxu0
    %3061 = vmatpush.bf16.msra.mxu0 %v2788
    %3062 = vmatpush.bf16.msra.mxu0 %v2784
    %3063 = vmatpush.bf16.msra.mxu0 %v2780
    %3064 = vmatpush.bf16.msra.mxu0 %v2776
    %3065 = vmatpush.bf16.msra.mxu0 %v2772
    %3066 = vmatpush.bf16.msra.mxu0 %v2768
    %3067 = vmatpush.bf16.msra.mxu0 %v2764
    %3068 = vmatpush.bf16.msra.mxu0 %v2760
    %3069 = vmatmul.bf16.gmra.mxu0 %v2139
    %v3070 = vpop.f32.mrf.mxu0
    %v3071 = vadd.f32 %v3058, %v3070
    %v3072 = vpop.f32.mrf.mxu0
    %3073 = vdwg.mxu0
    %3074 = vmatpush.bf16.msra.mxu0 %v2693
    %3075 = vmatpush.bf16.msra.mxu0 %v2689
    %3076 = vmatpush.bf16.msra.mxu0 %v2685
    %3077 = vmatpush.bf16.msra.mxu0 %v2681
    %3078 = vmatpush.bf16.msra.mxu0 %v2677
    %3079 = vmatpush.bf16.msra.mxu0 %v2673
    %3080 = vmatpush.bf16.msra.mxu0 %v2669
    %3081 = vmatpush.bf16.msra.mxu0 %v2665
    %3082 = vmatmul.bf16.gmra.mxu0 %v2136
    %v3083 = vpop.f32.mrf.mxu0
    %v3084 = vadd.f32 %v2273, %v3083
    %v3085 = vpop.f32.mrf.mxu0
    %3086 = vdwg.mxu0
    %3087 = vmatpush.bf16.msra.mxu0 %v2725
    %3088 = vmatpush.bf16.msra.mxu0 %v2721
    %3089 = vmatpush.bf16.msra.mxu0 %v2717
    %3090 = vmatpush.bf16.msra.mxu0 %v2713
    %3091 = vmatpush.bf16.msra.mxu0 %v2709
    %3092 = vmatpush.bf16.msra.mxu0 %v2705
    %3093 = vmatpush.bf16.msra.mxu0 %v2701
    %3094 = vmatpush.bf16.msra.mxu0 %v2697
    %3095 = vmatmul.bf16.gmra.mxu0 %v2137
    %v3096 = vpop.f32.mrf.mxu0
    %v3097 = vadd.f32 %v3084, %v3096
    %v3098 = vpop.f32.mrf.mxu0
    %3099 = vdwg.mxu0
    %3100 = vmatpush.bf16.msra.mxu0 %v2757
    %3101 = vmatpush.bf16.msra.mxu0 %v2753
    %3102 = vmatpush.bf16.msra.mxu0 %v2749
    %3103 = vmatpush.bf16.msra.mxu0 %v2745
    %3104 = vmatpush.bf16.msra.mxu0 %v2741
    %3105 = vmatpush.bf16.msra.mxu0 %v2737
    %3106 = vmatpush.bf16.msra.mxu0 %v2733
    %3107 = vmatpush.bf16.msra.mxu0 %v2729
    %3108 = vmatmul.bf16.gmra.mxu0 %v2138
    %v3109 = vpop.f32.mrf.mxu0
    %v3110 = vadd.f32 %v3097, %v3109
    %v3111 = vpop.f32.mrf.mxu0
    %3112 = vdwg.mxu0
    %3113 = vmatpush.bf16.msra.mxu0 %v2789
    %3114 = vmatpush.bf16.msra.mxu0 %v2785
    %3115 = vmatpush.bf16.msra.mxu0 %v2781
    %3116 = vmatpush.bf16.msra.mxu0 %v2777
    %3117 = vmatpush.bf16.msra.mxu0 %v2773
    %3118 = vmatpush.bf16.msra.mxu0 %v2769
    %3119 = vmatpush.bf16.msra.mxu0 %v2765
    %3120 = vmatpush.bf16.msra.mxu0 %v2761
    %3121 = vmatmul.bf16.gmra.mxu0 %v2139
    %v3122 = vpop.f32.mrf.mxu0
    %v3123 = vadd.f32 %v3110, %v3122
    %v3124 = vpop.f32.mrf.mxu0
    %3125 = vdwg.mxu0
    %v3126 = vmax.f32 %v2967, 0.0
    %v3127 = vmax.f32 %v3019, 0.0
    %v3128 = vmax.f32 %v3071, 0.0
    %v3129 = vmax.f32 %v3123, 0.0
    %v3130 = vpack.c.bf16 %v3126, %v3126
    %v3131 = vpack.c.bf16 %v3127, %v3127
    %v3132 = vpack.c.bf16 %v3128, %v3128
    %v3133 = vpack.c.bf16 %v3129, %v3129
    %v3134 = vld [vmem:[#allocation13] sm:$0xff]
    %v3135 = vld [vmem:[#allocation13 + $0x8] sm:$0xf]
    %v3136 = vld [vmem:[#allocation13 + $0xc] sm:$0xff]
    %v3137 = vld [vmem:[#allocation13 + $0x14] sm:$0xf]
    %v3138 = vld [vmem:[#allocation13 + $0x18] sm:$0xff]
    %v3139 = vld [vmem:[#allocation13 + $0x20] sm:$0xf]
    %v3140 = vld [vmem:[#allocation13 + $0x24] sm:$0xff]
    %v3141 = vld [vmem:[#allocation13 + $0x2c] sm:$0xf]
    %v3142 = vld [vmem:[#allocation13 + $0x30] sm:$0xff]
    %v3143 = vld [vmem:[#allocation13 + $0x38] sm:$0xf]
    %v3144 = vld [vmem:[#allocation13 + $0x3c] sm:$0xff]
    %v3145 = vld [vmem:[#allocation13 + $0x44] sm:$0xf]
    %v3146 = vld [vmem:[#allocation13 + $0x48] sm:$0xff]
    %v3147 = vld [vmem:[#allocation13 + $0x50] sm:$0xf]
    %v3148 = vld [vmem:[#allocation13 + $0x54] sm:$0xff]
    %v3149 = vld [vmem:[#allocation13 + $0x5c] sm:$0xf]
    %v3150 = vld [vmem:[#allocation13 + $0x60] sm:$0xff]
    %v3151 = vld [vmem:[#allocation13 + $0x68] sm:$0xf]
    %v3152 = vld [vmem:[#allocation13 + $0x6c] sm:$0xff]
    %v3153 = vld [vmem:[#allocation13 + $0x74] sm:$0xf]
    %v3154 = vld [vmem:[#allocation13 + $0x78] sm:$0xff]
    %v3155 = vld [vmem:[#allocation13 + $0x80] sm:$0xf]
    %v3156 = vld [vmem:[#allocation13 + $0x84] sm:$0xff]
    %v3157 = vld [vmem:[#allocation13 + $0x8c] sm:$0xf]
    %v3158 = vld [vmem:[#allocation13 + $0x90] sm:$0xff]
    %v3159 = vld [vmem:[#allocation13 + $0x98] sm:$0xf]
    %v3160 = vld [vmem:[#allocation13 + $0x9c] sm:$0xff]
    %v3161 = vld [vmem:[#allocation13 + $0xa4] sm:$0xf]
    %v3162 = vld [vmem:[#allocation13 + $0xa8] sm:$0xff]
    %v3163 = vld [vmem:[#allocation13 + $0xb0] sm:$0xf]
    %v3164 = vld [vmem:[#allocation13 + $0xb4] sm:$0xff]
    %v3165 = vld [vmem:[#allocation13 + $0xbc] sm:$0xf]
    %v3166 = vld [vmem:[#allocation13 + $0xc0] sm:$0xff]
    %v3167 = vld [vmem:[#allocation13 + $0xc8] sm:$0xf]
    %v3168 = vld [vmem:[#allocation13 + $0xcc] sm:$0xff]
    %v3169 = vld [vmem:[#allocation13 + $0xd4] sm:$0xf]
    %v3170 = vld [vmem:[#allocation13 + $0xd8] sm:$0xff]
    %v3171 = vld [vmem:[#allocation13 + $0xe0] sm:$0xf]
    %v3172 = vld [vmem:[#allocation13 + $0xe4] sm:$0xff]
    %v3173 = vld [vmem:[#allocation13 + $0xec] sm:$0xf]
    %v3174 = vld [vmem:[#allocation13 + $0xf0] sm:$0xff]
    %v3175 = vld [vmem:[#allocation13 + $0xf8] sm:$0xf]
    %v3176 = vld [vmem:[#allocation13 + $0xfc] sm:$0xff]
    %v3177 = vld [vmem:[#allocation13 + $0x104] sm:$0xf]
    %v3178 = vld [vmem:[#allocation13 + $0x108] sm:$0xff]
    %v3179 = vld [vmem:[#allocation13 + $0x110] sm:$0xf]
    %v3180 = vld [vmem:[#allocation13 + $0x114] sm:$0xff]
    %v3181 = vld [vmem:[#allocation13 + $0x11c] sm:$0xf]
    %v3182 = vld [vmem:[#allocation13 + $0x120] sm:$0xff]
    %v3183 = vld [vmem:[#allocation13 + $0x128] sm:$0xf]
    %v3184 = vld [vmem:[#allocation13 + $0x12c] sm:$0xff]
    %v3185 = vld [vmem:[#allocation13 + $0x134] sm:$0xf]
    %v3186 = vld [vmem:[#allocation13 + $0x138] sm:$0xff]
    %v3187 = vld [vmem:[#allocation13 + $0x140] sm:$0xf]
    %v3188 = vld [vmem:[#allocation13 + $0x144] sm:$0xff]
    %v3189 = vld [vmem:[#allocation13 + $0x14c] sm:$0xf]
    %v3190 = vld [vmem:[#allocation13 + $0x150] sm:$0xff]
    %v3191 = vld [vmem:[#allocation13 + $0x158] sm:$0xf]
    %v3192 = vld [vmem:[#allocation13 + $0x15c] sm:$0xff]
    %v3193 = vld [vmem:[#allocation13 + $0x164] sm:$0xf]
    %v3194 = vld [vmem:[#allocation13 + $0x168] sm:$0xff]
    %v3195 = vld [vmem:[#allocation13 + $0x170] sm:$0xf]
    %v3196 = vld [vmem:[#allocation13 + $0x174] sm:$0xff]
    %v3197 = vld [vmem:[#allocation13 + $0x17c] sm:$0xf]
    %v3198 = vld [vmem:[#allocation13 + $0x180] sm:$0xff]
    %v3199 = vld [vmem:[#allocation13 + $0x188] sm:$0xf]
    %v3200 = vld [vmem:[#allocation13 + $0x18c] sm:$0xff]
    %v3201 = vld [vmem:[#allocation13 + $0x194] sm:$0xf]
    %v3202 = vld [vmem:[#allocation13 + $0x198] sm:$0xff]
    %v3203 = vld [vmem:[#allocation13 + $0x1a0] sm:$0xf]
    %v3204 = vld [vmem:[#allocation13 + $0x1a4] sm:$0xff]
    %v3205 = vld [vmem:[#allocation13 + $0x1ac] sm:$0xf]
    %v3206 = vld [vmem:[#allocation13 + $0x1b0] sm:$0xff]
    %v3207 = vld [vmem:[#allocation13 + $0x1b8] sm:$0xf]
    %v3208 = vld [vmem:[#allocation13 + $0x1bc] sm:$0xff]
    %v3209 = vld [vmem:[#allocation13 + $0x1c4] sm:$0xf]
    %v3210 = vld [vmem:[#allocation13 + $0x1c8] sm:$0xff]
    %v3211 = vld [vmem:[#allocation13 + $0x1d0] sm:$0xf]
    %v3212 = vld [vmem:[#allocation13 + $0x1d4] sm:$0xff]
    %v3213 = vld [vmem:[#allocation13 + $0x1dc] sm:$0xf]
    %v3214 = vld [vmem:[#allocation13 + $0x1e0] sm:$0xff]
    %v3215 = vld [vmem:[#allocation13 + $0x1e8] sm:$0xf]
    %v3216 = vld [vmem:[#allocation13 + $0x1ec] sm:$0xff]
    %v3217 = vld [vmem:[#allocation13 + $0x1f4] sm:$0xf]
    %v3218 = vld [vmem:[#allocation13 + $0x1f8] sm:$0xff]
    %v3219 = vld [vmem:[#allocation13 + $0x200] sm:$0xf]
    %v3220 = vld [vmem:[#allocation13 + $0x204] sm:$0xff]
    %v3221 = vld [vmem:[#allocation13 + $0x20c] sm:$0xf]
    %v3222 = vld [vmem:[#allocation13 + $0x210] sm:$0xff]
    %v3223 = vld [vmem:[#allocation13 + $0x218] sm:$0xf]
    %v3224 = vld [vmem:[#allocation13 + $0x21c] sm:$0xff]
    %v3225 = vld [vmem:[#allocation13 + $0x224] sm:$0xf]
    %v3226 = vld [vmem:[#allocation13 + $0x228] sm:$0xff]
    %v3227 = vld [vmem:[#allocation13 + $0x230] sm:$0xf]
    %v3228 = vld [vmem:[#allocation13 + $0x234] sm:$0xff]
    %v3229 = vld [vmem:[#allocation13 + $0x23c] sm:$0xf]
    %v3230 = vld [vmem:[#allocation13 + $0x240] sm:$0xff]
    %v3231 = vld [vmem:[#allocation13 + $0x248] sm:$0xf]
    %v3232 = vld [vmem:[#allocation13 + $0x24c] sm:$0xff]
    %v3233 = vld [vmem:[#allocation13 + $0x254] sm:$0xf]
    %v3234 = vld [vmem:[#allocation13 + $0x258] sm:$0xff]
    %v3235 = vld [vmem:[#allocation13 + $0x260] sm:$0xf]
    %v3236 = vld [vmem:[#allocation13 + $0x264] sm:$0xff]
    %v3237 = vld [vmem:[#allocation13 + $0x26c] sm:$0xf]
    %v3238 = vld [vmem:[#allocation13 + $0x270] sm:$0xff]
    %v3239 = vld [vmem:[#allocation13 + $0x278] sm:$0xf]
    %v3240 = vld [vmem:[#allocation13 + $0x27c] sm:$0xff]
    %v3241 = vld [vmem:[#allocation13 + $0x284] sm:$0xf]
    %v3242 = vld [vmem:[#allocation13 + $0x288] sm:$0xff]
    %v3243 = vld [vmem:[#allocation13 + $0x290] sm:$0xf]
    %v3244 = vld [vmem:[#allocation13 + $0x294] sm:$0xff]
    %v3245 = vld [vmem:[#allocation13 + $0x29c] sm:$0xf]
    %v3246 = vld [vmem:[#allocation13 + $0x2a0] sm:$0xff]
    %v3247 = vld [vmem:[#allocation13 + $0x2a8] sm:$0xf]
    %v3248 = vld [vmem:[#allocation13 + $0x2ac] sm:$0xff]
    %v3249 = vld [vmem:[#allocation13 + $0x2b4] sm:$0xf]
    %v3250 = vld [vmem:[#allocation13 + $0x2b8] sm:$0xff]
    %v3251 = vld [vmem:[#allocation13 + $0x2c0] sm:$0xf]
    %v3252 = vld [vmem:[#allocation13 + $0x2c4] sm:$0xff]
    %v3253 = vld [vmem:[#allocation13 + $0x2cc] sm:$0xf]
    %v3254 = vld [vmem:[#allocation13 + $0x2d0] sm:$0xff]
    %v3255 = vld [vmem:[#allocation13 + $0x2d8] sm:$0xf]
    %v3256 = vld [vmem:[#allocation13 + $0x2dc] sm:$0xff]
    %v3257 = vld [vmem:[#allocation13 + $0x2e4] sm:$0xf]
    %v3258 = vld [vmem:[#allocation13 + $0x2e8] sm:$0xff]
    %v3259 = vld [vmem:[#allocation13 + $0x2f0] sm:$0xf]
    %v3260 = vld [vmem:[#allocation13 + $0x2f4] sm:$0xff]
    %v3261 = vld [vmem:[#allocation13 + $0x2fc] sm:$0xf]
    %v3262 = vld [vmem:[%s8] sm:$0x7]
    %v3264 = vperm.slane %v3262, 0
    %v3265 = vperm.slane %v3262, 1
    %v3266 = vperm.slane %v3262, 2
    %v3398 = vunpack.c.l.b16 %v3134
    %v3399 = vunpack.c.h.b16 %v3134
    %v3400 = vunpack.c.l.b16 %v3135
    %v3401 = vunpack.c.l.b16 %v3136
    %v3402 = vunpack.c.h.b16 %v3136
    %v3403 = vunpack.c.l.b16 %v3137
    %v3404 = vunpack.c.l.b16 %v3138
    %v3405 = vunpack.c.h.b16 %v3138
    %v3406 = vunpack.c.l.b16 %v3139
    %v3407 = vunpack.c.l.b16 %v3140
    %v3408 = vunpack.c.h.b16 %v3140
    %v3409 = vunpack.c.l.b16 %v3141
    %v3410 = vunpack.c.l.b16 %v3142
    %v3411 = vunpack.c.h.b16 %v3142
    %v3412 = vunpack.c.l.b16 %v3143
    %v3413 = vunpack.c.l.b16 %v3144
    %v3414 = vunpack.c.h.b16 %v3144
    %v3415 = vunpack.c.l.b16 %v3145
    %v3416 = vunpack.c.l.b16 %v3146
    %v3417 = vunpack.c.h.b16 %v3146
    %v3418 = vunpack.c.l.b16 %v3147
    %v3419 = vunpack.c.l.b16 %v3148
    %v3420 = vunpack.c.h.b16 %v3148
    %v3421 = vunpack.c.l.b16 %v3149
    %v3422 = vunpack.c.l.b16 %v3150
    %v3423 = vunpack.c.h.b16 %v3150
    %v3424 = vunpack.c.l.b16 %v3151
    %v3425 = vunpack.c.l.b16 %v3152
    %v3426 = vunpack.c.h.b16 %v3152
    %v3427 = vunpack.c.l.b16 %v3153
    %v3428 = vunpack.c.l.b16 %v3154
    %v3429 = vunpack.c.h.b16 %v3154
    %v3430 = vunpack.c.l.b16 %v3155
    %v3431 = vunpack.c.l.b16 %v3156
    %v3432 = vunpack.c.h.b16 %v3156
    %v3433 = vunpack.c.l.b16 %v3157
    %v3434 = vunpack.c.l.b16 %v3158
    %v3435 = vunpack.c.h.b16 %v3158
    %v3436 = vunpack.c.l.b16 %v3159
    %v3437 = vunpack.c.l.b16 %v3160
    %v3438 = vunpack.c.h.b16 %v3160
    %v3439 = vunpack.c.l.b16 %v3161
    %v3440 = vunpack.c.l.b16 %v3162
    %v3441 = vunpack.c.h.b16 %v3162
    %v3442 = vunpack.c.l.b16 %v3163
    %v3443 = vunpack.c.l.b16 %v3164
    %v3444 = vunpack.c.h.b16 %v3164
    %v3445 = vunpack.c.l.b16 %v3165
    %v3446 = vunpack.c.l.b16 %v3166
    %v3447 = vunpack.c.h.b16 %v3166
    %v3448 = vunpack.c.l.b16 %v3167
    %v3449 = vunpack.c.l.b16 %v3168
    %v3450 = vunpack.c.h.b16 %v3168
    %v3451 = vunpack.c.l.b16 %v3169
    %v3452 = vunpack.c.l.b16 %v3170
    %v3453 = vunpack.c.h.b16 %v3170
    %v3454 = vunpack.c.l.b16 %v3171
    %v3455 = vunpack.c.l.b16 %v3172
    %v3456 = vunpack.c.h.b16 %v3172
    %v3457 = vunpack.c.l.b16 %v3173
    %v3458 = vunpack.c.l.b16 %v3174
    %v3459 = vunpack.c.h.b16 %v3174
    %v3460 = vunpack.c.l.b16 %v3175
    %v3461 = vunpack.c.l.b16 %v3176
    %v3462 = vunpack.c.h.b16 %v3176
    %v3463 = vunpack.c.l.b16 %v3177
    %v3464 = vunpack.c.l.b16 %v3178
    %v3465 = vunpack.c.h.b16 %v3178
    %v3466 = vunpack.c.l.b16 %v3179
    %v3467 = vunpack.c.l.b16 %v3180
    %v3468 = vunpack.c.h.b16 %v3180
    %v3469 = vunpack.c.l.b16 %v3181
    %v3470 = vunpack.c.l.b16 %v3182
    %v3471 = vunpack.c.h.b16 %v3182
    %v3472 = vunpack.c.l.b16 %v3183
    %v3473 = vunpack.c.l.b16 %v3184
    %v3474 = vunpack.c.h.b16 %v3184
    %v3475 = vunpack.c.l.b16 %v3185
    %v3476 = vunpack.c.l.b16 %v3186
    %v3477 = vunpack.c.h.b16 %v3186
    %v3478 = vunpack.c.l.b16 %v3187
    %v3479 = vunpack.c.l.b16 %v3188
    %v3480 = vunpack.c.h.b16 %v3188
    %v3481 = vunpack.c.l.b16 %v3189
    %v3482 = vunpack.c.l.b16 %v3190
    %v3483 = vunpack.c.h.b16 %v3190
    %v3484 = vunpack.c.l.b16 %v3191
    %v3485 = vunpack.c.l.b16 %v3192
    %v3486 = vunpack.c.h.b16 %v3192
    %v3487 = vunpack.c.l.b16 %v3193
    %v3488 = vunpack.c.l.b16 %v3194
    %v3489 = vunpack.c.h.b16 %v3194
    %v3490 = vunpack.c.l.b16 %v3195
    %v3491 = vunpack.c.l.b16 %v3196
    %v3492 = vunpack.c.h.b16 %v3196
    %v3493 = vunpack.c.l.b16 %v3197
    %v3494 = vunpack.c.l.b16 %v3198
    %v3495 = vunpack.c.h.b16 %v3198
    %v3496 = vunpack.c.l.b16 %v3199
    %v3497 = vunpack.c.l.b16 %v3200
    %v3498 = vunpack.c.h.b16 %v3200
    %v3499 = vunpack.c.l.b16 %v3201
    %v3500 = vunpack.c.l.b16 %v3202
    %v3501 = vunpack.c.h.b16 %v3202
    %v3502 = vunpack.c.l.b16 %v3203
    %v3503 = vunpack.c.l.b16 %v3204
    %v3504 = vunpack.c.h.b16 %v3204
    %v3505 = vunpack.c.l.b16 %v3205
    %v3506 = vunpack.c.l.b16 %v3206
    %v3507 = vunpack.c.h.b16 %v3206
    %v3508 = vunpack.c.l.b16 %v3207
    %v3509 = vunpack.c.l.b16 %v3208
    %v3510 = vunpack.c.h.b16 %v3208
    %v3511 = vunpack.c.l.b16 %v3209
    %v3512 = vunpack.c.l.b16 %v3210
    %v3513 = vunpack.c.h.b16 %v3210
    %v3514 = vunpack.c.l.b16 %v3211
    %v3515 = vunpack.c.l.b16 %v3212
    %v3516 = vunpack.c.h.b16 %v3212
    %v3517 = vunpack.c.l.b16 %v3213
    %v3518 = vunpack.c.l.b16 %v3214
    %v3519 = vunpack.c.h.b16 %v3214
    %v3520 = vunpack.c.l.b16 %v3215
    %v3521 = vunpack.c.l.b16 %v3216
    %v3522 = vunpack.c.h.b16 %v3216
    %v3523 = vunpack.c.l.b16 %v3217
    %v3524 = vunpack.c.l.b16 %v3218
    %v3525 = vunpack.c.h.b16 %v3218
    %v3526 = vunpack.c.l.b16 %v3219
    %v3527 = vunpack.c.l.b16 %v3220
    %v3528 = vunpack.c.h.b16 %v3220
    %v3529 = vunpack.c.l.b16 %v3221
    %v3530 = vunpack.c.l.b16 %v3222
    %v3531 = vunpack.c.h.b16 %v3222
    %v3532 = vunpack.c.l.b16 %v3223
    %v3533 = vunpack.c.l.b16 %v3224
    %v3534 = vunpack.c.h.b16 %v3224
    %v3535 = vunpack.c.l.b16 %v3225
    %v3536 = vunpack.c.l.b16 %v3226
    %v3537 = vunpack.c.h.b16 %v3226
    %v3538 = vunpack.c.l.b16 %v3227
    %v3539 = vunpack.c.l.b16 %v3228
    %v3540 = vunpack.c.h.b16 %v3228
    %v3541 = vunpack.c.l.b16 %v3229
    %v3542 = vunpack.c.l.b16 %v3230
    %v3543 = vunpack.c.h.b16 %v3230
    %v3544 = vunpack.c.l.b16 %v3231
    %v3545 = vunpack.c.l.b16 %v3232
    %v3546 = vunpack.c.h.b16 %v3232
    %v3547 = vunpack.c.l.b16 %v3233
    %v3548 = vunpack.c.l.b16 %v3234
    %v3549 = vunpack.c.h.b16 %v3234
    %v3550 = vunpack.c.l.b16 %v3235
    %v3551 = vunpack.c.l.b16 %v3236
    %v3552 = vunpack.c.h.b16 %v3236
    %v3553 = vunpack.c.l.b16 %v3237
    %v3554 = vunpack.c.l.b16 %v3238
    %v3555 = vunpack.c.h.b16 %v3238
    %v3556 = vunpack.c.l.b16 %v3239
    %v3557 = vunpack.c.l.b16 %v3240
    %v3558 = vunpack.c.h.b16 %v3240
    %v3559 = vunpack.c.l.b16 %v3241
    %v3560 = vunpack.c.l.b16 %v3242
    %v3561 = vunpack.c.h.b16 %v3242
    %v3562 = vunpack.c.l.b16 %v3243
    %v3563 = vunpack.c.l.b16 %v3244
    %v3564 = vunpack.c.h.b16 %v3244
    %v3565 = vunpack.c.l.b16 %v3245
    %v3566 = vunpack.c.l.b16 %v3246
    %v3567 = vunpack.c.h.b16 %v3246
    %v3568 = vunpack.c.l.b16 %v3247
    %v3569 = vunpack.c.l.b16 %v3248
    %v3570 = vunpack.c.h.b16 %v3248
    %v3571 = vunpack.c.l.b16 %v3249
    %v3572 = vunpack.c.l.b16 %v3250
    %v3573 = vunpack.c.h.b16 %v3250
    %v3574 = vunpack.c.l.b16 %v3251
    %v3575 = vunpack.c.l.b16 %v3252
    %v3576 = vunpack.c.h.b16 %v3252
    %v3577 = vunpack.c.l.b16 %v3253
    %v3578 = vunpack.c.l.b16 %v3254
    %v3579 = vunpack.c.h.b16 %v3254
    %v3580 = vunpack.c.l.b16 %v3255
    %v3581 = vunpack.c.l.b16 %v3256
    %v3582 = vunpack.c.h.b16 %v3256
    %v3583 = vunpack.c.l.b16 %v3257
    %v3584 = vunpack.c.l.b16 %v3258
    %v3585 = vunpack.c.h.b16 %v3258
    %v3586 = vunpack.c.l.b16 %v3259
    %v3587 = vunpack.c.l.b16 %v3260
    %v3588 = vunpack.c.h.b16 %v3260
    %v3589 = vunpack.c.l.b16 %v3261
    %v3590 = vpack.c.b16 %v3401, %v3398
    %v3591 = vpack.c.b16 %v3402, %v3399
    %v3592 = vpack.c.b16 %v3403, %v3400
    %v3593 = vpack.c.b16 %v3407, %v3404
    %v3594 = vpack.c.b16 %v3408, %v3405
    %v3595 = vpack.c.b16 %v3409, %v3406
    %v3596 = vpack.c.b16 %v3413, %v3410
    %v3597 = vpack.c.b16 %v3414, %v3411
    %v3598 = vpack.c.b16 %v3415, %v3412
    %v3599 = vpack.c.b16 %v3419, %v3416
    %v3600 = vpack.c.b16 %v3420, %v3417
    %v3601 = vpack.c.b16 %v3421, %v3418
    %v3602 = vpack.c.b16 %v3425, %v3422
    %v3603 = vpack.c.b16 %v3426, %v3423
    %v3604 = vpack.c.b16 %v3427, %v3424
    %v3605 = vpack.c.b16 %v3431, %v3428
    %v3606 = vpack.c.b16 %v3432, %v3429
    %v3607 = vpack.c.b16 %v3433, %v3430
    %v3608 = vpack.c.b16 %v3437, %v3434
    %v3609 = vpack.c.b16 %v3438, %v3435
    %v3610 = vpack.c.b16 %v3439, %v3436
    %v3611 = vpack.c.b16 %v3443, %v3440
    %v3612 = vpack.c.b16 %v3444, %v3441
    %v3613 = vpack.c.b16 %v3445, %v3442
    %v3614 = vpack.c.b16 %v3449, %v3446
    %v3615 = vpack.c.b16 %v3450, %v3447
    %v3616 = vpack.c.b16 %v3451, %v3448
    %v3617 = vpack.c.b16 %v3455, %v3452
    %v3618 = vpack.c.b16 %v3456, %v3453
    %v3619 = vpack.c.b16 %v3457, %v3454
    %v3620 = vpack.c.b16 %v3461, %v3458
    %v3621 = vpack.c.b16 %v3462, %v3459
    %v3622 = vpack.c.b16 %v3463, %v3460
    %v3623 = vpack.c.b16 %v3467, %v3464
    %v3624 = vpack.c.b16 %v3468, %v3465
    %v3625 = vpack.c.b16 %v3469, %v3466
    %v3626 = vpack.c.b16 %v3473, %v3470
    %v3627 = vpack.c.b16 %v3474, %v3471
    %v3628 = vpack.c.b16 %v3475, %v3472
    %v3629 = vpack.c.b16 %v3479, %v3476
    %v3630 = vpack.c.b16 %v3480, %v3477
    %v3631 = vpack.c.b16 %v3481, %v3478
    %v3632 = vpack.c.b16 %v3485, %v3482
    %v3633 = vpack.c.b16 %v3486, %v3483
    %v3634 = vpack.c.b16 %v3487, %v3484
    %v3635 = vpack.c.b16 %v3491, %v3488
    %v3636 = vpack.c.b16 %v3492, %v3489
    %v3637 = vpack.c.b16 %v3493, %v3490
    %v3638 = vpack.c.b16 %v3497, %v3494
    %v3639 = vpack.c.b16 %v3498, %v3495
    %v3640 = vpack.c.b16 %v3499, %v3496
    %v3641 = vpack.c.b16 %v3503, %v3500
    %v3642 = vpack.c.b16 %v3504, %v3501
    %v3643 = vpack.c.b16 %v3505, %v3502
    %v3644 = vpack.c.b16 %v3509, %v3506
    %v3645 = vpack.c.b16 %v3510, %v3507
    %v3646 = vpack.c.b16 %v3511, %v3508
    %v3647 = vpack.c.b16 %v3515, %v3512
    %v3648 = vpack.c.b16 %v3516, %v3513
    %v3649 = vpack.c.b16 %v3517, %v3514
    %v3650 = vpack.c.b16 %v3521, %v3518
    %v3651 = vpack.c.b16 %v3522, %v3519
    %v3652 = vpack.c.b16 %v3523, %v3520
    %v3653 = vpack.c.b16 %v3527, %v3524
    %v3654 = vpack.c.b16 %v3528, %v3525
    %v3655 = vpack.c.b16 %v3529, %v3526
    %v3656 = vpack.c.b16 %v3533, %v3530
    %v3657 = vpack.c.b16 %v3534, %v3531
    %v3658 = vpack.c.b16 %v3535, %v3532
    %v3659 = vpack.c.b16 %v3539, %v3536
    %v3660 = vpack.c.b16 %v3540, %v3537
    %v3661 = vpack.c.b16 %v3541, %v3538
    %v3662 = vpack.c.b16 %v3545, %v3542
    %v3663 = vpack.c.b16 %v3546, %v3543
    %v3664 = vpack.c.b16 %v3547, %v3544
    %v3665 = vpack.c.b16 %v3551, %v3548
    %v3666 = vpack.c.b16 %v3552, %v3549
    %v3667 = vpack.c.b16 %v3553, %v3550
    %v3668 = vpack.c.b16 %v3557, %v3554
    %v3669 = vpack.c.b16 %v3558, %v3555
    %v3670 = vpack.c.b16 %v3559, %v3556
    %v3671 = vpack.c.b16 %v3563, %v3560
    %v3672 = vpack.c.b16 %v3564, %v3561
    %v3673 = vpack.c.b16 %v3565, %v3562
    %v3674 = vpack.c.b16 %v3569, %v3566
    %v3675 = vpack.c.b16 %v3570, %v3567
    %v3676 = vpack.c.b16 %v3571, %v3568
    %v3677 = vpack.c.b16 %v3575, %v3572
    %v3678 = vpack.c.b16 %v3576, %v3573
    %v3679 = vpack.c.b16 %v3577, %v3574
    %v3680 = vpack.c.b16 %v3581, %v3578
    %v3681 = vpack.c.b16 %v3582, %v3579
    %v3682 = vpack.c.b16 %v3583, %v3580
    %v3683 = vpack.c.b16 %v3587, %v3584
    %v3684 = vpack.c.b16 %v3588, %v3585
    %v3685 = vpack.c.b16 %v3589, %v3586
    %3782 = vmatpush.bf16.msra.mxu0 %v3611
    %3783 = vmatpush.bf16.msra.mxu0 %v3608
    %3784 = vmatpush.bf16.msra.mxu0 %v3605
    %3785 = vmatpush.bf16.msra.mxu0 %v3602
    %3786 = vmatpush.bf16.msra.mxu0 %v3599
    %3787 = vmatpush.bf16.msra.mxu0 %v3596
    %3788 = vmatpush.bf16.msra.mxu0 %v3593
    %3789 = vmatpush.bf16.msra.mxu0 %v3590
    %3790 = vmatmul.bf16.gmra.mxu0 %v3130
    %v3791 = vpop.f32.mrf.mxu0
    %v3792 = vadd.f32 %v3264, %v3791
    %v3793 = vpop.f32.mrf.mxu0
    %3794 = vdwg.mxu0
    %3795 = vmatpush.bf16.msra.mxu0 %v3635
    %3796 = vmatpush.bf16.msra.mxu0 %v3632
    %3797 = vmatpush.bf16.msra.mxu0 %v3629
    %3798 = vmatpush.bf16.msra.mxu0 %v3626
    %3799 = vmatpush.bf16.msra.mxu0 %v3623
    %3800 = vmatpush.bf16.msra.mxu0 %v3620
    %3801 = vmatpush.bf16.msra.mxu0 %v3617
    %3802 = vmatpush.bf16.msra.mxu0 %v3614
    %3803 = vmatmul.bf16.gmra.mxu0 %v3131
    %v3804 = vpop.f32.mrf.mxu0
    %v3805 = vadd.f32 %v3792, %v3804
    %v3806 = vpop.f32.mrf.mxu0
    %3807 = vdwg.mxu0
    %3808 = vmatpush.bf16.msra.mxu0 %v3659
    %3809 = vmatpush.bf16.msra.mxu0 %v3656
    %3810 = vmatpush.bf16.msra.mxu0 %v3653
    %3811 = vmatpush.bf16.msra.mxu0 %v3650
    %3812 = vmatpush.bf16.msra.mxu0 %v3647
    %3813 = vmatpush.bf16.msra.mxu0 %v3644
    %3814 = vmatpush.bf16.msra.mxu0 %v3641
    %3815 = vmatpush.bf16.msra.mxu0 %v3638
    %3816 = vmatmul.bf16.gmra.mxu0 %v3132
    %v3817 = vpop.f32.mrf.mxu0
    %v3818 = vadd.f32 %v3805, %v3817
    %v3819 = vpop.f32.mrf.mxu0
    %3820 = vdwg.mxu0
    %3821 = vmatpush.bf16.msra.mxu0 %v3683
    %3822 = vmatpush.bf16.msra.mxu0 %v3680
    %3823 = vmatpush.bf16.msra.mxu0 %v3677
    %3824 = vmatpush.bf16.msra.mxu0 %v3674
    %3825 = vmatpush.bf16.msra.mxu0 %v3671
    %3826 = vmatpush.bf16.msra.mxu0 %v3668
    %3827 = vmatpush.bf16.msra.mxu0 %v3665
    %3828 = vmatpush.bf16.msra.mxu0 %v3662
    %3829 = vmatmul.bf16.gmra.mxu0 %v3133
    %v3830 = vpop.f32.mrf.mxu0
    %v3831 = vadd.f32 %v3818, %v3830
    %v3832 = vpop.f32.mrf.mxu0
    %3833 = vdwg.mxu0
    %3834 = vmatpush.bf16.msra.mxu0 %v3612
    %3835 = vmatpush.bf16.msra.mxu0 %v3609
    %3836 = vmatpush.bf16.msra.mxu0 %v3606
    %3837 = vmatpush.bf16.msra.mxu0 %v3603
    %3838 = vmatpush.bf16.msra.mxu0 %v3600
    %3839 = vmatpush.bf16.msra.mxu0 %v3597
    %3840 = vmatpush.bf16.msra.mxu0 %v3594
    %3841 = vmatpush.bf16.msra.mxu0 %v3591
    %3842 = vmatmul.bf16.gmra.mxu0 %v3130
    %v3843 = vpop.f32.mrf.mxu0
    %v3844 = vadd.f32 %v3265, %v3843
    %v3845 = vpop.f32.mrf.mxu0
    %3846 = vdwg.mxu0
    %3847 = vmatpush.bf16.msra.mxu0 %v3636
    %3848 = vmatpush.bf16.msra.mxu0 %v3633
    %3849 = vmatpush.bf16.msra.mxu0 %v3630
    %3850 = vmatpush.bf16.msra.mxu0 %v3627
    %3851 = vmatpush.bf16.msra.mxu0 %v3624
    %3852 = vmatpush.bf16.msra.mxu0 %v3621
    %3853 = vmatpush.bf16.msra.mxu0 %v3618
    %3854 = vmatpush.bf16.msra.mxu0 %v3615
    %3855 = vmatmul.bf16.gmra.mxu0 %v3131
    %v3856 = vpop.f32.mrf.mxu0
    %v3857 = vadd.f32 %v3844, %v3856
    %v3858 = vpop.f32.mrf.mxu0
    %3859 = vdwg.mxu0
    %3860 = vmatpush.bf16.msra.mxu0 %v3660
    %3861 = vmatpush.bf16.msra.mxu0 %v3657
    %3862 = vmatpush.bf16.msra.mxu0 %v3654
    %3863 = vmatpush.bf16.msra.mxu0 %v3651
    %3864 = vmatpush.bf16.msra.mxu0 %v3648
    %3865 = vmatpush.bf16.msra.mxu0 %v3645
    %3866 = vmatpush.bf16.msra.mxu0 %v3642
    %3867 = vmatpush.bf16.msra.mxu0 %v3639
    %3868 = vmatmul.bf16.gmra.mxu0 %v3132
    %v3869 = vpop.f32.mrf.mxu0
    %v3870 = vadd.f32 %v3857, %v3869
    %v3871 = vpop.f32.mrf.mxu0
    %3872 = vdwg.mxu0
    %3873 = vmatpush.bf16.msra.mxu0 %v3684
    %3874 = vmatpush.bf16.msra.mxu0 %v3681
    %3875 = vmatpush.bf16.msra.mxu0 %v3678
    %3876 = vmatpush.bf16.msra.mxu0 %v3675
    %3877 = vmatpush.bf16.msra.mxu0 %v3672
    %3878 = vmatpush.bf16.msra.mxu0 %v3669
    %3879 = vmatpush.bf16.msra.mxu0 %v3666
    %3880 = vmatpush.bf16.msra.mxu0 %v3663
    %3881 = vmatmul.bf16.gmra.mxu0 %v3133
    %v3882 = vpop.f32.mrf.mxu0
    %v3883 = vadd.f32 %v3870, %v3882
    %v3884 = vpop.f32.mrf.mxu0
    %3885 = vdwg.mxu0
    %3886 = vmatpush.bf16.msra.mxu0 %v3613
    %3887 = vmatpush.bf16.msra.mxu0 %v3610
    %3888 = vmatpush.bf16.msra.mxu0 %v3607
    %3889 = vmatpush.bf16.msra.mxu0 %v3604
    %3890 = vmatpush.bf16.msra.mxu0 %v3601
    %3891 = vmatpush.bf16.msra.mxu0 %v3598
    %3892 = vmatpush.bf16.msra.mxu0 %v3595
    %3893 = vmatpush.bf16.msra.mxu0 %v3592
    %3894 = vmatmul.bf16.gmra.mxu0 %v3130
    %v3895 = vpop.f32.mrf.mxu0
    %v3896 = vadd.f32 %v3266, %v3895
    %v3897 = vpop.f32.mrf.mxu0
    %3898 = vdwg.mxu0
    %3899 = vmatpush.bf16.msra.mxu0 %v3637
    %3900 = vmatpush.bf16.msra.mxu0 %v3634
    %3901 = vmatpush.bf16.msra.mxu0 %v3631
    %3902 = vmatpush.bf16.msra.mxu0 %v3628
    %3903 = vmatpush.bf16.msra.mxu0 %v3625
    %3904 = vmatpush.bf16.msra.mxu0 %v3622
    %3905 = vmatpush.bf16.msra.mxu0 %v3619
    %3906 = vmatpush.bf16.msra.mxu0 %v3616
    %3907 = vmatmul.bf16.gmra.mxu0 %v3131
    %v3908 = vpop.f32.mrf.mxu0
    %v3909 = vadd.f32 %v3896, %v3908
    %v3910 = vpop.f32.mrf.mxu0
    %3911 = vdwg.mxu0
    %3912 = vmatpush.bf16.msra.mxu0 %v3661
    %3913 = vmatpush.bf16.msra.mxu0 %v3658
    %3914 = vmatpush.bf16.msra.mxu0 %v3655
    %3915 = vmatpush.bf16.msra.mxu0 %v3652
    %3916 = vmatpush.bf16.msra.mxu0 %v3649
    %3917 = vmatpush.bf16.msra.mxu0 %v3646
    %3918 = vmatpush.bf16.msra.mxu0 %v3643
    %3919 = vmatpush.bf16.msra.mxu0 %v3640
    %3920 = vmatmul.bf16.gmra.mxu0 %v3132
    %v3921 = vpop.f32.mrf.mxu0
    %v3922 = vadd.f32 %v3909, %v3921
    %v3923 = vpop.f32.mrf.mxu0
    %3924 = vdwg.mxu0
    %3925 = vmatpush.bf16.msra.mxu0 %v3685
    %3926 = vmatpush.bf16.msra.mxu0 %v3682
    %3927 = vmatpush.bf16.msra.mxu0 %v3679
    %3928 = vmatpush.bf16.msra.mxu0 %v3676
    %3929 = vmatpush.bf16.msra.mxu0 %v3673
    %3930 = vmatpush.bf16.msra.mxu0 %v3670
    %3931 = vmatpush.bf16.msra.mxu0 %v3667
    %3932 = vmatpush.bf16.msra.mxu0 %v3664
    %3933 = vmatmul.bf16.gmra.mxu0 %v3133
    %v3934 = vpop.f32.mrf.mxu0
    %v3935 = vadd.f32 %v3922, %v3934
    %v3936 = vpop.f32.mrf.mxu0
    %3937 = vdwg.mxu0
    %3938 = vst [vmem:[#allocation14] sm:$0xff] %v3831
    %3939 = vst [vmem:[#allocation14 + $0x8] sm:$0xff] %v3883
    %3940 = vst [vmem:[#allocation14 + $0x10] sm:$0xff] %v3935
    // Predicated region
    $region66: #{tpu_custom_call.1} parent=1 // pred_check
      _
    $region67: #{tpu_custom_call.1} parent=1 // pred_check_branch
      %3942 = sbr.rel (0) target = $region69
    $region68: #{tpu_custom_call.1} parent=1 // pred_region
      %3944 = vsyncadd [#allocation4], 0
      %s3946 = sshll.u32 [#allocation14], 4
      %s3947 = int_to_ptr.vmem [resolvable:$true] %s3946
      %s3948 = sshll.u32 %s9, 4
      %s3949 = int_to_ptr.hbm [resolvable:$true] %s3948
      %3951 = dma.vmem_to_hbm [thread:$0]  %s3947, 384, %s3949, [#allocation4]
    $region69: #{tpu_custom_call.1} parent=1 // pred_fallthru
      _
    // Predicated region
    $region70: #{tpu_custom_call.1} parent=1 // pred_check
      _
    $region71: #{tpu_custom_call.1} parent=1 // pred_check_branch
      %3953 = sbr.rel (0) target = $region73
    $region72: #{tpu_custom_call.1} parent=1 // pred_region
      %3955 = dma.done [#allocation4], 384
    $region73: #{tpu_custom_call.1} parent=1 // pred_fallthru
      _
    %3956 = vsyncpa [#allocation3], 1
    %3957 = vsyncpa [#allocation6], 1
    %3958 = vsyncpa [#allocation9], 1
    %3959 = vsyncpa [#allocation12], 1
    %3960 = vsyncpa [#allocation4], 1

</llo_original>
